<compile_context>
chip_gen: v7x
topology: tpu7x:2x2x1
jax: 0.10.0
libtpu: 0.0.40
codegen_flags: <defaults>
</compile_context>

<pallas_src>
import jax
import jax.numpy as jnp
import numpy as np
from jax.experimental import pallas as pl
from jax.experimental.pallas import tpu as pltpu

# ----------------------------- problem sizes --------------------------------
B     = 2      # batch
C_DIM = 8      # conditioning dimension (hypernetwork_layers[0])
H1    = 32     # hypernetwork hidden layer 1
H2    = 32     # hypernetwork hidden layer 2 (= hidden_size)
D_IN  = 128    # primary model input features
P_H   = 8      # primary model hidden width
D_OUT = 128    # primary model output features

# Fused-head column layout (all offsets/widths are multiples of 128 -> lane aligned).
OFF_W1  = 0                       # W1 flat, row-major (out, in): P_H * D_IN
OFF_W2  = OFF_W1 + P_H * D_IN     # W2^T flat, row-major (in, out): P_H * D_OUT
OFF_B1  = OFF_W2 + P_H * D_OUT    # b1 in the first P_H lanes of a 128 segment
OFF_B2  = OFF_B1 + 128            # b2: D_OUT lanes
N_FUSED = OFF_B2 + D_OUT          # 1024 + 1024 + 128 + 128 = 2304 = 9 * 256


def _round_up(n, m):
    return ((n + m - 1) // m) * m


# ------------------------------- kernel -------------------------------------
def hyper_kernel(x_ref, c_ref,
                 hw1_ref, hb1_ref, hw2_ref, hb2_ref,
                 headw_ref, headb_ref,
                 gsum_ref, grep_ref, gacc_ref,
                 o_ref):
    f32 = jnp.float32

    # --- hypernetwork: (Linear + ReLU) x 2 on the conditioning tile ----------
    c = c_ref[...]                                                    # (TB, C_DIM)
    h = jnp.maximum(jnp.dot(c, hw1_ref[...], preferred_element_type=f32)
                    + hb1_ref[...], 0.0)                              # (TB, H1)
    h = jnp.maximum(jnp.dot(h, hw2_ref[...], preferred_element_type=f32)
                    + hb2_ref[...], 0.0)                              # (TB, H2)
    h_lhs = h.astype(headw_ref.dtype)   # matches head-weight dtype (f32 / bf16)

    # --- heads, one lane-aligned segment at a time (never the full pred) -----
    def head_segment(off, width):
        raw = jnp.dot(h_lhs, headw_ref[:, off:off + width],
                      preferred_element_type=f32)                     # (TB, width)
        return jnp.tanh(raw + headb_ref[:, off:off + width]) * 5.0    # predicted params

    x = x_ref[...]                                                    # (TB, D_IN)

    # primary-model biases (b1 segment is exactly 0 beyond lane P_H by construction)
    b1 = head_segment(OFF_B1, 128)                                    # (TB, 128)
    b2 = head_segment(OFF_B2, D_OUT)                                  # (TB, D_OUT)

    # --- primary-model layer 1: y1[b,p] = sum_d x[b,d] * W1[b,p,d] -----------
    # VPU multiply + constant grouped-sum matmul (no XLU lane reduces).
    w1 = head_segment(OFF_W1, P_H * D_IN)                             # (TB, P_H*D_IN)
    x_rep = jnp.concatenate([x] * P_H, axis=-1)                       # (TB, P_H*D_IN)
    y1 = jnp.dot(w1 * x_rep, gsum_ref[...],
                 preferred_element_type=f32)                          # (TB, 128); lanes>=P_H are 0
    h1 = jnp.maximum(y1 + b1, 0.0)                                    # single bias add + ReLU

    # --- primary-model layer 2: y2[b,o] = sum_p h1[b,p] * W2t[b,p,o] + b2 ----
    w2 = head_segment(OFF_W2, P_H * D_OUT)                            # (TB, P_H*D_OUT)
    h1_rep = jnp.dot(h1, grep_ref[...], preferred_element_type=f32)   # (TB, P_H*D_OUT)
    y2 = jnp.dot(h1_rep * w2, gacc_ref[...],
                 preferred_element_type=f32) + b2                     # (TB, D_OUT)

    o_ref[...] = y2.astype(o_ref.dtype)


# ------------------------------- wrapper -------------------------------------
def hyper_model_forward(x, cond, params):
    batch = x.shape[0]

    # Batch tile: as large as the batch allows (review #1), multiple of 16 for a
    # fully packed bf16 LHS (review #9), capped per generation (128 v5e / 256 v6e+).
    try:
        kind = jax.devices()[0].device_kind.lower()
    except Exception:  # pragma: no cover
        kind = ""
    max_tb = 256 if any(t in kind for t in ("v6", "v7", "7x")) else 128
    tb = min(max_tb, _round_up(batch, 16))
    b_pad = _round_up(batch, tb)
    if b_pad != batch:
        x = jnp.pad(x, ((0, b_pad - batch), (0, 0)))
        cond = jnp.pad(cond, ((0, b_pad - batch), (0, 0)))
    grid = (b_pad // tb,)

    f32 = jnp.float32
    # Constant 0/1 matrices that turn the per-sample primary MLP into MXU work:
    #   gsum[p*D_IN+d, q] = (p == q)   -> grouped lane sum       (1024, 128)
    #   grep = gsum.T                  -> repeat h1 per group     (128, 1024)
    #   gacc[p*D_OUT+o, o'] = (o == o')-> grouped accumulate      (1024, 128)
    lane = jnp.arange(P_H * D_IN, dtype=jnp.int32)
    gsum = (lane[:, None] // D_IN == jnp.arange(128, dtype=jnp.int32)[None, :]).astype(f32)
    grep = gsum.T
    gacc = jnp.tile(jnp.eye(D_OUT, dtype=f32), (P_H, 1))

    args = (x, cond,
            params["hw1"], params["hb1"], params["hw2"], params["hb2"],
            params["head_w"], params["head_b"],
            gsum, grep, gacc)

    cost = pl.CostEstimate(
        flops=int(2 * b_pad * (C_DIM * H1 + H1 * H2 + H2 * N_FUSED
                               + 2 * P_H * D_IN * 128 + 128 * P_H * D_OUT)),
        transcendentals=int(b_pad * N_FUSED),
        bytes_accessed=int(sum(int(np.prod(a.shape)) * a.dtype.itemsize for a in args)
                           + b_pad * D_OUT * 4),
    )

    def build(single_buffer_consts):
        def const_spec(shape):
            imap = lambda i: (0, 0)
            if single_buffer_consts:
                # constant index_map -> one buffer is enough (review feedback)
                return pl.BlockSpec(shape, imap, pipeline_mode=pl.Buffered(1))
            return pl.BlockSpec(shape, imap)

        in_specs = [
            pl.BlockSpec((tb, D_IN),  lambda i: (i, 0)),     # x tile
            pl.BlockSpec((tb, C_DIM), lambda i: (i, 0)),     # conditioning tile
            const_spec((C_DIM, H1)), const_spec((1, H1)),    # hypernet layer 1
            const_spec((H1, H2)),    const_spec((1, H2)),    # hypernet layer 2
            const_spec((H2, N_FUSED)), const_spec((1, N_FUSED)),  # fused heads
            const_spec((P_H * D_IN, 128)),                   # gsum
            const_spec((128, P_H * D_OUT)),                  # grep
            const_spec((P_H * D_OUT, D_OUT)),                # gacc
        ]
        return pl.pallas_call(
            hyper_kernel,
            out_shape=jax.ShapeDtypeStruct((b_pad, D_OUT), jnp.float32),
            grid_spec=pltpu.PrefetchScalarGridSpec(
                num_scalar_prefetch=0,
                grid=grid,
                in_specs=in_specs,
                out_specs=pl.BlockSpec((tb, D_OUT), lambda i: (i, 0)),
            ),
            compiler_params=pltpu.CompilerParams(
                dimension_semantics=("parallel",)),   # batch tiles shard across TCs
            cost_estimate=cost,
        )

    try:
        out = build(True)(*args)       # constants single-buffered
    except Exception:                  # older jax without pipeline_mode support
        out = build(False)(*args)
    return out[:batch]


# --------------------------- pure-JAX reference -------------------------------
def reference_forward(x, cond, p):
    # Mirrors the PyTorch per-sample loop exactly (f32, highest matmul precision).
    with jax.default_matmul_precision("highest"):
        outs = []
        for i in range(x.shape[0]):
            c = cond[i:i + 1]
            h = jnp.maximum(c @ p["hw1"] + p["hb1"], 0.0)
            h = jnp.maximum(h @ p["hw2"] + p["hb2"], 0.0)
            head = lambda w, b: jnp.tanh(h @ w + b) * 5.0
            w1  = head(p["hwW1"], p["hbW1"]).reshape(P_H, D_IN)      # (out, in)
            b1  = head(p["hwB1"], p["hbB1"])
            w2t = head(p["hwW2"], p["hbW2"]).reshape(P_H, D_OUT)     # (in, out)
            b2  = head(p["hwB2"], p["hbB2"])
            xi  = x[i:i + 1]
            y1 = jnp.maximum(xi @ w1.T + b1, 0.0)
            outs.append(y1 @ w2t + b2)
        return jnp.concatenate(outs, axis=0)


# --------------------------- deterministic params -----------------------------
def make_params(head_dtype=jnp.float32):
    # head_dtype=jnp.bfloat16 halves head-weight HBM/VMEM traffic and MXU passes
    # (recommended for large-batch v6e/v7x runs); f32 default keeps tight parity
    # with the f32 reference, per the review's correctness concern.
    key = jax.random.PRNGKey(0)
    ks = iter(jax.random.split(key, 16))

    def u(shape, scale):
        return (jax.random.uniform(next(ks), shape, jnp.float32) - 0.5) * 2.0 * scale

    # hypernetwork
    hw1 = u((C_DIM, H1), 1.0 / np.sqrt(C_DIM))
    hb1 = u((1, H1),     1.0 / np.sqrt(C_DIM))
    hw2 = u((H1, H2),    1.0 / np.sqrt(H1))
    hb2 = u((1, H2),     1.0 / np.sqrt(H1))

    # "initial" primary-model parameters (become head biases, as in PyTorch)
    W1_init = u((P_H, D_IN),  1.0 / np.sqrt(D_IN))   # torch Linear weight (out, in)
    B1_init = u((P_H,),       1.0 / np.sqrt(D_IN))
    W2_init = u((D_OUT, P_H), 1.0 / np.sqrt(P_H))
    B2_init = u((D_OUT,),     1.0 / np.sqrt(P_H))

    head_scale = 0.02
    hwW1 = u((H2, P_H * D_IN), head_scale);  hbW1 = W1_init.reshape(1, -1)
    hwB1 = u((H2, P_H), head_scale);         hbB1 = B1_init.reshape(1, -1)
    hwW2 = u((H2, P_H * D_OUT), head_scale); hbW2 = W2_init.T.reshape(1, -1)
    hwB2 = u((H2, D_OUT), head_scale);       hbB2 = B2_init.reshape(1, -1)

    # --- fuse the four heads into one wide (H2, N_FUSED) layout ---------------
    head_w = jnp.zeros((H2, N_FUSED), jnp.float32)
    head_w = head_w.at[:, OFF_W1:OFF_W1 + P_H * D_IN].set(hwW1)
    head_w = head_w.at[:, OFF_W2:OFF_W2 + P_H * D_OUT].set(hwW2)
    head_w = head_w.at[:, OFF_B1:OFF_B1 + P_H].set(hwB1)
    head_w = head_w.at[:, OFF_B2:OFF_B2 + D_OUT].set(hwB2)

    head_b = jnp.zeros((1, N_FUSED), jnp.float32)
    head_b = head_b.at[:, OFF_W1:OFF_W1 + P_H * D_IN].set(hbW1)
    head_b = head_b.at[:, OFF_W2:OFF_W2 + P_H * D_OUT].set(hbW2)
    head_b = head_b.at[:, OFF_B1:OFF_B1 + P_H].set(hbB1)
    head_b = head_b.at[:, OFF_B2:OFF_B2 + D_OUT].set(hbB2)

    return dict(
        # kernel params
        hw1=hw1, hb1=hb1, hw2=hw2, hb2=hb2,
        head_w=head_w.astype(head_dtype), head_b=head_b,
        # unfused f32 params for the pure-JAX reference
        hwW1=hwW1, hbW1=hbW1, hwB1=hwB1, hbB1=hbB1,
        hwW2=hwW2, hbW2=hbW2, hwB2=hwB2, hbB2=hbB2,
    )


if __name__ == "__main__":
    params = make_params()
    kx, kc = jax.random.split(jax.random.PRNGKey(0))
    x    = jax.random.normal(kx, (B, D_IN),  jnp.float32)
    cond = jax.random.normal(kc, (B, C_DIM), jnp.float32)

    out = jax.block_until_ready(hyper_model_forward(x, cond, params))
    ref = reference_forward(x, cond, params)

    assert out.shape == (B, D_OUT), out.shape
    np.testing.assert_allclose(np.asarray(out), np.asarray(ref), rtol=2e-2, atol=2e-2)
    print("KERNEL_OK")
</pallas_src>

<mosaic_0001>
module attributes {stable_mosaic.version = 11 : i64} {
  func.func @hyper_kernel(%arg0: i32, %arg1: memref<16x128xf32, #tpu.memory_space<vmem>>, %arg2: memref<16x8xf32, #tpu.memory_space<vmem>>, %arg3: memref<8x32xf32, #tpu.memory_space<vmem>>, %arg4: memref<1x32xf32, #tpu.memory_space<vmem>>, %arg5: memref<32x32xf32, #tpu.memory_space<vmem>>, %arg6: memref<1x32xf32, #tpu.memory_space<vmem>>, %arg7: memref<32x2304xf32, #tpu.memory_space<vmem>>, %arg8: memref<1x2304xf32, #tpu.memory_space<vmem>>, %arg9: memref<1024x128xf32, #tpu.memory_space<vmem>>, %arg10: memref<128x1024xf32, #tpu.memory_space<vmem>>, %arg11: memref<1024x128xf32, #tpu.memory_space<vmem>>, %arg12: memref<16x128xf32, #tpu.memory_space<vmem>>) attributes {dimension_semantics = [#tpu.dimension_semantics<parallel>], iteration_bounds = array<i64: 1>, scalar_prefetch = 0 : i64, scratch_operands = 0 : i64, tpu.core_type = #tpu.core_type<tc>, window_params = [{transform_indices = @transform_0, window_bounds = array<i64: 16, 128>}, {transform_indices = @transform_1, window_bounds = array<i64: 16, 8>}, {pipeline_mode = #tpu.pipeline_mode<synchronous>, transform_indices = @transform_2, window_bounds = array<i64: 8, 32>}, {pipeline_mode = #tpu.pipeline_mode<synchronous>, transform_indices = @transform_3, window_bounds = array<i64: 1, 32>}, {pipeline_mode = #tpu.pipeline_mode<synchronous>, transform_indices = @transform_4, window_bounds = array<i64: 32, 32>}, {pipeline_mode = #tpu.pipeline_mode<synchronous>, transform_indices = @transform_5, window_bounds = array<i64: 1, 32>}, {pipeline_mode = #tpu.pipeline_mode<synchronous>, transform_indices = @transform_6, window_bounds = array<i64: 32, 2304>}, {pipeline_mode = #tpu.pipeline_mode<synchronous>, transform_indices = @transform_7, window_bounds = array<i64: 1, 2304>}, {pipeline_mode = #tpu.pipeline_mode<synchronous>, transform_indices = @transform_8, window_bounds = array<i64: 1024, 128>}, {pipeline_mode = #tpu.pipeline_mode<synchronous>, transform_indices = @transform_9, window_bounds = array<i64: 128, 1024>}, {pipeline_mode = #tpu.pipeline_mode<synchronous>, transform_indices = @transform_10, window_bounds = array<i64: 1024, 128>}, {transform_indices = @transform_11, window_bounds = array<i64: 16, 128>}]} {
    %c0 = arith.constant 0 : index
    %c0_0 = arith.constant 0 : index
    %0 = vector.load %arg2[%c0, %c0_0] : memref<16x8xf32, #tpu.memory_space<vmem>>, vector<16x8xf32>
    %c0_1 = arith.constant 0 : index
    %c0_2 = arith.constant 0 : index
    %1 = vector.load %arg3[%c0_1, %c0_2] : memref<8x32xf32, #tpu.memory_space<vmem>>, vector<8x32xf32>
    %cst = arith.constant dense<0.000000e+00> : vector<16x32xf32>
    %2 = tpu.matmul %0, %1, %cst {dimension_numbers = #tpu.dot_dimension_numbers<[1], [0], [0], [1], [0, 0, 1, 1], [], []>} : vector<16x8xf32>, vector<8x32xf32>, vector<16x32xf32> -> vector<16x32xf32>
    %c0_3 = arith.constant 0 : index
    %c0_4 = arith.constant 0 : index
    %3 = vector.load %arg4[%c0_3, %c0_4] : memref<1x32xf32, #tpu.memory_space<vmem>>, vector<1x32xf32>
    %4 = vector.broadcast %3 : vector<1x32xf32> to vector<16x32xf32>
    %5 = arith.addf %2, %4 : vector<16x32xf32>
    %cst_5 = arith.constant 0.000000e+00 : f32
    %6 = vector.broadcast %cst_5 : f32 to vector<16x32xf32>
    %7 = arith.maximumf %5, %6 : vector<16x32xf32>
    %c0_6 = arith.constant 0 : index
    %c0_7 = arith.constant 0 : index
    %8 = vector.load %arg5[%c0_6, %c0_7] : memref<32x32xf32, #tpu.memory_space<vmem>>, vector<32x32xf32>
    %cst_8 = arith.constant dense<0.000000e+00> : vector<16x32xf32>
    %9 = tpu.matmul %7, %8, %cst_8 {dimension_numbers = #tpu.dot_dimension_numbers<[1], [0], [0], [1], [0, 0, 1, 1], [], []>} : vector<16x32xf32>, vector<32x32xf32>, vector<16x32xf32> -> vector<16x32xf32>
    %c0_9 = arith.constant 0 : index
    %c0_10 = arith.constant 0 : index
    %10 = vector.load %arg6[%c0_9, %c0_10] : memref<1x32xf32, #tpu.memory_space<vmem>>, vector<1x32xf32>
    %11 = vector.broadcast %10 : vector<1x32xf32> to vector<16x32xf32>
    %12 = arith.addf %9, %11 : vector<16x32xf32>
    %cst_11 = arith.constant 0.000000e+00 : f32
    %13 = vector.broadcast %cst_11 : f32 to vector<16x32xf32>
    %14 = arith.maximumf %12, %13 : vector<16x32xf32>
    %c0_12 = arith.constant 0 : index
    %c0_13 = arith.constant 0 : index
    %15 = vector.load %arg1[%c0_12, %c0_13] : memref<16x128xf32, #tpu.memory_space<vmem>>, vector<16x128xf32>
    %c0_14 = arith.constant 0 : index
    %c2048 = arith.constant 2048 : index
    %16 = vector.load %arg7[%c0_14, %c2048] : memref<32x2304xf32, #tpu.memory_space<vmem>>, vector<32x128xf32>
    %cst_15 = arith.constant dense<0.000000e+00> : vector<16x128xf32>
    %17 = tpu.matmul %14, %16, %cst_15 {dimension_numbers = #tpu.dot_dimension_numbers<[1], [0], [0], [1], [0, 0, 1, 1], [], []>} : vector<16x32xf32>, vector<32x128xf32>, vector<16x128xf32> -> vector<16x128xf32>
    %c0_16 = arith.constant 0 : index
    %c2048_17 = arith.constant 2048 : index
    %18 = vector.load %arg8[%c0_16, %c2048_17] : memref<1x2304xf32, #tpu.memory_space<vmem>>, vector<1x128xf32>
    %19 = vector.broadcast %18 : vector<1x128xf32> to vector<16x128xf32>
    %20 = arith.addf %17, %19 : vector<16x128xf32>
    %21 = math.tanh %20 : vector<16x128xf32>
    %cst_18 = arith.constant 5.000000e+00 : f32
    %22 = vector.broadcast %cst_18 : f32 to vector<16x128xf32>
    %23 = arith.mulf %21, %22 : vector<16x128xf32>
    %c0_19 = arith.constant 0 : index
    %c2176 = arith.constant 2176 : index
    %24 = vector.load %arg7[%c0_19, %c2176] : memref<32x2304xf32, #tpu.memory_space<vmem>>, vector<32x128xf32>
    %cst_20 = arith.constant dense<0.000000e+00> : vector<16x128xf32>
    %25 = tpu.matmul %14, %24, %cst_20 {dimension_numbers = #tpu.dot_dimension_numbers<[1], [0], [0], [1], [0, 0, 1, 1], [], []>} : vector<16x32xf32>, vector<32x128xf32>, vector<16x128xf32> -> vector<16x128xf32>
    %c0_21 = arith.constant 0 : index
    %c2176_22 = arith.constant 2176 : index
    %26 = vector.load %arg8[%c0_21, %c2176_22] : memref<1x2304xf32, #tpu.memory_space<vmem>>, vector<1x128xf32>
    %27 = vector.broadcast %26 : vector<1x128xf32> to vector<16x128xf32>
    %28 = arith.addf %25, %27 : vector<16x128xf32>
    %29 = math.tanh %28 : vector<16x128xf32>
    %cst_23 = arith.constant 5.000000e+00 : f32
    %30 = vector.broadcast %cst_23 : f32 to vector<16x128xf32>
    %31 = arith.mulf %29, %30 : vector<16x128xf32>
    %c0_24 = arith.constant 0 : index
    %c0_25 = arith.constant 0 : index
    %32 = vector.load %arg7[%c0_24, %c0_25] : memref<32x2304xf32, #tpu.memory_space<vmem>>, vector<32x1024xf32>
    %cst_26 = arith.constant dense<0.000000e+00> : vector<16x1024xf32>
    %33 = tpu.matmul %14, %32, %cst_26 {dimension_numbers = #tpu.dot_dimension_numbers<[1], [0], [0], [1], [0, 0, 1, 1], [], []>} : vector<16x32xf32>, vector<32x1024xf32>, vector<16x1024xf32> -> vector<16x1024xf32>
    %c0_27 = arith.constant 0 : index
    %c0_28 = arith.constant 0 : index
    %34 = vector.load %arg8[%c0_27, %c0_28] : memref<1x2304xf32, #tpu.memory_space<vmem>>, vector<1x1024xf32>
    %35 = vector.broadcast %34 : vector<1x1024xf32> to vector<16x1024xf32>
    %36 = arith.addf %33, %35 : vector<16x1024xf32>
    %37 = math.tanh %36 : vector<16x1024xf32>
    %cst_29 = arith.constant 5.000000e+00 : f32
    %38 = vector.broadcast %cst_29 : f32 to vector<16x1024xf32>
    %39 = arith.mulf %37, %38 : vector<16x1024xf32>
    %40 = tpu.concatenate %15, %15, %15, %15, %15, %15, %15, %15 in 1 : vector<16x128xf32>, vector<16x128xf32>, vector<16x128xf32>, vector<16x128xf32>, vector<16x128xf32>, vector<16x128xf32>, vector<16x128xf32>, vector<16x128xf32> -> vector<16x1024xf32>
    %41 = arith.mulf %39, %40 : vector<16x1024xf32>
    %c0_30 = arith.constant 0 : index
    %c0_31 = arith.constant 0 : index
    %42 = vector.load %arg9[%c0_30, %c0_31] : memref<1024x128xf32, #tpu.memory_space<vmem>>, vector<1024x128xf32>
    %cst_32 = arith.constant dense<0.000000e+00> : vector<16x128xf32>
    %43 = tpu.matmul %41, %42, %cst_32 {dimension_numbers = #tpu.dot_dimension_numbers<[1], [0], [0], [1], [0, 0, 1, 1], [], []>} : vector<16x1024xf32>, vector<1024x128xf32>, vector<16x128xf32> -> vector<16x128xf32>
    %44 = arith.addf %43, %23 : vector<16x128xf32>
    %cst_33 = arith.constant 0.000000e+00 : f32
    %45 = vector.broadcast %cst_33 : f32 to vector<16x128xf32>
    %46 = arith.maximumf %44, %45 : vector<16x128xf32>
    %c0_34 = arith.constant 0 : index
    %c1024 = arith.constant 1024 : index
    %47 = vector.load %arg7[%c0_34, %c1024] : memref<32x2304xf32, #tpu.memory_space<vmem>>, vector<32x1024xf32>
    %cst_35 = arith.constant dense<0.000000e+00> : vector<16x1024xf32>
    %48 = tpu.matmul %14, %47, %cst_35 {dimension_numbers = #tpu.dot_dimension_numbers<[1], [0], [0], [1], [0, 0, 1, 1], [], []>} : vector<16x32xf32>, vector<32x1024xf32>, vector<16x1024xf32> -> vector<16x1024xf32>
    %c0_36 = arith.constant 0 : index
    %c1024_37 = arith.constant 1024 : index
    %49 = vector.load %arg8[%c0_36, %c1024_37] : memref<1x2304xf32, #tpu.memory_space<vmem>>, vector<1x1024xf32>
    %50 = vector.broadcast %49 : vector<1x1024xf32> to vector<16x1024xf32>
    %51 = arith.addf %48, %50 : vector<16x1024xf32>
    %52 = math.tanh %51 : vector<16x1024xf32>
    %cst_38 = arith.constant 5.000000e+00 : f32
    %53 = vector.broadcast %cst_38 : f32 to vector<16x1024xf32>
    %54 = arith.mulf %52, %53 : vector<16x1024xf32>
    %c0_39 = arith.constant 0 : index
    %c0_40 = arith.constant 0 : index
    %55 = vector.load %arg10[%c0_39, %c0_40] : memref<128x1024xf32, #tpu.memory_space<vmem>>, vector<128x1024xf32>
    %cst_41 = arith.constant dense<0.000000e+00> : vector<16x1024xf32>
    %56 = tpu.matmul %46, %55, %cst_41 {dimension_numbers = #tpu.dot_dimension_numbers<[1], [0], [0], [1], [0, 0, 1, 1], [], []>} : vector<16x128xf32>, vector<128x1024xf32>, vector<16x1024xf32> -> vector<16x1024xf32>
    %57 = arith.mulf %56, %54 : vector<16x1024xf32>
    %c0_42 = arith.constant 0 : index
    %c0_43 = arith.constant 0 : index
    %58 = vector.load %arg11[%c0_42, %c0_43] : memref<1024x128xf32, #tpu.memory_space<vmem>>, vector<1024x128xf32>
    %cst_44 = arith.constant dense<0.000000e+00> : vector<16x128xf32>
    %59 = tpu.matmul %57, %58, %cst_44 {dimension_numbers = #tpu.dot_dimension_numbers<[1], [0], [0], [1], [0, 0, 1, 1], [], []>} : vector<16x1024xf32>, vector<1024x128xf32>, vector<16x128xf32> -> vector<16x128xf32>
    %60 = arith.addf %59, %31 : vector<16x128xf32>
    %c0_45 = arith.constant 0 : index
    %c0_46 = arith.constant 0 : index
    %61 = vector.load %arg12[%c0_45, %c0_46] : memref<16x128xf32, #tpu.memory_space<vmem>>, vector<16x128xf32>
    tpu.vector_store %arg12[%c0_45, %c0_46], %60 {strides = array<i32>} : memref<16x128xf32, #tpu.memory_space<vmem>>, vector<16x128xf32>,
    return
  }
  func.func @transform_0(%arg0: i32) -> (i32, i32) {
    %c0_i32 = arith.constant 0 : i32
    %c0_i32_0 = arith.constant 0 : i32
    return %arg0, %c0_i32 : i32, i32
  }
  func.func @transform_1(%arg0: i32) -> (i32, i32) {
    %c0_i32 = arith.constant 0 : i32
    %c0_i32_0 = arith.constant 0 : i32
    return %arg0, %c0_i32 : i32, i32
  }
  func.func @transform_2(%arg0: i32) -> (i32, i32) {
    %c0_i32 = arith.constant 0 : i32
    %c0_i32_0 = arith.constant 0 : i32
    %c0_i32_1 = arith.constant 0 : i32
    return %c0_i32, %c0_i32_0 : i32, i32
  }
  func.func @transform_3(%arg0: i32) -> (i32, i32) {
    %c0_i32 = arith.constant 0 : i32
    %c0_i32_0 = arith.constant 0 : i32
    %c0_i32_1 = arith.constant 0 : i32
    return %c0_i32, %c0_i32_0 : i32, i32
  }
  func.func @transform_4(%arg0: i32) -> (i32, i32) {
    %c0_i32 = arith.constant 0 : i32
    %c0_i32_0 = arith.constant 0 : i32
    %c0_i32_1 = arith.constant 0 : i32
    return %c0_i32, %c0_i32_0 : i32, i32
  }
  func.func @transform_5(%arg0: i32) -> (i32, i32) {
    %c0_i32 = arith.constant 0 : i32
    %c0_i32_0 = arith.constant 0 : i32
    %c0_i32_1 = arith.constant 0 : i32
    return %c0_i32, %c0_i32_0 : i32, i32
  }
  func.func @transform_6(%arg0: i32) -> (i32, i32) {
    %c0_i32 = arith.constant 0 : i32
    %c0_i32_0 = arith.constant 0 : i32
    %c0_i32_1 = arith.constant 0 : i32
    return %c0_i32, %c0_i32_0 : i32, i32
  }
  func.func @transform_7(%arg0: i32) -> (i32, i32) {
    %c0_i32 = arith.constant 0 : i32
    %c0_i32_0 = arith.constant 0 : i32
    %c0_i32_1 = arith.constant 0 : i32
    return %c0_i32, %c0_i32_0 : i32, i32
  }
  func.func @transform_8(%arg0: i32) -> (i32, i32) {
    %c0_i32 = arith.constant 0 : i32
    %c0_i32_0 = arith.constant 0 : i32
    %c0_i32_1 = arith.constant 0 : i32
    return %c0_i32, %c0_i32_0 : i32, i32
  }
  func.func @transform_9(%arg0: i32) -> (i32, i32) {
    %c0_i32 = arith.constant 0 : i32
    %c0_i32_0 = arith.constant 0 : i32
    %c0_i32_1 = arith.constant 0 : i32
    return %c0_i32, %c0_i32_0 : i32, i32
  }
  func.func @transform_10(%arg0: i32) -> (i32, i32) {
    %c0_i32 = arith.constant 0 : i32
    %c0_i32_0 = arith.constant 0 : i32
    %c0_i32_1 = arith.constant 0 : i32
    return %c0_i32, %c0_i32_0 : i32, i32
  }
  func.func @transform_11(%arg0: i32) -> (i32, i32) {
    %c0_i32 = arith.constant 0 : i32
    %c0_i32_0 = arith.constant 0 : i32
    return %arg0, %c0_i32 : i32, i32
  }
}

module attributes {stable_mosaic.version = 11 : i64} {
  func.func @hyper_kernel(%arg0: i32, %arg1: memref<16x128xf32, #tpu.memory_space<vmem>>, %arg2: memref<16x8xf32, #tpu.memory_space<vmem>>, %arg3: memref<8x32xf32, #tpu.memory_space<vmem>>, %arg4: memref<1x32xf32, #tpu.memory_space<vmem>>, %arg5: memref<32x32xf32, #tpu.memory_space<vmem>>, %arg6: memref<1x32xf32, #tpu.memory_space<vmem>>, %arg7: memref<32x2304xf32, #tpu.memory_space<vmem>>, %arg8: memref<1x2304xf32, #tpu.memory_space<vmem>>, %arg9: memref<1024x128xf32, #tpu.memory_space<vmem>>, %arg10: memref<128x1024xf32, #tpu.memory_space<vmem>>, %arg11: memref<1024x128xf32, #tpu.memory_space<vmem>>, %arg12: memref<16x128xf32, #tpu.memory_space<vmem>>) attributes {dimension_semantics = [#tpu.dimension_semantics<parallel>], iteration_bounds = array<i64: 1>, scalar_prefetch = 0 : i64, scratch_operands = 0 : i64, tpu.core_type = #tpu.core_type<tc>, window_params = [{transform_indices = @transform_0, window_bounds = array<i64: 16, 128>}, {transform_indices = @transform_1, window_bounds = array<i64: 16, 8>}, {pipeline_mode = #tpu.pipeline_mode<synchronous>, transform_indices = @transform_2, window_bounds = array<i64: 8, 32>}, {pipeline_mode = #tpu.pipeline_mode<synchronous>, transform_indices = @transform_3, window_bounds = array<i64: 1, 32>}, {pipeline_mode = #tpu.pipeline_mode<synchronous>, transform_indices = @transform_4, window_bounds = array<i64: 32, 32>}, {pipeline_mode = #tpu.pipeline_mode<synchronous>, transform_indices = @transform_5, window_bounds = array<i64: 1, 32>}, {pipeline_mode = #tpu.pipeline_mode<synchronous>, transform_indices = @transform_6, window_bounds = array<i64: 32, 2304>}, {pipeline_mode = #tpu.pipeline_mode<synchronous>, transform_indices = @transform_7, window_bounds = array<i64: 1, 2304>}, {pipeline_mode = #tpu.pipeline_mode<synchronous>, transform_indices = @transform_8, window_bounds = array<i64: 1024, 128>}, {pipeline_mode = #tpu.pipeline_mode<synchronous>, transform_indices = @transform_9, window_bounds = array<i64: 128, 1024>}, {pipeline_mode = #tpu.pipeline_mode<synchronous>, transform_indices = @transform_10, window_bounds = array<i64: 1024, 128>}, {transform_indices = @transform_11, window_bounds = array<i64: 16, 128>}]} {
    %c0 = arith.constant 0 : index
    %c0_0 = arith.constant 0 : index
    %0 = vector.load %arg2[%c0, %c0_0] : memref<16x8xf32, #tpu.memory_space<vmem>>, vector<16x8xf32>
    %c0_1 = arith.constant 0 : index
    %c0_2 = arith.constant 0 : index
    %1 = vector.load %arg3[%c0_1, %c0_2] : memref<8x32xf32, #tpu.memory_space<vmem>>, vector<8x32xf32>
    %cst = arith.constant dense<0.000000e+00> : vector<16x32xf32>
    %2 = tpu.matmul %0, %1, %cst {dimension_numbers = #tpu.dot_dimension_numbers<[1], [0], [0], [1], [0, 0, 1, 1], [], []>} : vector<16x8xf32>, vector<8x32xf32>, vector<16x32xf32> -> vector<16x32xf32>
    %c0_3 = arith.constant 0 : index
    %c0_4 = arith.constant 0 : index
    %3 = vector.load %arg4[%c0_3, %c0_4] : memref<1x32xf32, #tpu.memory_space<vmem>>, vector<1x32xf32>
    %4 = vector.broadcast %3 : vector<1x32xf32> to vector<16x32xf32>
    %5 = arith.addf %2, %4 : vector<16x32xf32>
    %cst_5 = arith.constant 0.000000e+00 : f32
    %6 = vector.broadcast %cst_5 : f32 to vector<16x32xf32>
    %7 = arith.maximumf %5, %6 : vector<16x32xf32>
    %c0_6 = arith.constant 0 : index
    %c0_7 = arith.constant 0 : index
    %8 = vector.load %arg5[%c0_6, %c0_7] : memref<32x32xf32, #tpu.memory_space<vmem>>, vector<32x32xf32>
    %cst_8 = arith.constant dense<0.000000e+00> : vector<16x32xf32>
    %9 = tpu.matmul %7, %8, %cst_8 {dimension_numbers = #tpu.dot_dimension_numbers<[1], [0], [0], [1], [0, 0, 1, 1], [], []>} : vector<16x32xf32>, vector<32x32xf32>, vector<16x32xf32> -> vector<16x32xf32>
    %c0_9 = arith.constant 0 : index
    %c0_10 = arith.constant 0 : index
    %10 = vector.load %arg6[%c0_9, %c0_10] : memref<1x32xf32, #tpu.memory_space<vmem>>, vector<1x32xf32>
    %11 = vector.broadcast %10 : vector<1x32xf32> to vector<16x32xf32>
    %12 = arith.addf %9, %11 : vector<16x32xf32>
    %cst_11 = arith.constant 0.000000e+00 : f32
    %13 = vector.broadcast %cst_11 : f32 to vector<16x32xf32>
    %14 = arith.maximumf %12, %13 : vector<16x32xf32>
    %c0_12 = arith.constant 0 : index
    %c0_13 = arith.constant 0 : index
    %15 = vector.load %arg1[%c0_12, %c0_13] : memref<16x128xf32, #tpu.memory_space<vmem>>, vector<16x128xf32>
    %c0_14 = arith.constant 0 : index
    %c2048 = arith.constant 2048 : index
    %16 = vector.load %arg7[%c0_14, %c2048] : memref<32x2304xf32, #tpu.memory_space<vmem>>, vector<32x128xf32>
    %cst_15 = arith.constant dense<0.000000e+00> : vector<16x128xf32>
    %17 = tpu.matmul %14, %16, %cst_15 {dimension_numbers = #tpu.dot_dimension_numbers<[1], [0], [0], [1], [0, 0, 1, 1], [], []>} : vector<16x32xf32>, vector<32x128xf32>, vector<16x128xf32> -> vector<16x128xf32>
    %c0_16 = arith.constant 0 : index
    %c2048_17 = arith.constant 2048 : index
    %18 = vector.load %arg8[%c0_16, %c2048_17] : memref<1x2304xf32, #tpu.memory_space<vmem>>, vector<1x128xf32>
    %19 = vector.broadcast %18 : vector<1x128xf32> to vector<16x128xf32>
    %20 = arith.addf %17, %19 : vector<16x128xf32>
    %21 = math.tanh %20 : vector<16x128xf32>
    %cst_18 = arith.constant 5.000000e+00 : f32
    %22 = vector.broadcast %cst_18 : f32 to vector<16x128xf32>
    %23 = arith.mulf %21, %22 : vector<16x128xf32>
    %c0_19 = arith.constant 0 : index
    %c2176 = arith.constant 2176 : index
    %24 = vector.load %arg7[%c0_19, %c2176] : memref<32x2304xf32, #tpu.memory_space<vmem>>, vector<32x128xf32>
    %cst_20 = arith.constant dense<0.000000e+00> : vector<16x128xf32>
    %25 = tpu.matmul %14, %24, %cst_20 {dimension_numbers = #tpu.dot_dimension_numbers<[1], [0], [0], [1], [0, 0, 1, 1], [], []>} : vector<16x32xf32>, vector<32x128xf32>, vector<16x128xf32> -> vector<16x128xf32>
    %c0_21 = arith.constant 0 : index
    %c2176_22 = arith.constant 2176 : index
    %26 = vector.load %arg8[%c0_21, %c2176_22] : memref<1x2304xf32, #tpu.memory_space<vmem>>, vector<1x128xf32>
    %27 = vector.broadcast %26 : vector<1x128xf32> to vector<16x128xf32>
    %28 = arith.addf %25, %27 : vector<16x128xf32>
    %29 = math.tanh %28 : vector<16x128xf32>
    %cst_23 = arith.constant 5.000000e+00 : f32
    %30 = vector.broadcast %cst_23 : f32 to vector<16x128xf32>
    %31 = arith.mulf %29, %30 : vector<16x128xf32>
    %c0_24 = arith.constant 0 : index
    %c0_25 = arith.constant 0 : index
    %32 = vector.load %arg7[%c0_24, %c0_25] : memref<32x2304xf32, #tpu.memory_space<vmem>>, vector<32x1024xf32>
    %cst_26 = arith.constant dense<0.000000e+00> : vector<16x1024xf32>
    %33 = tpu.matmul %14, %32, %cst_26 {dimension_numbers = #tpu.dot_dimension_numbers<[1], [0], [0], [1], [0, 0, 1, 1], [], []>} : vector<16x32xf32>, vector<32x1024xf32>, vector<16x1024xf32> -> vector<16x1024xf32>
    %c0_27 = arith.constant 0 : index
    %c0_28 = arith.constant 0 : index
    %34 = vector.load %arg8[%c0_27, %c0_28] : memref<1x2304xf32, #tpu.memory_space<vmem>>, vector<1x1024xf32>
    %35 = vector.broadcast %34 : vector<1x1024xf32> to vector<16x1024xf32>
    %36 = arith.addf %33, %35 : vector<16x1024xf32>
    %37 = math.tanh %36 : vector<16x1024xf32>
    %cst_29 = arith.constant 5.000000e+00 : f32
    %38 = vector.broadcast %cst_29 : f32 to vector<16x1024xf32>
    %39 = arith.mulf %37, %38 : vector<16x1024xf32>
    %40 = tpu.concatenate %15, %15, %15, %15, %15, %15, %15, %15 in 1 : vector<16x128xf32>, vector<16x128xf32>, vector<16x128xf32>, vector<16x128xf32>, vector<16x128xf32>, vector<16x128xf32>, vector<16x128xf32>, vector<16x128xf32> -> vector<16x1024xf32>
    %41 = arith.mulf %39, %40 : vector<16x1024xf32>
    %c0_30 = arith.constant 0 : index
    %c0_31 = arith.constant 0 : index
    %42 = vector.load %arg9[%c0_30, %c0_31] : memref<1024x128xf32, #tpu.memory_space<vmem>>, vector<1024x128xf32>
    %cst_32 = arith.constant dense<0.000000e+00> : vector<16x128xf32>
    %43 = tpu.matmul %41, %42, %cst_32 {dimension_numbers = #tpu.dot_dimension_numbers<[1], [0], [0], [1], [0, 0, 1, 1], [], []>} : vector<16x1024xf32>, vector<1024x128xf32>, vector<16x128xf32> -> vector<16x128xf32>
    %44 = arith.addf %43, %23 : vector<16x128xf32>
    %cst_33 = arith.constant 0.000000e+00 : f32
    %45 = vector.broadcast %cst_33 : f32 to vector<16x128xf32>
    %46 = arith.maximumf %44, %45 : vector<16x128xf32>
    %c0_34 = arith.constant 0 : index
    %c1024 = arith.constant 1024 : index
    %47 = vector.load %arg7[%c0_34, %c1024] : memref<32x2304xf32, #tpu.memory_space<vmem>>, vector<32x1024xf32>
    %cst_35 = arith.constant dense<0.000000e+00> : vector<16x1024xf32>
    %48 = tpu.matmul %14, %47, %cst_35 {dimension_numbers = #tpu.dot_dimension_numbers<[1], [0], [0], [1], [0, 0, 1, 1], [], []>} : vector<16x32xf32>, vector<32x1024xf32>, vector<16x1024xf32> -> vector<16x1024xf32>
    %c0_36 = arith.constant 0 : index
    %c1024_37 = arith.constant 1024 : index
    %49 = vector.load %arg8[%c0_36, %c1024_37] : memref<1x2304xf32, #tpu.memory_space<vmem>>, vector<1x1024xf32>
    %50 = vector.broadcast %49 : vector<1x1024xf32> to vector<16x1024xf32>
    %51 = arith.addf %48, %50 : vector<16x1024xf32>
    %52 = math.tanh %51 : vector<16x1024xf32>
    %cst_38 = arith.constant 5.000000e+00 : f32
    %53 = vector.broadcast %cst_38 : f32 to vector<16x1024xf32>
    %54 = arith.mulf %52, %53 : vector<16x1024xf32>
    %c0_39 = arith.constant 0 : index
    %c0_40 = arith.constant 0 : index
    %55 = vector.load %arg10[%c0_39, %c0_40] : memref<128x1024xf32, #tpu.memory_space<vmem>>, vector<128x1024xf32>
    %cst_41 = arith.constant dense<0.000000e+00> : vector<16x1024xf32>
    %56 = tpu.matmul %46, %55, %cst_41 {dimension_numbers = #tpu.dot_dimension_numbers<[1], [0], [0], [1], [0, 0, 1, 1], [], []>} : vector<16x128xf32>, vector<128x1024xf32>, vector<16x1024xf32> -> vector<16x1024xf32>
    %57 = arith.mulf %56, %54 : vector<16x1024xf32>
    %c0_42 = arith.constant 0 : index
    %c0_43 = arith.constant 0 : index
    %58 = vector.load %arg11[%c0_42, %c0_43] : memref<1024x128xf32, #tpu.memory_space<vmem>>, vector<1024x128xf32>
    %cst_44 = arith.constant dense<0.000000e+00> : vector<16x128xf32>
    %59 = tpu.matmul %57, %58, %cst_44 {dimension_numbers = #tpu.dot_dimension_numbers<[1], [0], [0], [1], [0, 0, 1, 1], [], []>} : vector<16x1024xf32>, vector<1024x128xf32>, vector<16x128xf32> -> vector<16x128xf32>
    %60 = arith.addf %59, %31 : vector<16x128xf32>
    %c0_45 = arith.constant 0 : index
    %c0_46 = arith.constant 0 : index
    %61 = vector.load %arg12[%c0_45, %c0_46] : memref<16x128xf32, #tpu.memory_space<vmem>>, vector<16x128xf32>
    tpu.vector_store %arg12[%c0_45, %c0_46], %60 {strides = array<i32>} : memref<16x128xf32, #tpu.memory_space<vmem>>, vector<16x128xf32>,
    return
  }
  func.func @transform_0(%arg0: i32) -> (i32, i32) {
    %c0_i32 = arith.constant 0 : i32
    %c0_i32_0 = arith.constant 0 : i32
    return %arg0, %c0_i32 : i32, i32
  }
  func.func @transform_1(%arg0: i32) -> (i32, i32) {
    %c0_i32 = arith.constant 0 : i32
    %c0_i32_0 = arith.constant 0 : i32
    return %arg0, %c0_i32 : i32, i32
  }
  func.func @transform_2(%arg0: i32) -> (i32, i32) {
    %c0_i32 = arith.constant 0 : i32
    %c0_i32_0 = arith.constant 0 : i32
    %c0_i32_1 = arith.constant 0 : i32
    return %c0_i32, %c0_i32_0 : i32, i32
  }
  func.func @transform_3(%arg0: i32) -> (i32, i32) {
    %c0_i32 = arith.constant 0 : i32
    %c0_i32_0 = arith.constant 0 : i32
    %c0_i32_1 = arith.constant 0 : i32
    return %c0_i32, %c0_i32_0 : i32, i32
  }
  func.func @transform_4(%arg0: i32) -> (i32, i32) {
    %c0_i32 = arith.constant 0 : i32
    %c0_i32_0 = arith.constant 0 : i32
    %c0_i32_1 = arith.constant 0 : i32
    return %c0_i32, %c0_i32_0 : i32, i32
  }
  func.func @transform_5(%arg0: i32) -> (i32, i32) {
    %c0_i32 = arith.constant 0 : i32
    %c0_i32_0 = arith.constant 0 : i32
    %c0_i32_1 = arith.constant 0 : i32
    return %c0_i32, %c0_i32_0 : i32, i32
  }
  func.func @transform_6(%arg0: i32) -> (i32, i32) {
    %c0_i32 = arith.constant 0 : i32
    %c0_i32_0 = arith.constant 0 : i32
    %c0_i32_1 = arith.constant 0 : i32
    return %c0_i32, %c0_i32_0 : i32, i32
  }
  func.func @transform_7(%arg0: i32) -> (i32, i32) {
    %c0_i32 = arith.constant 0 : i32
    %c0_i32_0 = arith.constant 0 : i32
    %c0_i32_1 = arith.constant 0 : i32
    return %c0_i32, %c0_i32_0 : i32, i32
  }
  func.func @transform_8(%arg0: i32) -> (i32, i32) {
    %c0_i32 = arith.constant 0 : i32
    %c0_i32_0 = arith.constant 0 : i32
    %c0_i32_1 = arith.constant 0 : i32
    return %c0_i32, %c0_i32_0 : i32, i32
  }
  func.func @transform_9(%arg0: i32) -> (i32, i32) {
    %c0_i32 = arith.constant 0 : i32
    %c0_i32_0 = arith.constant 0 : i32
    %c0_i32_1 = arith.constant 0 : i32
    return %c0_i32, %c0_i32_0 : i32, i32
  }
  func.func @transform_10(%arg0: i32) -> (i32, i32) {
    %c0_i32 = arith.constant 0 : i32
    %c0_i32_0 = arith.constant 0 : i32
    %c0_i32_1 = arith.constant 0 : i32
    return %c0_i32, %c0_i32_0 : i32, i32
  }
  func.func @transform_11(%arg0: i32) -> (i32, i32) {
    %c0_i32 = arith.constant 0 : i32
    %c0_i32_0 = arith.constant 0 : i32
    return %arg0, %c0_i32 : i32, i32
  }
}

</mosaic_0001>

<llo_original>
// kernel: tpu_custom_call.1
$region0: #{tpu_custom_call.1}
  #allocation0 [shape = 'u32[]', space=smem, size = 0x4, offset = 0x4, fixed_abs, tag = 'smem constant byte address 0x4 - core index']
  #allocation1 [shape = 'u32[144,128]{1,0:T(1,128)}', space=vmem, size = 0x12000, scoped, tag = 'internal scratch']
  %s0 = inlined_call_operand.hbm [shape: f32[16,128], index: 0, kind: input, shape index: {}]
  %s1 = inlined_call_operand.vmem [shape: f32[16,8], index: 1, kind: input, shape index: {}]
  %s2 = inlined_call_operand.hbm [shape: f32[8,32], index: 2, kind: input, shape index: {}]
  %s3 = inlined_call_operand.hbm [shape: f32[1,32], index: 3, kind: input, shape index: {}]
  %s4 = inlined_call_operand.vmem [shape: f32[32,32], index: 4, kind: input, shape index: {}]
  %s5 = inlined_call_operand.hbm [shape: f32[1,32], index: 5, kind: input, shape index: {}]
  %s6 = inlined_call_operand.hbm [shape: f32[32,2304], index: 6, kind: input, shape index: {}]
  %s7 = inlined_call_operand.vmem [shape: f32[1,2304], index: 7, kind: input, shape index: {}]
  %s8 = inlined_call_operand.hbm [shape: f32[1024,128], index: 8, kind: input, shape index: {}]
  %s9 = inlined_call_operand.hbm [shape: f32[128,1024], index: 9, kind: input, shape index: {}]
  %s10 = inlined_call_operand.hbm [shape: f32[1024,128], index: 10, kind: input, shape index: {}]
  %s11 = inlined_call_operand.hbm [shape: f32[16,128], index: 11, kind: output, shape index: {}]
  %s12 = sld [smem:[#allocation0]]
  $region86: #{tpu_custom_call.1} parent=0
    _
  %s14 = ssub.s32 1, %s12
  %s15 = scalar_select 0, %s14, %s12
  $region1: #{tpu_custom_call.1} parent=0
    #allocation2 [shape = 'u8[8192]{0}', space=vmem, size = 0x2000, scoped, tag = 'input window, operand 0, single buffered']
    #allocation3 [shape = 's32[1]{0}', space=sflag, size = 0x4, scoped, tag = 'scoped memory for tpu_custom_call.1']
    #allocation4 [shape = 's32[1]{0}', space=sflag, size = 0x4, scoped, tag = 'scoped memory for tpu_custom_call.1']
    #allocation5 [shape = 'u8[4096]{0}', space=vmem, size = 0x1000, scoped, tag = 'input window, operand 2, single buffered']
    #allocation6 [shape = 's32[1]{0}', space=sflag, size = 0x4, scoped, tag = 'scoped memory for tpu_custom_call.1']
    #allocation7 [shape = 'u8[512]{0}', space=vmem, size = 0x400, scoped, tag = 'input window, operand 3, single buffered']
    #allocation8 [shape = 'u8[512]{0}', space=vmem, size = 0x400, scoped, tag = 'input window, operand 5, single buffered']
    #allocation9 [shape = 's32[1]{0}', space=sflag, size = 0x4, scoped, tag = 'scoped memory for tpu_custom_call.1']
    #allocation10 [shape = 'u8[294912]{0}', space=vmem, size = 0x48000, scoped, tag = 'input window, operand 6, single buffered']
    #allocation11 [shape = 'u8[524288]{0}', space=vmem, size = 0x80000, scoped, tag = 'input window, operand 8, single buffered']
    #allocation12 [shape = 's32[1]{0}', space=sflag, size = 0x4, scoped, tag = 'scoped memory for tpu_custom_call.1']
    #allocation13 [shape = 'u8[524288]{0}', space=vmem, size = 0x80000, scoped, tag = 'input window, operand 9, single buffered']
    #allocation14 [shape = 'u8[524288]{0}', space=vmem, size = 0x80000, scoped, tag = 'input window, operand 10, single buffered']
    #allocation15 [shape = 's32[1]{0}', space=sflag, size = 0x4, scoped, tag = 'scoped memory for tpu_custom_call.1']
    #allocation16 [shape = 'u8[8192]{0}', space=vmem, size = 0x2000, scoped, tag = 'output window, operand 0, single buffered']
    %16 = vsyncpa [#allocation3], 0
    %17 = vsyncpa [#allocation6], 0
    %18 = vsyncpa [#allocation9], 0
    %19 = vsyncpa [#allocation12], 0
    %20 = vsyncpa [#allocation15], 0
    %21 = vsyncpa [#allocation4], 0
    // Predicated region
    $region2: #{tpu_custom_call.1} parent=1 // pred_check
      _
    $region3: #{tpu_custom_call.1} parent=1 // pred_check_branch
      %23 = sbr.rel (0) target = $region5
    $region4: #{tpu_custom_call.1} parent=1 // pred_region
      %s25 = ssub.s32 256, 256
      %26 = vsyncadd [#allocation3], %s25
      %s27 = sshll.u32 [#allocation2], 4
      %s28 = int_to_ptr.vmem [resolvable:$true] %s27
      %33 = dma.hbm_to_vmem [thread:$0]  %s0, 256, %s28, [#allocation3], 128, 128, 8
    $region5: #{tpu_custom_call.1} parent=1 // pred_fallthru
      _
    // Predicated region
    $region6: #{tpu_custom_call.1} parent=1 // pred_check
      _
    $region7: #{tpu_custom_call.1} parent=1 // pred_check_branch
      %35 = sbr.rel (0) target = $region9
    $region8: #{tpu_custom_call.1} parent=1 // pred_region
      _
    $region9: #{tpu_custom_call.1} parent=1 // pred_fallthru
      _
    // Predicated region
    $region10: #{tpu_custom_call.1} parent=1 // pred_check
      _
    $region11: #{tpu_custom_call.1} parent=1 // pred_check_branch
      %37 = sbr.rel (0) target = $region13
    $region12: #{tpu_custom_call.1} parent=1 // pred_region
      %s39 = ssub.s32 128, 128
      %40 = vsyncadd [#allocation6], %s39
      %s42 = sshll.u32 [#allocation5], 4
      %s43 = int_to_ptr.vmem [resolvable:$true] %s42
      %45 = dma.hbm_to_vmem [thread:$0]  %s2, 128, %s43, [#allocation6]
    $region13: #{tpu_custom_call.1} parent=1 // pred_fallthru
      _
    // Predicated region
    $region14: #{tpu_custom_call.1} parent=1 // pred_check
      _
    $region15: #{tpu_custom_call.1} parent=1 // pred_check_branch
      %47 = sbr.rel (0) target = $region17
    $region16: #{tpu_custom_call.1} parent=1 // pred_region
      %s49 = ssub.s32 16, 16
      %50 = vsyncadd [#allocation6], %s49
      %s52 = sshll.u32 [#allocation7], 4
      %s53 = int_to_ptr.vmem [resolvable:$true] %s52
      %55 = dma.hbm_to_vmem [thread:$0]  %s3, 16, %s53, [#allocation6]
    $region17: #{tpu_custom_call.1} parent=1 // pred_fallthru
      _
    // Predicated region
    $region18: #{tpu_custom_call.1} parent=1 // pred_check
      _
    $region19: #{tpu_custom_call.1} parent=1 // pred_check_branch
      %57 = sbr.rel (0) target = $region21
    $region20: #{tpu_custom_call.1} parent=1 // pred_region
      _
    $region21: #{tpu_custom_call.1} parent=1 // pred_fallthru
      _
    // Predicated region
    $region22: #{tpu_custom_call.1} parent=1 // pred_check
      _
    $region23: #{tpu_custom_call.1} parent=1 // pred_check_branch
      %59 = sbr.rel (0) target = $region25
    $region24: #{tpu_custom_call.1} parent=1 // pred_region
      %s61 = ssub.s32 16, 16
      %62 = vsyncadd [#allocation9], %s61
      %s64 = sshll.u32 [#allocation8], 4
      %s65 = int_to_ptr.vmem [resolvable:$true] %s64
      %67 = dma.hbm_to_vmem [thread:$0]  %s5, 16, %s65, [#allocation9]
    $region25: #{tpu_custom_call.1} parent=1 // pred_fallthru
      _
    // Predicated region
    $region26: #{tpu_custom_call.1} parent=1 // pred_check
      _
    $region27: #{tpu_custom_call.1} parent=1 // pred_check_branch
      %69 = sbr.rel (0) target = $region29
    $region28: #{tpu_custom_call.1} parent=1 // pred_region
      %s71 = ssub.s32 9216, 9216
      %72 = vsyncadd [#allocation9], %s71
      %s73 = sshll.u32 [#allocation10], 4
      %s74 = int_to_ptr.vmem [resolvable:$true] %s73
      %79 = dma.hbm_to_vmem [thread:$0]  %s6, 9216, %s74, [#allocation9], 2304, 2304, 144
    $region29: #{tpu_custom_call.1} parent=1 // pred_fallthru
      _
    // Predicated region
    $region30: #{tpu_custom_call.1} parent=1 // pred_check
      _
    $region31: #{tpu_custom_call.1} parent=1 // pred_check_branch
      %81 = sbr.rel (0) target = $region33
    $region32: #{tpu_custom_call.1} parent=1 // pred_region
      _
    $region33: #{tpu_custom_call.1} parent=1 // pred_fallthru
      _
    // Predicated region
    $region34: #{tpu_custom_call.1} parent=1 // pred_check
      _
    $region35: #{tpu_custom_call.1} parent=1 // pred_check_branch
      %83 = sbr.rel (0) target = $region37
    $region36: #{tpu_custom_call.1} parent=1 // pred_region
      %s85 = ssub.s32 16384, 16384
      %86 = vsyncadd [#allocation12], %s85
      %s87 = sshll.u32 [#allocation11], 4
      %s88 = int_to_ptr.vmem [resolvable:$true] %s87
      %93 = dma.hbm_to_vmem [thread:$0]  %s8, 16384, %s88, [#allocation12], 128, 128, 8
    $region37: #{tpu_custom_call.1} parent=1 // pred_fallthru
      _
    // Predicated region
    $region38: #{tpu_custom_call.1} parent=1 // pred_check
      _
    $region39: #{tpu_custom_call.1} parent=1 // pred_check_branch
      %95 = sbr.rel (0) target = $region41
    $region40: #{tpu_custom_call.1} parent=1 // pred_region
      %s97 = ssub.s32 16384, 16384
      %98 = vsyncadd [#allocation12], %s97
      %s99 = sshll.u32 [#allocation13], 4
      %s100 = int_to_ptr.vmem [resolvable:$true] %s99
      %105 = dma.hbm_to_vmem [thread:$0]  %s9, 16384, %s100, [#allocation12], 1024, 1024, 64
    $region41: #{tpu_custom_call.1} parent=1 // pred_fallthru
      _
    // Predicated region
    $region42: #{tpu_custom_call.1} parent=1 // pred_check
      _
    $region43: #{tpu_custom_call.1} parent=1 // pred_check_branch
      %107 = sbr.rel (0) target = $region45
    $region44: #{tpu_custom_call.1} parent=1 // pred_region
      %s109 = ssub.s32 16384, 16384
      %110 = vsyncadd [#allocation15], %s109
      %s111 = sshll.u32 [#allocation14], 4
      %s112 = int_to_ptr.vmem [resolvable:$true] %s111
      %117 = dma.hbm_to_vmem [thread:$0]  %s10, 16384, %s112, [#allocation15], 128, 128, 8
    $region45: #{tpu_custom_call.1} parent=1 // pred_fallthru
      _
    // Predicated region
    $region46: #{tpu_custom_call.1} parent=1 // pred_check
      _
    $region47: #{tpu_custom_call.1} parent=1 // pred_check_branch
      %119 = sbr.rel (0) target = $region49
    $region48: #{tpu_custom_call.1} parent=1 // pred_region
      %120 = dma.done [#allocation3], 256
    $region49: #{tpu_custom_call.1} parent=1 // pred_fallthru
      _
    // Predicated region
    $region50: #{tpu_custom_call.1} parent=1 // pred_check
      _
    $region51: #{tpu_custom_call.1} parent=1 // pred_check_branch
      %122 = sbr.rel (0) target = $region53
    $region52: #{tpu_custom_call.1} parent=1 // pred_region
      %123 = dma.done [#allocation6], 128
    $region53: #{tpu_custom_call.1} parent=1 // pred_fallthru
      _
    // Predicated region
    $region54: #{tpu_custom_call.1} parent=1 // pred_check
      _
    $region55: #{tpu_custom_call.1} parent=1 // pred_check_branch
      %125 = sbr.rel (0) target = $region57
    $region56: #{tpu_custom_call.1} parent=1 // pred_region
      %126 = dma.done [#allocation6], 16
    $region57: #{tpu_custom_call.1} parent=1 // pred_fallthru
      _
    // Predicated region
    $region58: #{tpu_custom_call.1} parent=1 // pred_check
      _
    $region59: #{tpu_custom_call.1} parent=1 // pred_check_branch
      %128 = sbr.rel (0) target = $region61
    $region60: #{tpu_custom_call.1} parent=1 // pred_region
      %129 = dma.done [#allocation9], 16
    $region61: #{tpu_custom_call.1} parent=1 // pred_fallthru
      _
    // Predicated region
    $region62: #{tpu_custom_call.1} parent=1 // pred_check
      _
    $region63: #{tpu_custom_call.1} parent=1 // pred_check_branch
      %131 = sbr.rel (0) target = $region65
    $region64: #{tpu_custom_call.1} parent=1 // pred_region
      %132 = dma.done [#allocation9], 9216
    $region65: #{tpu_custom_call.1} parent=1 // pred_fallthru
      _
    // Predicated region
    $region66: #{tpu_custom_call.1} parent=1 // pred_check
      _
    $region67: #{tpu_custom_call.1} parent=1 // pred_check_branch
      %134 = sbr.rel (0) target = $region69
    $region68: #{tpu_custom_call.1} parent=1 // pred_region
      %135 = dma.done [#allocation12], 16384
    $region69: #{tpu_custom_call.1} parent=1 // pred_fallthru
      _
    // Predicated region
    $region70: #{tpu_custom_call.1} parent=1 // pred_check
      _
    $region71: #{tpu_custom_call.1} parent=1 // pred_check_branch
      %137 = sbr.rel (0) target = $region73
    $region72: #{tpu_custom_call.1} parent=1 // pred_region
      %138 = dma.done [#allocation12], 16384
    $region73: #{tpu_custom_call.1} parent=1 // pred_fallthru
      _
    // Predicated region
    $region74: #{tpu_custom_call.1} parent=1 // pred_check
      _
    $region75: #{tpu_custom_call.1} parent=1 // pred_check_branch
      %140 = sbr.rel (0) target = $region77
    $region76: #{tpu_custom_call.1} parent=1 // pred_region
      %141 = dma.done [#allocation15], 16384
    $region77: #{tpu_custom_call.1} parent=1 // pred_fallthru
      _
    %v142 = vld [vmem:[%s1] sm:$0xff]
    %v143 = vld [vmem:[%s1 + $0x8] sm:$0xff]
    %v144 = vld [vmem:[#allocation5] sm:$0xff]
    %v145 = vld [vmem:[#allocation7] sm:$0x1]
    %v147 = vlaneseq
    %v148 = vshrl.u32 %v147, 7
    %v149 = vsub.s32 0, %v148
    %v150 = vrot.slane %v145, %v149
    %vm152 = vcmask 64512
    %v154 = vsel %vm152, %v142, 0
    %v157 = vsel %vm152, %v143, 0
    %159 = vmatprep.subr.mxu0 0.0
    %160 = vmatpush1.msra.mxu0 %v144
    %161 = vmatprep.subr.mxu0 0.0
    %162 = vmatpush1.msra.mxu0 0.0
    %163 = vmatprep.subr.mxu0 0.0
    %164 = vmatpush1.msra.mxu0 0.0
    %165 = vmatprep.subr.mxu0 0.0
    %166 = vmatpush1.msra.mxu0 0.0
    %167 = vmatprep.subr.mxu0 0.0
    %168 = vmatpush1.msra.mxu0 0.0
    %169 = vmatprep.subr.mxu0 0.0
    %170 = vmatpush1.msra.mxu0 0.0
    %171 = vmatprep.subr.mxu0 0.0
    %172 = vmatpush1.msra.mxu0 0.0
    %173 = vmatprep.subr.mxu0 0.0
    %174 = vmatpush1.msra.mxu0 0.0
    %175 = vmatprep.subr.mxu0 0.0
    %176 = vmatpush1.msra.mxu0 0.0
    %177 = vmatprep.subr.mxu0 0.0
    %178 = vmatpush1.msra.mxu0 0.0
    %179 = vmatprep.subr.mxu0 0.0
    %180 = vmatpush1.msra.mxu0 0.0
    %181 = vmatprep.subr.mxu0 0.0
    %182 = vmatpush1.msra.mxu0 0.0
    %183 = vmatprep.subr.mxu0 0.0
    %184 = vmatpush1.msra.mxu0 0.0
    %185 = vmatprep.subr.mxu0 0.0
    %186 = vmatpush1.msra.mxu0 0.0
    %187 = vmatprep.subr.mxu0 0.0
    %188 = vmatpush1.msra.mxu0 0.0
    %189 = vmatprep.subr.mxu0 0.0
    %190 = vmatpush1.msra.mxu0 0.0
    %191 = vmatprep.subr.mxu0 0.0
    %192 = vmatpush1.msra.mxu0 0.0
    %193 = vmatprep.subr.mxu0 0.0
    %194 = vmatpush1.msra.mxu0 0.0
    %195 = vmatprep.subr.mxu0 0.0
    %196 = vmatpush1.msra.mxu0 0.0
    %197 = vmatprep.subr.mxu0 0.0
    %198 = vmatpush1.msra.mxu0 0.0
    %199 = vmatprep.subr.mxu0 0.0
    %200 = vmatpush1.msra.mxu0 0.0
    %201 = vmatprep.subr.mxu0 0.0
    %202 = vmatpush1.msra.mxu0 0.0
    %203 = vmatprep.subr.mxu0 0.0
    %204 = vmatpush1.msra.mxu0 0.0
    %205 = vmatprep.subr.mxu0 0.0
    %206 = vmatpush1.msra.mxu0 0.0
    %207 = vmatprep.subr.mxu0 0.0
    %208 = vmatpush1.msra.mxu0 0.0
    %209 = vmatprep.subr.mxu0 0.0
    %210 = vmatpush1.msra.mxu0 0.0
    %211 = vmatprep.subr.mxu0 0.0
    %212 = vmatpush1.msra.mxu0 0.0
    %213 = vmatprep.subr.mxu0 0.0
    %214 = vmatpush1.msra.mxu0 0.0
    %215 = vmatprep.subr.mxu0 0.0
    %216 = vmatpush1.msra.mxu0 0.0
    %217 = vmatprep.subr.mxu0 0.0
    %218 = vmatpush1.msra.mxu0 0.0
    %219 = vmatprep.subr.mxu0 0.0
    %220 = vmatpush1.msra.mxu0 0.0
    %221 = vmatprep.subr.mxu0 0.0
    %222 = vmatpush1.msra.mxu0 0.0
    %223 = vmatprep.mubr.f32.mxu0 0.0
    %224 = vmatmul.mubr.f32.gmra.mrb[0].mxu0 %v154
    %v225 = vpop.f32.mrb[0].mxu0
    %v226 = vadd.f32 %v150, %v225
    %v227 = vpop.f32.mrb[0].mxu0
    %228 = vmatprep.mubr.f32.mxu0 0.0
    %229 = vmatmul.mubr.f32.gmra.mrb[0].mxu0 %v157
    %v230 = vpop.f32.mrb[0].mxu0
    %v231 = vadd.f32 %v150, %v230
    %v232 = vpop.f32.mrb[0].mxu0
    %233 = vdwg.mxu0
    %v234 = vmax.f32 %v226, 0.0
    %v235 = vmax.f32 %v231, 0.0
    %v236 = vld [vmem:[%s4] sm:$0xff]
    %v237 = vld [vmem:[%s4 + $0x8] sm:$0xff]
    %v238 = vld [vmem:[%s4 + $0x10] sm:$0xff]
    %v239 = vld [vmem:[%s4 + $0x18] sm:$0xff]
    %v240 = vld [vmem:[#allocation8] sm:$0x1]
    %v242 = vlaneseq
    %v243 = vshrl.u32 %v242, 7
    %v244 = vsub.s32 0, %v243
    %v245 = vrot.slane %v240, %v244
    %vm247 = vcmask 261120
    %v249 = vsel %vm247, %v234, 0
    %v252 = vsel %vm247, %v235, 0
    %254 = vmatprep.subr.mxu0 0.0
    %255 = vmatpush1.msra.mxu0 %v236
    %256 = vmatprep.subr.mxu0 0.0
    %257 = vmatpush1.msra.mxu0 %v237
    %258 = vmatprep.subr.mxu0 0.0
    %259 = vmatpush1.msra.mxu0 %v238
    %260 = vmatprep.subr.mxu0 0.0
    %261 = vmatpush1.msra.mxu0 %v239
    %262 = vmatprep.subr.mxu0 0.0
    %263 = vmatpush1.msra.mxu0 0.0
    %264 = vmatprep.subr.mxu0 0.0
    %265 = vmatpush1.msra.mxu0 0.0
    %266 = vmatprep.subr.mxu0 0.0
    %267 = vmatpush1.msra.mxu0 0.0
    %268 = vmatprep.subr.mxu0 0.0
    %269 = vmatpush1.msra.mxu0 0.0
    %270 = vmatprep.subr.mxu0 0.0
    %271 = vmatpush1.msra.mxu0 0.0
    %272 = vmatprep.subr.mxu0 0.0
    %273 = vmatpush1.msra.mxu0 0.0
    %274 = vmatprep.subr.mxu0 0.0
    %275 = vmatpush1.msra.mxu0 0.0
    %276 = vmatprep.subr.mxu0 0.0
    %277 = vmatpush1.msra.mxu0 0.0
    %278 = vmatprep.subr.mxu0 0.0
    %279 = vmatpush1.msra.mxu0 0.0
    %280 = vmatprep.subr.mxu0 0.0
    %281 = vmatpush1.msra.mxu0 0.0
    %282 = vmatprep.subr.mxu0 0.0
    %283 = vmatpush1.msra.mxu0 0.0
    %284 = vmatprep.subr.mxu0 0.0
    %285 = vmatpush1.msra.mxu0 0.0
    %286 = vmatprep.subr.mxu0 0.0
    %287 = vmatpush1.msra.mxu0 0.0
    %288 = vmatprep.subr.mxu0 0.0
    %289 = vmatpush1.msra.mxu0 0.0
    %290 = vmatprep.subr.mxu0 0.0
    %291 = vmatpush1.msra.mxu0 0.0
    %292 = vmatprep.subr.mxu0 0.0
    %293 = vmatpush1.msra.mxu0 0.0
    %294 = vmatprep.subr.mxu0 0.0
    %295 = vmatpush1.msra.mxu0 0.0
    %296 = vmatprep.subr.mxu0 0.0
    %297 = vmatpush1.msra.mxu0 0.0
    %298 = vmatprep.subr.mxu0 0.0
    %299 = vmatpush1.msra.mxu0 0.0
    %300 = vmatprep.subr.mxu0 0.0
    %301 = vmatpush1.msra.mxu0 0.0
    %302 = vmatprep.subr.mxu0 0.0
    %303 = vmatpush1.msra.mxu0 0.0
    %304 = vmatprep.subr.mxu0 0.0
    %305 = vmatpush1.msra.mxu0 0.0
    %306 = vmatprep.subr.mxu0 0.0
    %307 = vmatpush1.msra.mxu0 0.0
    %308 = vmatprep.subr.mxu0 0.0
    %309 = vmatpush1.msra.mxu0 0.0
    %310 = vmatprep.subr.mxu0 0.0
    %311 = vmatpush1.msra.mxu0 0.0
    %312 = vmatprep.subr.mxu0 0.0
    %313 = vmatpush1.msra.mxu0 0.0
    %314 = vmatprep.subr.mxu0 0.0
    %315 = vmatpush1.msra.mxu0 0.0
    %316 = vmatprep.subr.mxu0 0.0
    %317 = vmatpush1.msra.mxu0 0.0
    %318 = vmatprep.mubr.f32.mxu0 0.0
    %319 = vmatmul.mubr.f32.gmra.mrb[0].mxu0 %v249
    %v320 = vpop.f32.mrb[0].mxu0
    %v321 = vadd.f32 %v245, %v320
    %v322 = vpop.f32.mrb[0].mxu0
    %323 = vmatprep.mubr.f32.mxu0 0.0
    %324 = vmatmul.mubr.f32.gmra.mrb[0].mxu0 %v252
    %v325 = vpop.f32.mrb[0].mxu0
    %v326 = vadd.f32 %v245, %v325
    %v327 = vpop.f32.mrb[0].mxu0
    %328 = vdwg.mxu0
    %v329 = vmax.f32 %v321, 0.0
    %v330 = vmax.f32 %v326, 0.0
    %v331 = vld [vmem:[#allocation2] sm:$0xff]
    %v332 = vld [vmem:[#allocation2 + $0x8] sm:$0xff]
    %v333 = vld [vmem:[#allocation10 + $0x80] sm:$0xff]
    %v334 = vld [vmem:[#allocation10 + $0x110] sm:$0xff]
    %v335 = vld [vmem:[#allocation10 + $0x1a0] sm:$0xff]
    %v336 = vld [vmem:[#allocation10 + $0x230] sm:$0xff]
    %v337 = vld [vmem:[%s7 + $0x10] sm:$0x1]
    %v339 = vlaneseq
    %v340 = vshrl.u32 %v339, 7
    %v341 = vsub.s32 0, %v340
    %v342 = vrot.slane %v337, %v341
    %v345 = vsel %vm247, %v329, 0
    %v348 = vsel %vm247, %v330, 0
    %350 = vmatprep.subr.mxu0 0.0
    %351 = vmatpush1.msra.mxu0 %v333
    %352 = vmatprep.subr.mxu0 0.0
    %353 = vmatpush1.msra.mxu0 %v334
    %354 = vmatprep.subr.mxu0 0.0
    %355 = vmatpush1.msra.mxu0 %v335
    %356 = vmatprep.subr.mxu0 0.0
    %357 = vmatpush1.msra.mxu0 %v336
    %358 = vmatprep.subr.mxu0 0.0
    %359 = vmatpush1.msra.mxu0 0.0
    %360 = vmatprep.subr.mxu0 0.0
    %361 = vmatpush1.msra.mxu0 0.0
    %362 = vmatprep.subr.mxu0 0.0
    %363 = vmatpush1.msra.mxu0 0.0
    %364 = vmatprep.subr.mxu0 0.0
    %365 = vmatpush1.msra.mxu0 0.0
    %366 = vmatprep.subr.mxu0 0.0
    %367 = vmatpush1.msra.mxu0 0.0
    %368 = vmatprep.subr.mxu0 0.0
    %369 = vmatpush1.msra.mxu0 0.0
    %370 = vmatprep.subr.mxu0 0.0
    %371 = vmatpush1.msra.mxu0 0.0
    %372 = vmatprep.subr.mxu0 0.0
    %373 = vmatpush1.msra.mxu0 0.0
    %374 = vmatprep.subr.mxu0 0.0
    %375 = vmatpush1.msra.mxu0 0.0
    %376 = vmatprep.subr.mxu0 0.0
    %377 = vmatpush1.msra.mxu0 0.0
    %378 = vmatprep.subr.mxu0 0.0
    %379 = vmatpush1.msra.mxu0 0.0
    %380 = vmatprep.subr.mxu0 0.0
    %381 = vmatpush1.msra.mxu0 0.0
    %382 = vmatprep.subr.mxu0 0.0
    %383 = vmatpush1.msra.mxu0 0.0
    %384 = vmatprep.subr.mxu0 0.0
    %385 = vmatpush1.msra.mxu0 0.0
    %386 = vmatprep.subr.mxu0 0.0
    %387 = vmatpush1.msra.mxu0 0.0
    %388 = vmatprep.subr.mxu0 0.0
    %389 = vmatpush1.msra.mxu0 0.0
    %390 = vmatprep.subr.mxu0 0.0
    %391 = vmatpush1.msra.mxu0 0.0
    %392 = vmatprep.subr.mxu0 0.0
    %393 = vmatpush1.msra.mxu0 0.0
    %394 = vmatprep.subr.mxu0 0.0
    %395 = vmatpush1.msra.mxu0 0.0
    %396 = vmatprep.subr.mxu0 0.0
    %397 = vmatpush1.msra.mxu0 0.0
    %398 = vmatprep.subr.mxu0 0.0
    %399 = vmatpush1.msra.mxu0 0.0
    %400 = vmatprep.subr.mxu0 0.0
    %401 = vmatpush1.msra.mxu0 0.0
    %402 = vmatprep.subr.mxu0 0.0
    %403 = vmatpush1.msra.mxu0 0.0
    %404 = vmatprep.subr.mxu0 0.0
    %405 = vmatpush1.msra.mxu0 0.0
    %406 = vmatprep.subr.mxu0 0.0
    %407 = vmatpush1.msra.mxu0 0.0
    %408 = vmatprep.subr.mxu0 0.0
    %409 = vmatpush1.msra.mxu0 0.0
    %410 = vmatprep.subr.mxu0 0.0
    %411 = vmatpush1.msra.mxu0 0.0
    %412 = vmatprep.subr.mxu0 0.0
    %413 = vmatpush1.msra.mxu0 0.0
    %414 = vmatprep.mubr.f32.mxu0 0.0
    %415 = vmatmul.mubr.f32.gmra.mrb[0].mxu0 %v345
    %v416 = vpop.f32.mrb[0].mxu0
    %v417 = vadd.f32 %v342, %v416
    %v418 = vpop.f32.mrb[0].mxu0
    %419 = vmatprep.mubr.f32.mxu0 0.0
    %420 = vmatmul.mubr.f32.gmra.mrb[0].mxu0 %v348
    %v421 = vpop.f32.mrb[0].mxu0
    %v422 = vadd.f32 %v342, %v421
    %v423 = vpop.f32.mrb[0].mxu0
    %424 = vdwg.mxu0
    %v425 = vtanh.pop %v417
    %v426 = vtanh.pop %v422
    %v427 = vmul.f32 %v425, 5.0
    %v428 = vmul.f32 %v426, 5.0
    %v429 = vld [vmem:[#allocation10 + $0x88] sm:$0xff]
    %v430 = vld [vmem:[#allocation10 + $0x118] sm:$0xff]
    %v431 = vld [vmem:[#allocation10 + $0x1a8] sm:$0xff]
    %v432 = vld [vmem:[#allocation10 + $0x238] sm:$0xff]
    %v433 = vld [vmem:[%s7 + $0x11] sm:$0x1]
    %v435 = vlaneseq
    %v436 = vshrl.u32 %v435, 7
    %v437 = vsub.s32 0, %v436
    %v438 = vrot.slane %v433, %v437
    %440 = vmatprep.subr.mxu0 0.0
    %441 = vmatpush1.msra.mxu0 %v429
    %442 = vmatprep.subr.mxu0 0.0
    %443 = vmatpush1.msra.mxu0 %v430
    %444 = vmatprep.subr.mxu0 0.0
    %445 = vmatpush1.msra.mxu0 %v431
    %446 = vmatprep.subr.mxu0 0.0
    %447 = vmatpush1.msra.mxu0 %v432
    %448 = vmatprep.subr.mxu0 0.0
    %449 = vmatpush1.msra.mxu0 0.0
    %450 = vmatprep.subr.mxu0 0.0
    %451 = vmatpush1.msra.mxu0 0.0
    %452 = vmatprep.subr.mxu0 0.0
    %453 = vmatpush1.msra.mxu0 0.0
    %454 = vmatprep.subr.mxu0 0.0
    %455 = vmatpush1.msra.mxu0 0.0
    %456 = vmatprep.subr.mxu0 0.0
    %457 = vmatpush1.msra.mxu0 0.0
    %458 = vmatprep.subr.mxu0 0.0
    %459 = vmatpush1.msra.mxu0 0.0
    %460 = vmatprep.subr.mxu0 0.0
    %461 = vmatpush1.msra.mxu0 0.0
    %462 = vmatprep.subr.mxu0 0.0
    %463 = vmatpush1.msra.mxu0 0.0
    %464 = vmatprep.subr.mxu0 0.0
    %465 = vmatpush1.msra.mxu0 0.0
    %466 = vmatprep.subr.mxu0 0.0
    %467 = vmatpush1.msra.mxu0 0.0
    %468 = vmatprep.subr.mxu0 0.0
    %469 = vmatpush1.msra.mxu0 0.0
    %470 = vmatprep.subr.mxu0 0.0
    %471 = vmatpush1.msra.mxu0 0.0
    %472 = vmatprep.subr.mxu0 0.0
    %473 = vmatpush1.msra.mxu0 0.0
    %474 = vmatprep.subr.mxu0 0.0
    %475 = vmatpush1.msra.mxu0 0.0
    %476 = vmatprep.subr.mxu0 0.0
    %477 = vmatpush1.msra.mxu0 0.0
    %478 = vmatprep.subr.mxu0 0.0
    %479 = vmatpush1.msra.mxu0 0.0
    %480 = vmatprep.subr.mxu0 0.0
    %481 = vmatpush1.msra.mxu0 0.0
    %482 = vmatprep.subr.mxu0 0.0
    %483 = vmatpush1.msra.mxu0 0.0
    %484 = vmatprep.subr.mxu0 0.0
    %485 = vmatpush1.msra.mxu0 0.0
    %486 = vmatprep.subr.mxu0 0.0
    %487 = vmatpush1.msra.mxu0 0.0
    %488 = vmatprep.subr.mxu0 0.0
    %489 = vmatpush1.msra.mxu0 0.0
    %490 = vmatprep.subr.mxu0 0.0
    %491 = vmatpush1.msra.mxu0 0.0
    %492 = vmatprep.subr.mxu0 0.0
    %493 = vmatpush1.msra.mxu0 0.0
    %494 = vmatprep.subr.mxu0 0.0
    %495 = vmatpush1.msra.mxu0 0.0
    %496 = vmatprep.subr.mxu0 0.0
    %497 = vmatpush1.msra.mxu0 0.0
    %498 = vmatprep.subr.mxu0 0.0
    %499 = vmatpush1.msra.mxu0 0.0
    %500 = vmatprep.subr.mxu0 0.0
    %501 = vmatpush1.msra.mxu0 0.0
    %502 = vmatprep.subr.mxu0 0.0
    %503 = vmatpush1.msra.mxu0 0.0
    %504 = vmatprep.mubr.f32.mxu0 0.0
    %505 = vmatmul.mubr.f32.gmra.mrb[0].mxu0 %v345
    %v506 = vpop.f32.mrb[0].mxu0
    %v507 = vadd.f32 %v438, %v506
    %v508 = vpop.f32.mrb[0].mxu0
    %509 = vmatprep.mubr.f32.mxu0 0.0
    %510 = vmatmul.mubr.f32.gmra.mrb[0].mxu0 %v348
    %v511 = vpop.f32.mrb[0].mxu0
    %v512 = vadd.f32 %v438, %v511
    %v513 = vpop.f32.mrb[0].mxu0
    %514 = vdwg.mxu0
    %v515 = vtanh.pop %v507
    %v516 = vtanh.pop %v512
    %v517 = vmul.f32 %v515, 5.0
    %v518 = vmul.f32 %v516, 5.0
    %v519 = vld [vmem:[#allocation10] sm:$0xff]
    %v520 = vld [vmem:[#allocation10 + $0x8] sm:$0xff]
    %v521 = vld [vmem:[#allocation10 + $0x10] sm:$0xff]
    %v522 = vld [vmem:[#allocation10 + $0x18] sm:$0xff]
    %v523 = vld [vmem:[#allocation10 + $0x20] sm:$0xff]
    %v524 = vld [vmem:[#allocation10 + $0x28] sm:$0xff]
    %v525 = vld [vmem:[#allocation10 + $0x30] sm:$0xff]
    %v526 = vld [vmem:[#allocation10 + $0x38] sm:$0xff]
    %v527 = vld [vmem:[#allocation10 + $0x90] sm:$0xff]
    %v528 = vld [vmem:[#allocation10 + $0x98] sm:$0xff]
    %v529 = vld [vmem:[#allocation10 + $0xa0] sm:$0xff]
    %v530 = vld [vmem:[#allocation10 + $0xa8] sm:$0xff]
    %v531 = vld [vmem:[#allocation10 + $0xb0] sm:$0xff]
    %v532 = vld [vmem:[#allocation10 + $0xb8] sm:$0xff]
    %v533 = vld [vmem:[#allocation10 + $0xc0] sm:$0xff]
    %v534 = vld [vmem:[#allocation10 + $0xc8] sm:$0xff]
    %v535 = vld [vmem:[#allocation10 + $0x120] sm:$0xff]
    %v536 = vld [vmem:[#allocation10 + $0x128] sm:$0xff]
    %v537 = vld [vmem:[#allocation10 + $0x130] sm:$0xff]
    %v538 = vld [vmem:[#allocation10 + $0x138] sm:$0xff]
    %v539 = vld [vmem:[#allocation10 + $0x140] sm:$0xff]
    %v540 = vld [vmem:[#allocation10 + $0x148] sm:$0xff]
    %v541 = vld [vmem:[#allocation10 + $0x150] sm:$0xff]
    %v542 = vld [vmem:[#allocation10 + $0x158] sm:$0xff]
    %v543 = vld [vmem:[#allocation10 + $0x1b0] sm:$0xff]
    %v544 = vld [vmem:[#allocation10 + $0x1b8] sm:$0xff]
    %v545 = vld [vmem:[#allocation10 + $0x1c0] sm:$0xff]
    %v546 = vld [vmem:[#allocation10 + $0x1c8] sm:$0xff]
    %v547 = vld [vmem:[#allocation10 + $0x1d0] sm:$0xff]
    %v548 = vld [vmem:[#allocation10 + $0x1d8] sm:$0xff]
    %v549 = vld [vmem:[#allocation10 + $0x1e0] sm:$0xff]
    %v550 = vld [vmem:[#allocation10 + $0x1e8] sm:$0xff]
    %v551 = vld [vmem:[%s7] sm:$0xff]
    %v553 = vlaneseq
    %v554 = vshrl.u32 %v553, 7
    %v555 = vsub.s32 0, %v554
    %v556 = vrot.slane %v551, %v555
    %v557 = vlaneseq
    %v558 = vshrl.u32 %v557, 7
    %v559 = vsub.s32 1, %v558
    %v560 = vrot.slane %v551, %v559
    %v561 = vlaneseq
    %v562 = vshrl.u32 %v561, 7
    %v563 = vsub.s32 2, %v562
    %v564 = vrot.slane %v551, %v563
    %v565 = vlaneseq
    %v566 = vshrl.u32 %v565, 7
    %v567 = vsub.s32 3, %v566
    %v568 = vrot.slane %v551, %v567
    %v569 = vlaneseq
    %v570 = vshrl.u32 %v569, 7
    %v571 = vsub.s32 4, %v570
    %v572 = vrot.slane %v551, %v571
    %v573 = vlaneseq
    %v574 = vshrl.u32 %v573, 7
    %v575 = vsub.s32 5, %v574
    %v576 = vrot.slane %v551, %v575
    %v577 = vlaneseq
    %v578 = vshrl.u32 %v577, 7
    %v579 = vsub.s32 6, %v578
    %v580 = vrot.slane %v551, %v579
    %v581 = vlaneseq
    %v582 = vshrl.u32 %v581, 7
    %v583 = vsub.s32 7, %v582
    %v584 = vrot.slane %v551, %v583
    %593 = vmatprep.subr.mxu0 %v520
    %594 = vmatpush1.msra.mxu0 %v519
    %595 = vmatprep.subr.mxu0 %v528
    %596 = vmatpush1.msra.mxu0 %v527
    %597 = vmatprep.subr.mxu0 %v536
    %598 = vmatpush1.msra.mxu0 %v535
    %599 = vmatprep.subr.mxu0 %v544
    %600 = vmatpush1.msra.mxu0 %v543
    %601 = vmatprep.subr.mxu0 0.0
    %602 = vmatpush1.msra.mxu0 0.0
    %603 = vmatprep.subr.mxu0 0.0
    %604 = vmatpush1.msra.mxu0 0.0
    %605 = vmatprep.subr.mxu0 0.0
    %606 = vmatpush1.msra.mxu0 0.0
    %607 = vmatprep.subr.mxu0 0.0
    %608 = vmatpush1.msra.mxu0 0.0
    %609 = vmatprep.subr.mxu0 0.0
    %610 = vmatpush1.msra.mxu0 0.0
    %611 = vmatprep.subr.mxu0 0.0
    %612 = vmatpush1.msra.mxu0 0.0
    %613 = vmatprep.subr.mxu0 0.0
    %614 = vmatpush1.msra.mxu0 0.0
    %615 = vmatprep.subr.mxu0 0.0
    %616 = vmatpush1.msra.mxu0 0.0
    %617 = vmatprep.subr.mxu0 0.0
    %618 = vmatpush1.msra.mxu0 0.0
    %619 = vmatprep.subr.mxu0 0.0
    %620 = vmatpush1.msra.mxu0 0.0
    %621 = vmatprep.subr.mxu0 0.0
    %622 = vmatpush1.msra.mxu0 0.0
    %623 = vmatprep.subr.mxu0 0.0
    %624 = vmatpush1.msra.mxu0 0.0
    %625 = vmatprep.subr.mxu0 0.0
    %626 = vmatpush1.msra.mxu0 0.0
    %627 = vmatprep.subr.mxu0 0.0
    %628 = vmatpush1.msra.mxu0 0.0
    %629 = vmatprep.subr.mxu0 0.0
    %630 = vmatpush1.msra.mxu0 0.0
    %631 = vmatprep.subr.mxu0 0.0
    %632 = vmatpush1.msra.mxu0 0.0
    %633 = vmatprep.subr.mxu0 0.0
    %634 = vmatpush1.msra.mxu0 0.0
    %635 = vmatprep.subr.mxu0 0.0
    %636 = vmatpush1.msra.mxu0 0.0
    %637 = vmatprep.subr.mxu0 0.0
    %638 = vmatpush1.msra.mxu0 0.0
    %639 = vmatprep.subr.mxu0 0.0
    %640 = vmatpush1.msra.mxu0 0.0
    %641 = vmatprep.subr.mxu0 0.0
    %642 = vmatpush1.msra.mxu0 0.0
    %643 = vmatprep.subr.mxu0 0.0
    %644 = vmatpush1.msra.mxu0 0.0
    %645 = vmatprep.subr.mxu0 0.0
    %646 = vmatpush1.msra.mxu0 0.0
    %647 = vmatprep.subr.mxu0 0.0
    %648 = vmatpush1.msra.mxu0 0.0
    %649 = vmatprep.subr.mxu0 0.0
    %650 = vmatpush1.msra.mxu0 0.0
    %651 = vmatprep.subr.mxu0 0.0
    %652 = vmatpush1.msra.mxu0 0.0
    %653 = vmatprep.subr.mxu0 0.0
    %654 = vmatpush1.msra.mxu0 0.0
    %655 = vmatprep.subr.mxu0 0.0
    %656 = vmatpush1.msra.mxu0 0.0
    %657 = vmatprep.mubr.f32.mxu0 0.0
    %658 = vmatmul.mubr.f32.gmra.mrb[0].mxu0 %v345
    %v659 = vpop.f32.mrb[0].mxu0
    %v660 = vadd.f32 %v556, %v659
    %v661 = vpop.f32.mrb[0].mxu0
    %v662 = vadd.f32 %v560, %v661
    %663 = vmatprep.mubr.f32.mxu0 0.0
    %664 = vmatmul.mubr.f32.gmra.mrb[0].mxu0 %v348
    %v665 = vpop.f32.mrb[0].mxu0
    %v666 = vadd.f32 %v556, %v665
    %v667 = vpop.f32.mrb[0].mxu0
    %v668 = vadd.f32 %v560, %v667
    %669 = vdwg.mxu0
    %670 = vmatprep.subr.mxu0 %v522
    %671 = vmatpush1.msra.mxu0 %v521
    %672 = vmatprep.subr.mxu0 %v530
    %673 = vmatpush1.msra.mxu0 %v529
    %674 = vmatprep.subr.mxu0 %v538
    %675 = vmatpush1.msra.mxu0 %v537
    %676 = vmatprep.subr.mxu0 %v546
    %677 = vmatpush1.msra.mxu0 %v545
    %678 = vmatprep.subr.mxu0 0.0
    %679 = vmatpush1.msra.mxu0 0.0
    %680 = vmatprep.subr.mxu0 0.0
    %681 = vmatpush1.msra.mxu0 0.0
    %682 = vmatprep.subr.mxu0 0.0
    %683 = vmatpush1.msra.mxu0 0.0
    %684 = vmatprep.subr.mxu0 0.0
    %685 = vmatpush1.msra.mxu0 0.0
    %686 = vmatprep.subr.mxu0 0.0
    %687 = vmatpush1.msra.mxu0 0.0
    %688 = vmatprep.subr.mxu0 0.0
    %689 = vmatpush1.msra.mxu0 0.0
    %690 = vmatprep.subr.mxu0 0.0
    %691 = vmatpush1.msra.mxu0 0.0
    %692 = vmatprep.subr.mxu0 0.0
    %693 = vmatpush1.msra.mxu0 0.0
    %694 = vmatprep.subr.mxu0 0.0
    %695 = vmatpush1.msra.mxu0 0.0
    %696 = vmatprep.subr.mxu0 0.0
    %697 = vmatpush1.msra.mxu0 0.0
    %698 = vmatprep.subr.mxu0 0.0
    %699 = vmatpush1.msra.mxu0 0.0
    %700 = vmatprep.subr.mxu0 0.0
    %701 = vmatpush1.msra.mxu0 0.0
    %702 = vmatprep.subr.mxu0 0.0
    %703 = vmatpush1.msra.mxu0 0.0
    %704 = vmatprep.subr.mxu0 0.0
    %705 = vmatpush1.msra.mxu0 0.0
    %706 = vmatprep.subr.mxu0 0.0
    %707 = vmatpush1.msra.mxu0 0.0
    %708 = vmatprep.subr.mxu0 0.0
    %709 = vmatpush1.msra.mxu0 0.0
    %710 = vmatprep.subr.mxu0 0.0
    %711 = vmatpush1.msra.mxu0 0.0
    %712 = vmatprep.subr.mxu0 0.0
    %713 = vmatpush1.msra.mxu0 0.0
    %714 = vmatprep.subr.mxu0 0.0
    %715 = vmatpush1.msra.mxu0 0.0
    %716 = vmatprep.subr.mxu0 0.0
    %717 = vmatpush1.msra.mxu0 0.0
    %718 = vmatprep.subr.mxu0 0.0
    %719 = vmatpush1.msra.mxu0 0.0
    %720 = vmatprep.subr.mxu0 0.0
    %721 = vmatpush1.msra.mxu0 0.0
    %722 = vmatprep.subr.mxu0 0.0
    %723 = vmatpush1.msra.mxu0 0.0
    %724 = vmatprep.subr.mxu0 0.0
    %725 = vmatpush1.msra.mxu0 0.0
    %726 = vmatprep.subr.mxu0 0.0
    %727 = vmatpush1.msra.mxu0 0.0
    %728 = vmatprep.subr.mxu0 0.0
    %729 = vmatpush1.msra.mxu0 0.0
    %730 = vmatprep.subr.mxu0 0.0
    %731 = vmatpush1.msra.mxu0 0.0
    %732 = vmatprep.subr.mxu0 0.0
    %733 = vmatpush1.msra.mxu0 0.0
    %734 = vmatprep.mubr.f32.mxu0 0.0
    %735 = vmatmul.mubr.f32.gmra.mrb[0].mxu0 %v345
    %v736 = vpop.f32.mrb[0].mxu0
    %v737 = vadd.f32 %v564, %v736
    %v738 = vpop.f32.mrb[0].mxu0
    %v739 = vadd.f32 %v568, %v738
    %740 = vmatprep.mubr.f32.mxu0 0.0
    %741 = vmatmul.mubr.f32.gmra.mrb[0].mxu0 %v348
    %v742 = vpop.f32.mrb[0].mxu0
    %v743 = vadd.f32 %v564, %v742
    %v744 = vpop.f32.mrb[0].mxu0
    %v745 = vadd.f32 %v568, %v744
    %746 = vdwg.mxu0
    %747 = vmatprep.subr.mxu0 %v524
    %748 = vmatpush1.msra.mxu0 %v523
    %749 = vmatprep.subr.mxu0 %v532
    %750 = vmatpush1.msra.mxu0 %v531
    %751 = vmatprep.subr.mxu0 %v540
    %752 = vmatpush1.msra.mxu0 %v539
    %753 = vmatprep.subr.mxu0 %v548
    %754 = vmatpush1.msra.mxu0 %v547
    %755 = vmatprep.subr.mxu0 0.0
    %756 = vmatpush1.msra.mxu0 0.0
    %757 = vmatprep.subr.mxu0 0.0
    %758 = vmatpush1.msra.mxu0 0.0
    %759 = vmatprep.subr.mxu0 0.0
    %760 = vmatpush1.msra.mxu0 0.0
    %761 = vmatprep.subr.mxu0 0.0
    %762 = vmatpush1.msra.mxu0 0.0
    %763 = vmatprep.subr.mxu0 0.0
    %764 = vmatpush1.msra.mxu0 0.0
    %765 = vmatprep.subr.mxu0 0.0
    %766 = vmatpush1.msra.mxu0 0.0
    %767 = vmatprep.subr.mxu0 0.0
    %768 = vmatpush1.msra.mxu0 0.0
    %769 = vmatprep.subr.mxu0 0.0
    %770 = vmatpush1.msra.mxu0 0.0
    %771 = vmatprep.subr.mxu0 0.0
    %772 = vmatpush1.msra.mxu0 0.0
    %773 = vmatprep.subr.mxu0 0.0
    %774 = vmatpush1.msra.mxu0 0.0
    %775 = vmatprep.subr.mxu0 0.0
    %776 = vmatpush1.msra.mxu0 0.0
    %777 = vmatprep.subr.mxu0 0.0
    %778 = vmatpush1.msra.mxu0 0.0
    %779 = vmatprep.subr.mxu0 0.0
    %780 = vmatpush1.msra.mxu0 0.0
    %781 = vmatprep.subr.mxu0 0.0
    %782 = vmatpush1.msra.mxu0 0.0
    %783 = vmatprep.subr.mxu0 0.0
    %784 = vmatpush1.msra.mxu0 0.0
    %785 = vmatprep.subr.mxu0 0.0
    %786 = vmatpush1.msra.mxu0 0.0
    %787 = vmatprep.subr.mxu0 0.0
    %788 = vmatpush1.msra.mxu0 0.0
    %789 = vmatprep.subr.mxu0 0.0
    %790 = vmatpush1.msra.mxu0 0.0
    %791 = vmatprep.subr.mxu0 0.0
    %792 = vmatpush1.msra.mxu0 0.0
    %793 = vmatprep.subr.mxu0 0.0
    %794 = vmatpush1.msra.mxu0 0.0
    %795 = vmatprep.subr.mxu0 0.0
    %796 = vmatpush1.msra.mxu0 0.0
    %797 = vmatprep.subr.mxu0 0.0
    %798 = vmatpush1.msra.mxu0 0.0
    %799 = vmatprep.subr.mxu0 0.0
    %800 = vmatpush1.msra.mxu0 0.0
    %801 = vmatprep.subr.mxu0 0.0
    %802 = vmatpush1.msra.mxu0 0.0
    %803 = vmatprep.subr.mxu0 0.0
    %804 = vmatpush1.msra.mxu0 0.0
    %805 = vmatprep.subr.mxu0 0.0
    %806 = vmatpush1.msra.mxu0 0.0
    %807 = vmatprep.subr.mxu0 0.0
    %808 = vmatpush1.msra.mxu0 0.0
    %809 = vmatprep.subr.mxu0 0.0
    %810 = vmatpush1.msra.mxu0 0.0
    %811 = vmatprep.mubr.f32.mxu0 0.0
    %812 = vmatmul.mubr.f32.gmra.mrb[0].mxu0 %v345
    %v813 = vpop.f32.mrb[0].mxu0
    %v814 = vadd.f32 %v572, %v813
    %v815 = vpop.f32.mrb[0].mxu0
    %v816 = vadd.f32 %v576, %v815
    %817 = vmatprep.mubr.f32.mxu0 0.0
    %818 = vmatmul.mubr.f32.gmra.mrb[0].mxu0 %v348
    %v819 = vpop.f32.mrb[0].mxu0
    %v820 = vadd.f32 %v572, %v819
    %v821 = vpop.f32.mrb[0].mxu0
    %v822 = vadd.f32 %v576, %v821
    %823 = vdwg.mxu0
    %824 = vmatprep.subr.mxu0 %v526
    %825 = vmatpush1.msra.mxu0 %v525
    %826 = vmatprep.subr.mxu0 %v534
    %827 = vmatpush1.msra.mxu0 %v533
    %828 = vmatprep.subr.mxu0 %v542
    %829 = vmatpush1.msra.mxu0 %v541
    %830 = vmatprep.subr.mxu0 %v550
    %831 = vmatpush1.msra.mxu0 %v549
    %832 = vmatprep.subr.mxu0 0.0
    %833 = vmatpush1.msra.mxu0 0.0
    %834 = vmatprep.subr.mxu0 0.0
    %835 = vmatpush1.msra.mxu0 0.0
    %836 = vmatprep.subr.mxu0 0.0
    %837 = vmatpush1.msra.mxu0 0.0
    %838 = vmatprep.subr.mxu0 0.0
    %839 = vmatpush1.msra.mxu0 0.0
    %840 = vmatprep.subr.mxu0 0.0
    %841 = vmatpush1.msra.mxu0 0.0
    %842 = vmatprep.subr.mxu0 0.0
    %843 = vmatpush1.msra.mxu0 0.0
    %844 = vmatprep.subr.mxu0 0.0
    %845 = vmatpush1.msra.mxu0 0.0
    %846 = vmatprep.subr.mxu0 0.0
    %847 = vmatpush1.msra.mxu0 0.0
    %848 = vmatprep.subr.mxu0 0.0
    %849 = vmatpush1.msra.mxu0 0.0
    %850 = vmatprep.subr.mxu0 0.0
    %851 = vmatpush1.msra.mxu0 0.0
    %852 = vmatprep.subr.mxu0 0.0
    %853 = vmatpush1.msra.mxu0 0.0
    %854 = vmatprep.subr.mxu0 0.0
    %855 = vmatpush1.msra.mxu0 0.0
    %856 = vmatprep.subr.mxu0 0.0
    %857 = vmatpush1.msra.mxu0 0.0
    %858 = vmatprep.subr.mxu0 0.0
    %859 = vmatpush1.msra.mxu0 0.0
    %860 = vmatprep.subr.mxu0 0.0
    %861 = vmatpush1.msra.mxu0 0.0
    %862 = vmatprep.subr.mxu0 0.0
    %863 = vmatpush1.msra.mxu0 0.0
    %864 = vmatprep.subr.mxu0 0.0
    %865 = vmatpush1.msra.mxu0 0.0
    %866 = vmatprep.subr.mxu0 0.0
    %867 = vmatpush1.msra.mxu0 0.0
    %868 = vmatprep.subr.mxu0 0.0
    %869 = vmatpush1.msra.mxu0 0.0
    %870 = vmatprep.subr.mxu0 0.0
    %871 = vmatpush1.msra.mxu0 0.0
    %872 = vmatprep.subr.mxu0 0.0
    %873 = vmatpush1.msra.mxu0 0.0
    %874 = vmatprep.subr.mxu0 0.0
    %875 = vmatpush1.msra.mxu0 0.0
    %876 = vmatprep.subr.mxu0 0.0
    %877 = vmatpush1.msra.mxu0 0.0
    %878 = vmatprep.subr.mxu0 0.0
    %879 = vmatpush1.msra.mxu0 0.0
    %880 = vmatprep.subr.mxu0 0.0
    %881 = vmatpush1.msra.mxu0 0.0
    %882 = vmatprep.subr.mxu0 0.0
    %883 = vmatpush1.msra.mxu0 0.0
    %884 = vmatprep.subr.mxu0 0.0
    %885 = vmatpush1.msra.mxu0 0.0
    %886 = vmatprep.subr.mxu0 0.0
    %887 = vmatpush1.msra.mxu0 0.0
    %888 = vmatprep.mubr.f32.mxu0 0.0
    %889 = vmatmul.mubr.f32.gmra.mrb[0].mxu0 %v345
    %v890 = vpop.f32.mrb[0].mxu0
    %v891 = vadd.f32 %v580, %v890
    %v892 = vpop.f32.mrb[0].mxu0
    %v893 = vadd.f32 %v584, %v892
    %894 = vmatprep.mubr.f32.mxu0 0.0
    %895 = vmatmul.mubr.f32.gmra.mrb[0].mxu0 %v348
    %v896 = vpop.f32.mrb[0].mxu0
    %v897 = vadd.f32 %v580, %v896
    %v898 = vpop.f32.mrb[0].mxu0
    %v899 = vadd.f32 %v584, %v898
    %900 = vdwg.mxu0
    %v901 = vtanh.pop %v660
    %v902 = vtanh.pop %v662
    %v903 = vtanh.pop %v737
    %v904 = vtanh.pop %v739
    %v905 = vtanh.pop %v814
    %v906 = vtanh.pop %v816
    %v907 = vtanh.pop %v891
    %v908 = vtanh.pop %v893
    %v909 = vtanh.pop %v666
    %v910 = vtanh.pop %v668
    %v911 = vtanh.pop %v743
    %v912 = vtanh.pop %v745
    %v913 = vtanh.pop %v820
    %v914 = vtanh.pop %v822
    %v915 = vtanh.pop %v897
    %v916 = vtanh.pop %v899
    %v917 = vmul.f32 %v901, 5.0
    %v918 = vmul.f32 %v902, 5.0
    %v919 = vmul.f32 %v903, 5.0
    %v920 = vmul.f32 %v904, 5.0
    %v921 = vmul.f32 %v905, 5.0
    %v922 = vmul.f32 %v906, 5.0
    %v923 = vmul.f32 %v907, 5.0
    %v924 = vmul.f32 %v908, 5.0
    %v925 = vmul.f32 %v909, 5.0
    %v926 = vmul.f32 %v910, 5.0
    %v927 = vmul.f32 %v911, 5.0
    %v928 = vmul.f32 %v912, 5.0
    %v929 = vmul.f32 %v913, 5.0
    %v930 = vmul.f32 %v914, 5.0
    %v931 = vmul.f32 %v915, 5.0
    %v932 = vmul.f32 %v916, 5.0
    %v933 = vmul.f32 %v917, %v331
    %v934 = vmul.f32 %v918, %v331
    %v935 = vmul.f32 %v919, %v331
    %v936 = vmul.f32 %v920, %v331
    %v937 = vmul.f32 %v921, %v331
    %v938 = vmul.f32 %v922, %v331
    %v939 = vmul.f32 %v923, %v331
    %v940 = vmul.f32 %v924, %v331
    %v941 = vmul.f32 %v925, %v332
    %v942 = vmul.f32 %v926, %v332
    %v943 = vmul.f32 %v927, %v332
    %v944 = vmul.f32 %v928, %v332
    %v945 = vmul.f32 %v929, %v332
    %v946 = vmul.f32 %v930, %v332
    %v947 = vmul.f32 %v931, %v332
    %v948 = vmul.f32 %v932, %v332
    %v949 = vld [vmem:[#allocation11] sm:$0xff]
    %v950 = vld [vmem:[#allocation11 + $0x8] sm:$0xff]
    %v951 = vld [vmem:[#allocation11 + $0x10] sm:$0xff]
    %v952 = vld [vmem:[#allocation11 + $0x18] sm:$0xff]
    %v953 = vld [vmem:[#allocation11 + $0x20] sm:$0xff]
    %v954 = vld [vmem:[#allocation11 + $0x28] sm:$0xff]
    %v955 = vld [vmem:[#allocation11 + $0x30] sm:$0xff]
    %v956 = vld [vmem:[#allocation11 + $0x38] sm:$0xff]
    %v957 = vld [vmem:[#allocation11 + $0x40] sm:$0xff]
    %v958 = vld [vmem:[#allocation11 + $0x48] sm:$0xff]
    %v959 = vld [vmem:[#allocation11 + $0x50] sm:$0xff]
    %v960 = vld [vmem:[#allocation11 + $0x58] sm:$0xff]
    %v961 = vld [vmem:[#allocation11 + $0x60] sm:$0xff]
    %v962 = vld [vmem:[#allocation11 + $0x68] sm:$0xff]
    %v963 = vld [vmem:[#allocation11 + $0x70] sm:$0xff]
    %v964 = vld [vmem:[#allocation11 + $0x78] sm:$0xff]
    %v965 = vld [vmem:[#allocation11 + $0x80] sm:$0xff]
    %v966 = vld [vmem:[#allocation11 + $0x88] sm:$0xff]
    %v967 = vld [vmem:[#allocation11 + $0x90] sm:$0xff]
    %v968 = vld [vmem:[#allocation11 + $0x98] sm:$0xff]
    %v969 = vld [vmem:[#allocation11 + $0xa0] sm:$0xff]
    %v970 = vld [vmem:[#allocation11 + $0xa8] sm:$0xff]
    %v971 = vld [vmem:[#allocation11 + $0xb0] sm:$0xff]
    %v972 = vld [vmem:[#allocation11 + $0xb8] sm:$0xff]
    %v973 = vld [vmem:[#allocation11 + $0xc0] sm:$0xff]
    %v974 = vld [vmem:[#allocation11 + $0xc8] sm:$0xff]
    %v975 = vld [vmem:[#allocation11 + $0xd0] sm:$0xff]
    %v976 = vld [vmem:[#allocation11 + $0xd8] sm:$0xff]
    %v977 = vld [vmem:[#allocation11 + $0xe0] sm:$0xff]
    %v978 = vld [vmem:[#allocation11 + $0xe8] sm:$0xff]
    %v979 = vld [vmem:[#allocation11 + $0xf0] sm:$0xff]
    %v980 = vld [vmem:[#allocation11 + $0xf8] sm:$0xff]
    %v981 = vld [vmem:[#allocation11 + $0x100] sm:$0xff]
    %v982 = vld [vmem:[#allocation11 + $0x108] sm:$0xff]
    %v983 = vld [vmem:[#allocation11 + $0x110] sm:$0xff]
    %v984 = vld [vmem:[#allocation11 + $0x118] sm:$0xff]
    %v985 = vld [vmem:[#allocation11 + $0x120] sm:$0xff]
    %v986 = vld [vmem:[#allocation11 + $0x128] sm:$0xff]
    %v987 = vld [vmem:[#allocation11 + $0x130] sm:$0xff]
    %v988 = vld [vmem:[#allocation11 + $0x138] sm:$0xff]
    %v989 = vld [vmem:[#allocation11 + $0x140] sm:$0xff]
    %v990 = vld [vmem:[#allocation11 + $0x148] sm:$0xff]
    %v991 = vld [vmem:[#allocation11 + $0x150] sm:$0xff]
    %v992 = vld [vmem:[#allocation11 + $0x158] sm:$0xff]
    %v993 = vld [vmem:[#allocation11 + $0x160] sm:$0xff]
    %v994 = vld [vmem:[#allocation11 + $0x168] sm:$0xff]
    %v995 = vld [vmem:[#allocation11 + $0x170] sm:$0xff]
    %v996 = vld [vmem:[#allocation11 + $0x178] sm:$0xff]
    %v997 = vld [vmem:[#allocation11 + $0x180] sm:$0xff]
    %v998 = vld [vmem:[#allocation11 + $0x188] sm:$0xff]
    %v999 = vld [vmem:[#allocation11 + $0x190] sm:$0xff]
    %v1000 = vld [vmem:[#allocation11 + $0x198] sm:$0xff]
    %v1001 = vld [vmem:[#allocation11 + $0x1a0] sm:$0xff]
    %v1002 = vld [vmem:[#allocation11 + $0x1a8] sm:$0xff]
    %v1003 = vld [vmem:[#allocation11 + $0x1b0] sm:$0xff]
    %v1004 = vld [vmem:[#allocation11 + $0x1b8] sm:$0xff]
    %v1005 = vld [vmem:[#allocation11 + $0x1c0] sm:$0xff]
    %v1006 = vld [vmem:[#allocation11 + $0x1c8] sm:$0xff]
    %v1007 = vld [vmem:[#allocation11 + $0x1d0] sm:$0xff]
    %v1008 = vld [vmem:[#allocation11 + $0x1d8] sm:$0xff]
    %v1009 = vld [vmem:[#allocation11 + $0x1e0] sm:$0xff]
    %v1010 = vld [vmem:[#allocation11 + $0x1e8] sm:$0xff]
    %v1011 = vld [vmem:[#allocation11 + $0x1f0] sm:$0xff]
    %v1012 = vld [vmem:[#allocation11 + $0x1f8] sm:$0xff]
    %v1013 = vld [vmem:[#allocation11 + $0x200] sm:$0xff]
    %v1014 = vld [vmem:[#allocation11 + $0x208] sm:$0xff]
    %v1015 = vld [vmem:[#allocation11 + $0x210] sm:$0xff]
    %v1016 = vld [vmem:[#allocation11 + $0x218] sm:$0xff]
    %v1017 = vld [vmem:[#allocation11 + $0x220] sm:$0xff]
    %v1018 = vld [vmem:[#allocation11 + $0x228] sm:$0xff]
    %v1019 = vld [vmem:[#allocation11 + $0x230] sm:$0xff]
    %v1020 = vld [vmem:[#allocation11 + $0x238] sm:$0xff]
    %v1021 = vld [vmem:[#allocation11 + $0x240] sm:$0xff]
    %v1022 = vld [vmem:[#allocation11 + $0x248] sm:$0xff]
    %v1023 = vld [vmem:[#allocation11 + $0x250] sm:$0xff]
    %v1024 = vld [vmem:[#allocation11 + $0x258] sm:$0xff]
    %v1025 = vld [vmem:[#allocation11 + $0x260] sm:$0xff]
    %v1026 = vld [vmem:[#allocation11 + $0x268] sm:$0xff]
    %v1027 = vld [vmem:[#allocation11 + $0x270] sm:$0xff]
    %v1028 = vld [vmem:[#allocation11 + $0x278] sm:$0xff]
    %v1029 = vld [vmem:[#allocation11 + $0x280] sm:$0xff]
    %v1030 = vld [vmem:[#allocation11 + $0x288] sm:$0xff]
    %v1031 = vld [vmem:[#allocation11 + $0x290] sm:$0xff]
    %v1032 = vld [vmem:[#allocation11 + $0x298] sm:$0xff]
    %v1033 = vld [vmem:[#allocation11 + $0x2a0] sm:$0xff]
    %v1034 = vld [vmem:[#allocation11 + $0x2a8] sm:$0xff]
    %v1035 = vld [vmem:[#allocation11 + $0x2b0] sm:$0xff]
    %v1036 = vld [vmem:[#allocation11 + $0x2b8] sm:$0xff]
    %v1037 = vld [vmem:[#allocation11 + $0x2c0] sm:$0xff]
    %v1038 = vld [vmem:[#allocation11 + $0x2c8] sm:$0xff]
    %v1039 = vld [vmem:[#allocation11 + $0x2d0] sm:$0xff]
    %v1040 = vld [vmem:[#allocation11 + $0x2d8] sm:$0xff]
    %v1041 = vld [vmem:[#allocation11 + $0x2e0] sm:$0xff]
    %v1042 = vld [vmem:[#allocation11 + $0x2e8] sm:$0xff]
    %v1043 = vld [vmem:[#allocation11 + $0x2f0] sm:$0xff]
    %v1044 = vld [vmem:[#allocation11 + $0x2f8] sm:$0xff]
    %v1045 = vld [vmem:[#allocation11 + $0x300] sm:$0xff]
    %v1046 = vld [vmem:[#allocation11 + $0x308] sm:$0xff]
    %v1047 = vld [vmem:[#allocation11 + $0x310] sm:$0xff]
    %v1048 = vld [vmem:[#allocation11 + $0x318] sm:$0xff]
    %v1049 = vld [vmem:[#allocation11 + $0x320] sm:$0xff]
    %v1050 = vld [vmem:[#allocation11 + $0x328] sm:$0xff]
    %v1051 = vld [vmem:[#allocation11 + $0x330] sm:$0xff]
    %v1052 = vld [vmem:[#allocation11 + $0x338] sm:$0xff]
    %v1053 = vld [vmem:[#allocation11 + $0x340] sm:$0xff]
    %v1054 = vld [vmem:[#allocation11 + $0x348] sm:$0xff]
    %v1055 = vld [vmem:[#allocation11 + $0x350] sm:$0xff]
    %v1056 = vld [vmem:[#allocation11 + $0x358] sm:$0xff]
    %v1057 = vld [vmem:[#allocation11 + $0x360] sm:$0xff]
    %v1058 = vld [vmem:[#allocation11 + $0x368] sm:$0xff]
    %v1059 = vld [vmem:[#allocation11 + $0x370] sm:$0xff]
    %v1060 = vld [vmem:[#allocation11 + $0x378] sm:$0xff]
    %v1061 = vld [vmem:[#allocation11 + $0x380] sm:$0xff]
    %v1062 = vld [vmem:[#allocation11 + $0x388] sm:$0xff]
    %v1063 = vld [vmem:[#allocation11 + $0x390] sm:$0xff]
    %v1064 = vld [vmem:[#allocation11 + $0x398] sm:$0xff]
    %v1065 = vld [vmem:[#allocation11 + $0x3a0] sm:$0xff]
    %v1066 = vld [vmem:[#allocation11 + $0x3a8] sm:$0xff]
    %v1067 = vld [vmem:[#allocation11 + $0x3b0] sm:$0xff]
    %v1068 = vld [vmem:[#allocation11 + $0x3b8] sm:$0xff]
    %v1069 = vld [vmem:[#allocation11 + $0x3c0] sm:$0xff]
    %v1070 = vld [vmem:[#allocation11 + $0x3c8] sm:$0xff]
    %v1071 = vld [vmem:[#allocation11 + $0x3d0] sm:$0xff]
    %v1072 = vld [vmem:[#allocation11 + $0x3d8] sm:$0xff]
    %v1073 = vld [vmem:[#allocation11 + $0x3e0] sm:$0xff]
    %v1074 = vld [vmem:[#allocation11 + $0x3e8] sm:$0xff]
    %v1075 = vld [vmem:[#allocation11 + $0x3f0] sm:$0xff]
    %v1076 = vld [vmem:[#allocation11 + $0x3f8] sm:$0xff]
    %1077 = vmatprep.subr.mxu0 0.0
    %1078 = vmatpush1.msra.mxu0 %v949
    %1079 = vmatprep.subr.mxu0 0.0
    %1080 = vmatpush1.msra.mxu0 %v950
    %1081 = vmatprep.subr.mxu0 0.0
    %1082 = vmatpush1.msra.mxu0 %v951
    %1083 = vmatprep.subr.mxu0 0.0
    %1084 = vmatpush1.msra.mxu0 %v952
    %1085 = vmatprep.subr.mxu0 0.0
    %1086 = vmatpush1.msra.mxu0 %v953
    %1087 = vmatprep.subr.mxu0 0.0
    %1088 = vmatpush1.msra.mxu0 %v954
    %1089 = vmatprep.subr.mxu0 0.0
    %1090 = vmatpush1.msra.mxu0 %v955
    %1091 = vmatprep.subr.mxu0 0.0
    %1092 = vmatpush1.msra.mxu0 %v956
    %1093 = vmatprep.subr.mxu0 0.0
    %1094 = vmatpush1.msra.mxu0 %v957
    %1095 = vmatprep.subr.mxu0 0.0
    %1096 = vmatpush1.msra.mxu0 %v958
    %1097 = vmatprep.subr.mxu0 0.0
    %1098 = vmatpush1.msra.mxu0 %v959
    %1099 = vmatprep.subr.mxu0 0.0
    %1100 = vmatpush1.msra.mxu0 %v960
    %1101 = vmatprep.subr.mxu0 0.0
    %1102 = vmatpush1.msra.mxu0 %v961
    %1103 = vmatprep.subr.mxu0 0.0
    %1104 = vmatpush1.msra.mxu0 %v962
    %1105 = vmatprep.subr.mxu0 0.0
    %1106 = vmatpush1.msra.mxu0 %v963
    %1107 = vmatprep.subr.mxu0 0.0
    %1108 = vmatpush1.msra.mxu0 %v964
    %1109 = vmatprep.subr.mxu0 0.0
    %1110 = vmatpush1.msra.mxu0 %v965
    %1111 = vmatprep.subr.mxu0 0.0
    %1112 = vmatpush1.msra.mxu0 %v966
    %1113 = vmatprep.subr.mxu0 0.0
    %1114 = vmatpush1.msra.mxu0 %v967
    %1115 = vmatprep.subr.mxu0 0.0
    %1116 = vmatpush1.msra.mxu0 %v968
    %1117 = vmatprep.subr.mxu0 0.0
    %1118 = vmatpush1.msra.mxu0 %v969
    %1119 = vmatprep.subr.mxu0 0.0
    %1120 = vmatpush1.msra.mxu0 %v970
    %1121 = vmatprep.subr.mxu0 0.0
    %1122 = vmatpush1.msra.mxu0 %v971
    %1123 = vmatprep.subr.mxu0 0.0
    %1124 = vmatpush1.msra.mxu0 %v972
    %1125 = vmatprep.subr.mxu0 0.0
    %1126 = vmatpush1.msra.mxu0 %v973
    %1127 = vmatprep.subr.mxu0 0.0
    %1128 = vmatpush1.msra.mxu0 %v974
    %1129 = vmatprep.subr.mxu0 0.0
    %1130 = vmatpush1.msra.mxu0 %v975
    %1131 = vmatprep.subr.mxu0 0.0
    %1132 = vmatpush1.msra.mxu0 %v976
    %1133 = vmatprep.subr.mxu0 0.0
    %1134 = vmatpush1.msra.mxu0 %v977
    %1135 = vmatprep.subr.mxu0 0.0
    %1136 = vmatpush1.msra.mxu0 %v978
    %1137 = vmatprep.subr.mxu0 0.0
    %1138 = vmatpush1.msra.mxu0 %v979
    %1139 = vmatprep.subr.mxu0 0.0
    %1140 = vmatpush1.msra.mxu0 %v980
    %1141 = vmatprep.mubr.f32.mxu0 %v934
    %1142 = vmatmul.mubr.f32.gmra.mrb[0].mxu0 %v933
    %v1143 = vpop.f32.mrb[0].mxu0
    %v1144 = vadd.f32 %v427, %v1143
    %v1145 = vpop.f32.mrb[0].mxu0
    %1146 = vmatprep.mubr.f32.mxu0 %v942
    %1147 = vmatmul.mubr.f32.gmra.mrb[0].mxu0 %v941
    %v1148 = vpop.f32.mrb[0].mxu0
    %v1149 = vadd.f32 %v428, %v1148
    %v1150 = vpop.f32.mrb[0].mxu0
    %1151 = vdwg.mxu0
    %1152 = vmatprep.subr.mxu0 0.0
    %1153 = vmatpush1.msra.mxu0 %v981
    %1154 = vmatprep.subr.mxu0 0.0
    %1155 = vmatpush1.msra.mxu0 %v982
    %1156 = vmatprep.subr.mxu0 0.0
    %1157 = vmatpush1.msra.mxu0 %v983
    %1158 = vmatprep.subr.mxu0 0.0
    %1159 = vmatpush1.msra.mxu0 %v984
    %1160 = vmatprep.subr.mxu0 0.0
    %1161 = vmatpush1.msra.mxu0 %v985
    %1162 = vmatprep.subr.mxu0 0.0
    %1163 = vmatpush1.msra.mxu0 %v986
    %1164 = vmatprep.subr.mxu0 0.0
    %1165 = vmatpush1.msra.mxu0 %v987
    %1166 = vmatprep.subr.mxu0 0.0
    %1167 = vmatpush1.msra.mxu0 %v988
    %1168 = vmatprep.subr.mxu0 0.0
    %1169 = vmatpush1.msra.mxu0 %v989
    %1170 = vmatprep.subr.mxu0 0.0
    %1171 = vmatpush1.msra.mxu0 %v990
    %1172 = vmatprep.subr.mxu0 0.0
    %1173 = vmatpush1.msra.mxu0 %v991
    %1174 = vmatprep.subr.mxu0 0.0
    %1175 = vmatpush1.msra.mxu0 %v992
    %1176 = vmatprep.subr.mxu0 0.0
    %1177 = vmatpush1.msra.mxu0 %v993
    %1178 = vmatprep.subr.mxu0 0.0
    %1179 = vmatpush1.msra.mxu0 %v994
    %1180 = vmatprep.subr.mxu0 0.0
    %1181 = vmatpush1.msra.mxu0 %v995
    %1182 = vmatprep.subr.mxu0 0.0
    %1183 = vmatpush1.msra.mxu0 %v996
    %1184 = vmatprep.subr.mxu0 0.0
    %1185 = vmatpush1.msra.mxu0 %v997
    %1186 = vmatprep.subr.mxu0 0.0
    %1187 = vmatpush1.msra.mxu0 %v998
    %1188 = vmatprep.subr.mxu0 0.0
    %1189 = vmatpush1.msra.mxu0 %v999
    %1190 = vmatprep.subr.mxu0 0.0
    %1191 = vmatpush1.msra.mxu0 %v1000
    %1192 = vmatprep.subr.mxu0 0.0
    %1193 = vmatpush1.msra.mxu0 %v1001
    %1194 = vmatprep.subr.mxu0 0.0
    %1195 = vmatpush1.msra.mxu0 %v1002
    %1196 = vmatprep.subr.mxu0 0.0
    %1197 = vmatpush1.msra.mxu0 %v1003
    %1198 = vmatprep.subr.mxu0 0.0
    %1199 = vmatpush1.msra.mxu0 %v1004
    %1200 = vmatprep.subr.mxu0 0.0
    %1201 = vmatpush1.msra.mxu0 %v1005
    %1202 = vmatprep.subr.mxu0 0.0
    %1203 = vmatpush1.msra.mxu0 %v1006
    %1204 = vmatprep.subr.mxu0 0.0
    %1205 = vmatpush1.msra.mxu0 %v1007
    %1206 = vmatprep.subr.mxu0 0.0
    %1207 = vmatpush1.msra.mxu0 %v1008
    %1208 = vmatprep.subr.mxu0 0.0
    %1209 = vmatpush1.msra.mxu0 %v1009
    %1210 = vmatprep.subr.mxu0 0.0
    %1211 = vmatpush1.msra.mxu0 %v1010
    %1212 = vmatprep.subr.mxu0 0.0
    %1213 = vmatpush1.msra.mxu0 %v1011
    %1214 = vmatprep.subr.mxu0 0.0
    %1215 = vmatpush1.msra.mxu0 %v1012
    %1216 = vmatprep.mubr.f32.mxu0 %v936
    %1217 = vmatmul.mubr.f32.gmra.mrb[0].mxu0 %v935
    %v1218 = vpop.f32.mrb[0].mxu0
    %v1219 = vadd.f32 %v1144, %v1218
    %v1220 = vpop.f32.mrb[0].mxu0
    %1221 = vmatprep.mubr.f32.mxu0 %v944
    %1222 = vmatmul.mubr.f32.gmra.mrb[0].mxu0 %v943
    %v1223 = vpop.f32.mrb[0].mxu0
    %v1224 = vadd.f32 %v1149, %v1223
    %v1225 = vpop.f32.mrb[0].mxu0
    %1226 = vdwg.mxu0
    %1227 = vmatprep.subr.mxu0 0.0
    %1228 = vmatpush1.msra.mxu0 %v1013
    %1229 = vmatprep.subr.mxu0 0.0
    %1230 = vmatpush1.msra.mxu0 %v1014
    %1231 = vmatprep.subr.mxu0 0.0
    %1232 = vmatpush1.msra.mxu0 %v1015
    %1233 = vmatprep.subr.mxu0 0.0
    %1234 = vmatpush1.msra.mxu0 %v1016
    %1235 = vmatprep.subr.mxu0 0.0
    %1236 = vmatpush1.msra.mxu0 %v1017
    %1237 = vmatprep.subr.mxu0 0.0
    %1238 = vmatpush1.msra.mxu0 %v1018
    %1239 = vmatprep.subr.mxu0 0.0
    %1240 = vmatpush1.msra.mxu0 %v1019
    %1241 = vmatprep.subr.mxu0 0.0
    %1242 = vmatpush1.msra.mxu0 %v1020
    %1243 = vmatprep.subr.mxu0 0.0
    %1244 = vmatpush1.msra.mxu0 %v1021
    %1245 = vmatprep.subr.mxu0 0.0
    %1246 = vmatpush1.msra.mxu0 %v1022
    %1247 = vmatprep.subr.mxu0 0.0
    %1248 = vmatpush1.msra.mxu0 %v1023
    %1249 = vmatprep.subr.mxu0 0.0
    %1250 = vmatpush1.msra.mxu0 %v1024
    %1251 = vmatprep.subr.mxu0 0.0
    %1252 = vmatpush1.msra.mxu0 %v1025
    %1253 = vmatprep.subr.mxu0 0.0
    %1254 = vmatpush1.msra.mxu0 %v1026
    %1255 = vmatprep.subr.mxu0 0.0
    %1256 = vmatpush1.msra.mxu0 %v1027
    %1257 = vmatprep.subr.mxu0 0.0
    %1258 = vmatpush1.msra.mxu0 %v1028
    %1259 = vmatprep.subr.mxu0 0.0
    %1260 = vmatpush1.msra.mxu0 %v1029
    %1261 = vmatprep.subr.mxu0 0.0
    %1262 = vmatpush1.msra.mxu0 %v1030
    %1263 = vmatprep.subr.mxu0 0.0
    %1264 = vmatpush1.msra.mxu0 %v1031
    %1265 = vmatprep.subr.mxu0 0.0
    %1266 = vmatpush1.msra.mxu0 %v1032
    %1267 = vmatprep.subr.mxu0 0.0
    %1268 = vmatpush1.msra.mxu0 %v1033
    %1269 = vmatprep.subr.mxu0 0.0
    %1270 = vmatpush1.msra.mxu0 %v1034
    %1271 = vmatprep.subr.mxu0 0.0
    %1272 = vmatpush1.msra.mxu0 %v1035
    %1273 = vmatprep.subr.mxu0 0.0
    %1274 = vmatpush1.msra.mxu0 %v1036
    %1275 = vmatprep.subr.mxu0 0.0
    %1276 = vmatpush1.msra.mxu0 %v1037
    %1277 = vmatprep.subr.mxu0 0.0
    %1278 = vmatpush1.msra.mxu0 %v1038
    %1279 = vmatprep.subr.mxu0 0.0
    %1280 = vmatpush1.msra.mxu0 %v1039
    %1281 = vmatprep.subr.mxu0 0.0
    %1282 = vmatpush1.msra.mxu0 %v1040
    %1283 = vmatprep.subr.mxu0 0.0
    %1284 = vmatpush1.msra.mxu0 %v1041
    %1285 = vmatprep.subr.mxu0 0.0
    %1286 = vmatpush1.msra.mxu0 %v1042
    %1287 = vmatprep.subr.mxu0 0.0
    %1288 = vmatpush1.msra.mxu0 %v1043
    %1289 = vmatprep.subr.mxu0 0.0
    %1290 = vmatpush1.msra.mxu0 %v1044
    %1291 = vmatprep.mubr.f32.mxu0 %v938
    %1292 = vmatmul.mubr.f32.gmra.mrb[0].mxu0 %v937
    %v1293 = vpop.f32.mrb[0].mxu0
    %v1294 = vadd.f32 %v1219, %v1293
    %v1295 = vpop.f32.mrb[0].mxu0
    %1296 = vmatprep.mubr.f32.mxu0 %v946
    %1297 = vmatmul.mubr.f32.gmra.mrb[0].mxu0 %v945
    %v1298 = vpop.f32.mrb[0].mxu0
    %v1299 = vadd.f32 %v1224, %v1298
    %v1300 = vpop.f32.mrb[0].mxu0
    %1301 = vdwg.mxu0
    %1302 = vmatprep.subr.mxu0 0.0
    %1303 = vmatpush1.msra.mxu0 %v1045
    %1304 = vmatprep.subr.mxu0 0.0
    %1305 = vmatpush1.msra.mxu0 %v1046
    %1306 = vmatprep.subr.mxu0 0.0
    %1307 = vmatpush1.msra.mxu0 %v1047
    %1308 = vmatprep.subr.mxu0 0.0
    %1309 = vmatpush1.msra.mxu0 %v1048
    %1310 = vmatprep.subr.mxu0 0.0
    %1311 = vmatpush1.msra.mxu0 %v1049
    %1312 = vmatprep.subr.mxu0 0.0
    %1313 = vmatpush1.msra.mxu0 %v1050
    %1314 = vmatprep.subr.mxu0 0.0
    %1315 = vmatpush1.msra.mxu0 %v1051
    %1316 = vmatprep.subr.mxu0 0.0
    %1317 = vmatpush1.msra.mxu0 %v1052
    %1318 = vmatprep.subr.mxu0 0.0
    %1319 = vmatpush1.msra.mxu0 %v1053
    %1320 = vmatprep.subr.mxu0 0.0
    %1321 = vmatpush1.msra.mxu0 %v1054
    %1322 = vmatprep.subr.mxu0 0.0
    %1323 = vmatpush1.msra.mxu0 %v1055
    %1324 = vmatprep.subr.mxu0 0.0
    %1325 = vmatpush1.msra.mxu0 %v1056
    %1326 = vmatprep.subr.mxu0 0.0
    %1327 = vmatpush1.msra.mxu0 %v1057
    %1328 = vmatprep.subr.mxu0 0.0
    %1329 = vmatpush1.msra.mxu0 %v1058
    %1330 = vmatprep.subr.mxu0 0.0
    %1331 = vmatpush1.msra.mxu0 %v1059
    %1332 = vmatprep.subr.mxu0 0.0
    %1333 = vmatpush1.msra.mxu0 %v1060
    %1334 = vmatprep.subr.mxu0 0.0
    %1335 = vmatpush1.msra.mxu0 %v1061
    %1336 = vmatprep.subr.mxu0 0.0
    %1337 = vmatpush1.msra.mxu0 %v1062
    %1338 = vmatprep.subr.mxu0 0.0
    %1339 = vmatpush1.msra.mxu0 %v1063
    %1340 = vmatprep.subr.mxu0 0.0
    %1341 = vmatpush1.msra.mxu0 %v1064
    %1342 = vmatprep.subr.mxu0 0.0
    %1343 = vmatpush1.msra.mxu0 %v1065
    %1344 = vmatprep.subr.mxu0 0.0
    %1345 = vmatpush1.msra.mxu0 %v1066
    %1346 = vmatprep.subr.mxu0 0.0
    %1347 = vmatpush1.msra.mxu0 %v1067
    %1348 = vmatprep.subr.mxu0 0.0
    %1349 = vmatpush1.msra.mxu0 %v1068
    %1350 = vmatprep.subr.mxu0 0.0
    %1351 = vmatpush1.msra.mxu0 %v1069
    %1352 = vmatprep.subr.mxu0 0.0
    %1353 = vmatpush1.msra.mxu0 %v1070
    %1354 = vmatprep.subr.mxu0 0.0
    %1355 = vmatpush1.msra.mxu0 %v1071
    %1356 = vmatprep.subr.mxu0 0.0
    %1357 = vmatpush1.msra.mxu0 %v1072
    %1358 = vmatprep.subr.mxu0 0.0
    %1359 = vmatpush1.msra.mxu0 %v1073
    %1360 = vmatprep.subr.mxu0 0.0
    %1361 = vmatpush1.msra.mxu0 %v1074
    %1362 = vmatprep.subr.mxu0 0.0
    %1363 = vmatpush1.msra.mxu0 %v1075
    %1364 = vmatprep.subr.mxu0 0.0
    %1365 = vmatpush1.msra.mxu0 %v1076
    %1366 = vmatprep.mubr.f32.mxu0 %v940
    %1367 = vmatmul.mubr.f32.gmra.mrb[0].mxu0 %v939
    %v1368 = vpop.f32.mrb[0].mxu0
    %v1369 = vadd.f32 %v1294, %v1368
    %v1370 = vpop.f32.mrb[0].mxu0
    %1371 = vmatprep.mubr.f32.mxu0 %v948
    %1372 = vmatmul.mubr.f32.gmra.mrb[0].mxu0 %v947
    %v1373 = vpop.f32.mrb[0].mxu0
    %v1374 = vadd.f32 %v1299, %v1373
    %v1375 = vpop.f32.mrb[0].mxu0
    %1376 = vdwg.mxu0
    %v1377 = vmax.f32 %v1369, 0.0
    %v1378 = vmax.f32 %v1374, 0.0
    %v1379 = vld [vmem:[#allocation10 + $0x40] sm:$0xff]
    %v1380 = vld [vmem:[#allocation10 + $0x48] sm:$0xff]
    %v1381 = vld [vmem:[#allocation10 + $0x50] sm:$0xff]
    %v1382 = vld [vmem:[#allocation10 + $0x58] sm:$0xff]
    %v1383 = vld [vmem:[#allocation10 + $0x60] sm:$0xff]
    %v1384 = vld [vmem:[#allocation10 + $0x68] sm:$0xff]
    %v1385 = vld [vmem:[#allocation10 + $0x70] sm:$0xff]
    %v1386 = vld [vmem:[#allocation10 + $0x78] sm:$0xff]
    %v1387 = vld [vmem:[#allocation10 + $0xd0] sm:$0xff]
    %v1388 = vld [vmem:[#allocation10 + $0xd8] sm:$0xff]
    %v1389 = vld [vmem:[#allocation10 + $0xe0] sm:$0xff]
    %v1390 = vld [vmem:[#allocation10 + $0xe8] sm:$0xff]
    %v1391 = vld [vmem:[#allocation10 + $0xf0] sm:$0xff]
    %v1392 = vld [vmem:[#allocation10 + $0xf8] sm:$0xff]
    %v1393 = vld [vmem:[#allocation10 + $0x100] sm:$0xff]
    %v1394 = vld [vmem:[#allocation10 + $0x108] sm:$0xff]
    %v1395 = vld [vmem:[#allocation10 + $0x160] sm:$0xff]
    %v1396 = vld [vmem:[#allocation10 + $0x168] sm:$0xff]
    %v1397 = vld [vmem:[#allocation10 + $0x170] sm:$0xff]
    %v1398 = vld [vmem:[#allocation10 + $0x178] sm:$0xff]
    %v1399 = vld [vmem:[#allocation10 + $0x180] sm:$0xff]
    %v1400 = vld [vmem:[#allocation10 + $0x188] sm:$0xff]
    %v1401 = vld [vmem:[#allocation10 + $0x190] sm:$0xff]
    %v1402 = vld [vmem:[#allocation10 + $0x198] sm:$0xff]
    %v1403 = vld [vmem:[#allocation10 + $0x1f0] sm:$0xff]
    %v1404 = vld [vmem:[#allocation10 + $0x1f8] sm:$0xff]
    %v1405 = vld [vmem:[#allocation10 + $0x200] sm:$0xff]
    %v1406 = vld [vmem:[#allocation10 + $0x208] sm:$0xff]
    %v1407 = vld [vmem:[#allocation10 + $0x210] sm:$0xff]
    %v1408 = vld [vmem:[#allocation10 + $0x218] sm:$0xff]
    %v1409 = vld [vmem:[#allocation10 + $0x220] sm:$0xff]
    %v1410 = vld [vmem:[#allocation10 + $0x228] sm:$0xff]
    %v1411 = vld [vmem:[%s7 + $0x8] sm:$0xff]
    %v1413 = vlaneseq
    %v1414 = vshrl.u32 %v1413, 7
    %v1415 = vsub.s32 0, %v1414
    %v1416 = vrot.slane %v1411, %v1415
    %v1417 = vlaneseq
    %v1418 = vshrl.u32 %v1417, 7
    %v1419 = vsub.s32 1, %v1418
    %v1420 = vrot.slane %v1411, %v1419
    %v1421 = vlaneseq
    %v1422 = vshrl.u32 %v1421, 7
    %v1423 = vsub.s32 2, %v1422
    %v1424 = vrot.slane %v1411, %v1423
    %v1425 = vlaneseq
    %v1426 = vshrl.u32 %v1425, 7
    %v1427 = vsub.s32 3, %v1426
    %v1428 = vrot.slane %v1411, %v1427
    %v1429 = vlaneseq
    %v1430 = vshrl.u32 %v1429, 7
    %v1431 = vsub.s32 4, %v1430
    %v1432 = vrot.slane %v1411, %v1431
    %v1433 = vlaneseq
    %v1434 = vshrl.u32 %v1433, 7
    %v1435 = vsub.s32 5, %v1434
    %v1436 = vrot.slane %v1411, %v1435
    %v1437 = vlaneseq
    %v1438 = vshrl.u32 %v1437, 7
    %v1439 = vsub.s32 6, %v1438
    %v1440 = vrot.slane %v1411, %v1439
    %v1441 = vlaneseq
    %v1442 = vshrl.u32 %v1441, 7
    %v1443 = vsub.s32 7, %v1442
    %v1444 = vrot.slane %v1411, %v1443
    %1453 = vmatprep.subr.mxu0 %v1380
    %1454 = vmatpush1.msra.mxu0 %v1379
    %1455 = vmatprep.subr.mxu0 %v1388
    %1456 = vmatpush1.msra.mxu0 %v1387
    %1457 = vmatprep.subr.mxu0 %v1396
    %1458 = vmatpush1.msra.mxu0 %v1395
    %1459 = vmatprep.subr.mxu0 %v1404
    %1460 = vmatpush1.msra.mxu0 %v1403
    %1461 = vmatprep.subr.mxu0 0.0
    %1462 = vmatpush1.msra.mxu0 0.0
    %1463 = vmatprep.subr.mxu0 0.0
    %1464 = vmatpush1.msra.mxu0 0.0
    %1465 = vmatprep.subr.mxu0 0.0
    %1466 = vmatpush1.msra.mxu0 0.0
    %1467 = vmatprep.subr.mxu0 0.0
    %1468 = vmatpush1.msra.mxu0 0.0
    %1469 = vmatprep.subr.mxu0 0.0
    %1470 = vmatpush1.msra.mxu0 0.0
    %1471 = vmatprep.subr.mxu0 0.0
    %1472 = vmatpush1.msra.mxu0 0.0
    %1473 = vmatprep.subr.mxu0 0.0
    %1474 = vmatpush1.msra.mxu0 0.0
    %1475 = vmatprep.subr.mxu0 0.0
    %1476 = vmatpush1.msra.mxu0 0.0
    %1477 = vmatprep.subr.mxu0 0.0
    %1478 = vmatpush1.msra.mxu0 0.0
    %1479 = vmatprep.subr.mxu0 0.0
    %1480 = vmatpush1.msra.mxu0 0.0
    %1481 = vmatprep.subr.mxu0 0.0
    %1482 = vmatpush1.msra.mxu0 0.0
    %1483 = vmatprep.subr.mxu0 0.0
    %1484 = vmatpush1.msra.mxu0 0.0
    %1485 = vmatprep.subr.mxu0 0.0
    %1486 = vmatpush1.msra.mxu0 0.0
    %1487 = vmatprep.subr.mxu0 0.0
    %1488 = vmatpush1.msra.mxu0 0.0
    %1489 = vmatprep.subr.mxu0 0.0
    %1490 = vmatpush1.msra.mxu0 0.0
    %1491 = vmatprep.subr.mxu0 0.0
    %1492 = vmatpush1.msra.mxu0 0.0
    %1493 = vmatprep.subr.mxu0 0.0
    %1494 = vmatpush1.msra.mxu0 0.0
    %1495 = vmatprep.subr.mxu0 0.0
    %1496 = vmatpush1.msra.mxu0 0.0
    %1497 = vmatprep.subr.mxu0 0.0
    %1498 = vmatpush1.msra.mxu0 0.0
    %1499 = vmatprep.subr.mxu0 0.0
    %1500 = vmatpush1.msra.mxu0 0.0
    %1501 = vmatprep.subr.mxu0 0.0
    %1502 = vmatpush1.msra.mxu0 0.0
    %1503 = vmatprep.subr.mxu0 0.0
    %1504 = vmatpush1.msra.mxu0 0.0
    %1505 = vmatprep.subr.mxu0 0.0
    %1506 = vmatpush1.msra.mxu0 0.0
    %1507 = vmatprep.subr.mxu0 0.0
    %1508 = vmatpush1.msra.mxu0 0.0
    %1509 = vmatprep.subr.mxu0 0.0
    %1510 = vmatpush1.msra.mxu0 0.0
    %1511 = vmatprep.subr.mxu0 0.0
    %1512 = vmatpush1.msra.mxu0 0.0
    %1513 = vmatprep.subr.mxu0 0.0
    %1514 = vmatpush1.msra.mxu0 0.0
    %1515 = vmatprep.subr.mxu0 0.0
    %1516 = vmatpush1.msra.mxu0 0.0
    %1517 = vmatprep.mubr.f32.mxu0 0.0
    %1518 = vmatmul.mubr.f32.gmra.mrb[0].mxu0 %v345
    %v1519 = vpop.f32.mrb[0].mxu0
    %v1520 = vadd.f32 %v1416, %v1519
    %v1521 = vpop.f32.mrb[0].mxu0
    %v1522 = vadd.f32 %v1420, %v1521
    %1523 = vmatprep.mubr.f32.mxu0 0.0
    %1524 = vmatmul.mubr.f32.gmra.mrb[0].mxu0 %v348
    %v1525 = vpop.f32.mrb[0].mxu0
    %v1526 = vadd.f32 %v1416, %v1525
    %v1527 = vpop.f32.mrb[0].mxu0
    %v1528 = vadd.f32 %v1420, %v1527
    %1529 = vdwg.mxu0
    %1530 = vmatprep.subr.mxu0 %v1382
    %1531 = vmatpush1.msra.mxu0 %v1381
    %1532 = vmatprep.subr.mxu0 %v1390
    %1533 = vmatpush1.msra.mxu0 %v1389
    %1534 = vmatprep.subr.mxu0 %v1398
    %1535 = vmatpush1.msra.mxu0 %v1397
    %1536 = vmatprep.subr.mxu0 %v1406
    %1537 = vmatpush1.msra.mxu0 %v1405
    %1538 = vmatprep.subr.mxu0 0.0
    %1539 = vmatpush1.msra.mxu0 0.0
    %1540 = vmatprep.subr.mxu0 0.0
    %1541 = vmatpush1.msra.mxu0 0.0
    %1542 = vmatprep.subr.mxu0 0.0
    %1543 = vmatpush1.msra.mxu0 0.0
    %1544 = vmatprep.subr.mxu0 0.0
    %1545 = vmatpush1.msra.mxu0 0.0
    %1546 = vmatprep.subr.mxu0 0.0
    %1547 = vmatpush1.msra.mxu0 0.0
    %1548 = vmatprep.subr.mxu0 0.0
    %1549 = vmatpush1.msra.mxu0 0.0
    %1550 = vmatprep.subr.mxu0 0.0
    %1551 = vmatpush1.msra.mxu0 0.0
    %1552 = vmatprep.subr.mxu0 0.0
    %1553 = vmatpush1.msra.mxu0 0.0
    %1554 = vmatprep.subr.mxu0 0.0
    %1555 = vmatpush1.msra.mxu0 0.0
    %1556 = vmatprep.subr.mxu0 0.0
    %1557 = vmatpush1.msra.mxu0 0.0
    %1558 = vmatprep.subr.mxu0 0.0
    %1559 = vmatpush1.msra.mxu0 0.0
    %1560 = vmatprep.subr.mxu0 0.0
    %1561 = vmatpush1.msra.mxu0 0.0
    %1562 = vmatprep.subr.mxu0 0.0
    %1563 = vmatpush1.msra.mxu0 0.0
    %1564 = vmatprep.subr.mxu0 0.0
    %1565 = vmatpush1.msra.mxu0 0.0
    %1566 = vmatprep.subr.mxu0 0.0
    %1567 = vmatpush1.msra.mxu0 0.0
    %1568 = vmatprep.subr.mxu0 0.0
    %1569 = vmatpush1.msra.mxu0 0.0
    %1570 = vmatprep.subr.mxu0 0.0
    %1571 = vmatpush1.msra.mxu0 0.0
    %1572 = vmatprep.subr.mxu0 0.0
    %1573 = vmatpush1.msra.mxu0 0.0
    %1574 = vmatprep.subr.mxu0 0.0
    %1575 = vmatpush1.msra.mxu0 0.0
    %1576 = vmatprep.subr.mxu0 0.0
    %1577 = vmatpush1.msra.mxu0 0.0
    %1578 = vmatprep.subr.mxu0 0.0
    %1579 = vmatpush1.msra.mxu0 0.0
    %1580 = vmatprep.subr.mxu0 0.0
    %1581 = vmatpush1.msra.mxu0 0.0
    %1582 = vmatprep.subr.mxu0 0.0
    %1583 = vmatpush1.msra.mxu0 0.0
    %1584 = vmatprep.subr.mxu0 0.0
    %1585 = vmatpush1.msra.mxu0 0.0
    %1586 = vmatprep.subr.mxu0 0.0
    %1587 = vmatpush1.msra.mxu0 0.0
    %1588 = vmatprep.subr.mxu0 0.0
    %1589 = vmatpush1.msra.mxu0 0.0
    %1590 = vmatprep.subr.mxu0 0.0
    %1591 = vmatpush1.msra.mxu0 0.0
    %1592 = vmatprep.subr.mxu0 0.0
    %1593 = vmatpush1.msra.mxu0 0.0
    %1594 = vmatprep.mubr.f32.mxu0 0.0
    %1595 = vmatmul.mubr.f32.gmra.mrb[0].mxu0 %v345
    %v1596 = vpop.f32.mrb[0].mxu0
    %v1597 = vadd.f32 %v1424, %v1596
    %v1598 = vpop.f32.mrb[0].mxu0
    %v1599 = vadd.f32 %v1428, %v1598
    %1600 = vmatprep.mubr.f32.mxu0 0.0
    %1601 = vmatmul.mubr.f32.gmra.mrb[0].mxu0 %v348
    %v1602 = vpop.f32.mrb[0].mxu0
    %v1603 = vadd.f32 %v1424, %v1602
    %v1604 = vpop.f32.mrb[0].mxu0
    %v1605 = vadd.f32 %v1428, %v1604
    %1606 = vdwg.mxu0
    %1607 = vmatprep.subr.mxu0 %v1384
    %1608 = vmatpush1.msra.mxu0 %v1383
    %1609 = vmatprep.subr.mxu0 %v1392
    %1610 = vmatpush1.msra.mxu0 %v1391
    %1611 = vmatprep.subr.mxu0 %v1400
    %1612 = vmatpush1.msra.mxu0 %v1399
    %1613 = vmatprep.subr.mxu0 %v1408
    %1614 = vmatpush1.msra.mxu0 %v1407
    %1615 = vmatprep.subr.mxu0 0.0
    %1616 = vmatpush1.msra.mxu0 0.0
    %1617 = vmatprep.subr.mxu0 0.0
    %1618 = vmatpush1.msra.mxu0 0.0
    %1619 = vmatprep.subr.mxu0 0.0
    %1620 = vmatpush1.msra.mxu0 0.0
    %1621 = vmatprep.subr.mxu0 0.0
    %1622 = vmatpush1.msra.mxu0 0.0
    %1623 = vmatprep.subr.mxu0 0.0
    %1624 = vmatpush1.msra.mxu0 0.0
    %1625 = vmatprep.subr.mxu0 0.0
    %1626 = vmatpush1.msra.mxu0 0.0
    %1627 = vmatprep.subr.mxu0 0.0
    %1628 = vmatpush1.msra.mxu0 0.0
    %1629 = vmatprep.subr.mxu0 0.0
    %1630 = vmatpush1.msra.mxu0 0.0
    %1631 = vmatprep.subr.mxu0 0.0
    %1632 = vmatpush1.msra.mxu0 0.0
    %1633 = vmatprep.subr.mxu0 0.0
    %1634 = vmatpush1.msra.mxu0 0.0
    %1635 = vmatprep.subr.mxu0 0.0
    %1636 = vmatpush1.msra.mxu0 0.0
    %1637 = vmatprep.subr.mxu0 0.0
    %1638 = vmatpush1.msra.mxu0 0.0
    %1639 = vmatprep.subr.mxu0 0.0
    %1640 = vmatpush1.msra.mxu0 0.0
    %1641 = vmatprep.subr.mxu0 0.0
    %1642 = vmatpush1.msra.mxu0 0.0
    %1643 = vmatprep.subr.mxu0 0.0
    %1644 = vmatpush1.msra.mxu0 0.0
    %1645 = vmatprep.subr.mxu0 0.0
    %1646 = vmatpush1.msra.mxu0 0.0
    %1647 = vmatprep.subr.mxu0 0.0
    %1648 = vmatpush1.msra.mxu0 0.0
    %1649 = vmatprep.subr.mxu0 0.0
    %1650 = vmatpush1.msra.mxu0 0.0
    %1651 = vmatprep.subr.mxu0 0.0
    %1652 = vmatpush1.msra.mxu0 0.0
    %1653 = vmatprep.subr.mxu0 0.0
    %1654 = vmatpush1.msra.mxu0 0.0
    %1655 = vmatprep.subr.mxu0 0.0
    %1656 = vmatpush1.msra.mxu0 0.0
    %1657 = vmatprep.subr.mxu0 0.0
    %1658 = vmatpush1.msra.mxu0 0.0
    %1659 = vmatprep.subr.mxu0 0.0
    %1660 = vmatpush1.msra.mxu0 0.0
    %1661 = vmatprep.subr.mxu0 0.0
    %1662 = vmatpush1.msra.mxu0 0.0
    %1663 = vmatprep.subr.mxu0 0.0
    %1664 = vmatpush1.msra.mxu0 0.0
    %1665 = vmatprep.subr.mxu0 0.0
    %1666 = vmatpush1.msra.mxu0 0.0
    %1667 = vmatprep.subr.mxu0 0.0
    %1668 = vmatpush1.msra.mxu0 0.0
    %1669 = vmatprep.subr.mxu0 0.0
    %1670 = vmatpush1.msra.mxu0 0.0
    %1671 = vmatprep.mubr.f32.mxu0 0.0
    %1672 = vmatmul.mubr.f32.gmra.mrb[0].mxu0 %v345
    %v1673 = vpop.f32.mrb[0].mxu0
    %v1674 = vadd.f32 %v1432, %v1673
    %v1675 = vpop.f32.mrb[0].mxu0
    %v1676 = vadd.f32 %v1436, %v1675
    %1677 = vmatprep.mubr.f32.mxu0 0.0
    %1678 = vmatmul.mubr.f32.gmra.mrb[0].mxu0 %v348
    %v1679 = vpop.f32.mrb[0].mxu0
    %v1680 = vadd.f32 %v1432, %v1679
    %v1681 = vpop.f32.mrb[0].mxu0
    %v1682 = vadd.f32 %v1436, %v1681
    %1683 = vdwg.mxu0
    %1684 = vmatprep.subr.mxu0 %v1386
    %1685 = vmatpush1.msra.mxu0 %v1385
    %1686 = vmatprep.subr.mxu0 %v1394
    %1687 = vmatpush1.msra.mxu0 %v1393
    %1688 = vmatprep.subr.mxu0 %v1402
    %1689 = vmatpush1.msra.mxu0 %v1401
    %1690 = vmatprep.subr.mxu0 %v1410
    %1691 = vmatpush1.msra.mxu0 %v1409
    %1692 = vmatprep.subr.mxu0 0.0
    %1693 = vmatpush1.msra.mxu0 0.0
    %1694 = vmatprep.subr.mxu0 0.0
    %1695 = vmatpush1.msra.mxu0 0.0
    %1696 = vmatprep.subr.mxu0 0.0
    %1697 = vmatpush1.msra.mxu0 0.0
    %1698 = vmatprep.subr.mxu0 0.0
    %1699 = vmatpush1.msra.mxu0 0.0
    %1700 = vmatprep.subr.mxu0 0.0
    %1701 = vmatpush1.msra.mxu0 0.0
    %1702 = vmatprep.subr.mxu0 0.0
    %1703 = vmatpush1.msra.mxu0 0.0
    %1704 = vmatprep.subr.mxu0 0.0
    %1705 = vmatpush1.msra.mxu0 0.0
    %1706 = vmatprep.subr.mxu0 0.0
    %1707 = vmatpush1.msra.mxu0 0.0
    %1708 = vmatprep.subr.mxu0 0.0
    %1709 = vmatpush1.msra.mxu0 0.0
    %1710 = vmatprep.subr.mxu0 0.0
    %1711 = vmatpush1.msra.mxu0 0.0
    %1712 = vmatprep.subr.mxu0 0.0
    %1713 = vmatpush1.msra.mxu0 0.0
    %1714 = vmatprep.subr.mxu0 0.0
    %1715 = vmatpush1.msra.mxu0 0.0
    %1716 = vmatprep.subr.mxu0 0.0
    %1717 = vmatpush1.msra.mxu0 0.0
    %1718 = vmatprep.subr.mxu0 0.0
    %1719 = vmatpush1.msra.mxu0 0.0
    %1720 = vmatprep.subr.mxu0 0.0
    %1721 = vmatpush1.msra.mxu0 0.0
    %1722 = vmatprep.subr.mxu0 0.0
    %1723 = vmatpush1.msra.mxu0 0.0
    %1724 = vmatprep.subr.mxu0 0.0
    %1725 = vmatpush1.msra.mxu0 0.0
    %1726 = vmatprep.subr.mxu0 0.0
    %1727 = vmatpush1.msra.mxu0 0.0
    %1728 = vmatprep.subr.mxu0 0.0
    %1729 = vmatpush1.msra.mxu0 0.0
    %1730 = vmatprep.subr.mxu0 0.0
    %1731 = vmatpush1.msra.mxu0 0.0
    %1732 = vmatprep.subr.mxu0 0.0
    %1733 = vmatpush1.msra.mxu0 0.0
    %1734 = vmatprep.subr.mxu0 0.0
    %1735 = vmatpush1.msra.mxu0 0.0
    %1736 = vmatprep.subr.mxu0 0.0
    %1737 = vmatpush1.msra.mxu0 0.0
    %1738 = vmatprep.subr.mxu0 0.0
    %1739 = vmatpush1.msra.mxu0 0.0
    %1740 = vmatprep.subr.mxu0 0.0
    %1741 = vmatpush1.msra.mxu0 0.0
    %1742 = vmatprep.subr.mxu0 0.0
    %1743 = vmatpush1.msra.mxu0 0.0
    %1744 = vmatprep.subr.mxu0 0.0
    %1745 = vmatpush1.msra.mxu0 0.0
    %1746 = vmatprep.subr.mxu0 0.0
    %1747 = vmatpush1.msra.mxu0 0.0
    %1748 = vmatprep.mubr.f32.mxu0 0.0
    %1749 = vmatmul.mubr.f32.gmra.mrb[0].mxu0 %v345
    %v1750 = vpop.f32.mrb[0].mxu0
    %v1751 = vadd.f32 %v1440, %v1750
    %v1752 = vpop.f32.mrb[0].mxu0
    %v1753 = vadd.f32 %v1444, %v1752
    %1754 = vmatprep.mubr.f32.mxu0 0.0
    %1755 = vmatmul.mubr.f32.gmra.mrb[0].mxu0 %v348
    %v1756 = vpop.f32.mrb[0].mxu0
    %v1757 = vadd.f32 %v1440, %v1756
    %v1758 = vpop.f32.mrb[0].mxu0
    %v1759 = vadd.f32 %v1444, %v1758
    %1760 = vdwg.mxu0
    %v1761 = vtanh.pop %v1520
    %v1762 = vtanh.pop %v1522
    %v1763 = vtanh.pop %v1597
    %v1764 = vtanh.pop %v1599
    %v1765 = vtanh.pop %v1674
    %v1766 = vtanh.pop %v1676
    %v1767 = vtanh.pop %v1751
    %v1768 = vtanh.pop %v1753
    %v1769 = vtanh.pop %v1526
    %v1770 = vtanh.pop %v1528
    %v1771 = vtanh.pop %v1603
    %v1772 = vtanh.pop %v1605
    %v1773 = vtanh.pop %v1680
    %v1774 = vtanh.pop %v1682
    %v1775 = vtanh.pop %v1757
    %v1776 = vtanh.pop %v1759
    %v1777 = vmul.f32 %v1761, 5.0
    %v1778 = vmul.f32 %v1762, 5.0
    %v1779 = vmul.f32 %v1763, 5.0
    %v1780 = vmul.f32 %v1764, 5.0
    %v1781 = vmul.f32 %v1765, 5.0
    %v1782 = vmul.f32 %v1766, 5.0
    %v1783 = vmul.f32 %v1767, 5.0
    %v1784 = vmul.f32 %v1768, 5.0
    %v1785 = vmul.f32 %v1769, 5.0
    %v1786 = vmul.f32 %v1770, 5.0
    %v1787 = vmul.f32 %v1771, 5.0
    %v1788 = vmul.f32 %v1772, 5.0
    %v1789 = vmul.f32 %v1773, 5.0
    %v1790 = vmul.f32 %v1774, 5.0
    %v1791 = vmul.f32 %v1775, 5.0
    %v1792 = vmul.f32 %v1776, 5.0
    %v1793 = vld [vmem:[#allocation13] sm:$0xff]
    %v1794 = vld [vmem:[#allocation13 + $0x8] sm:$0xff]
    %v1795 = vld [vmem:[#allocation13 + $0x10] sm:$0xff]
    %v1796 = vld [vmem:[#allocation13 + $0x18] sm:$0xff]
    %v1797 = vld [vmem:[#allocation13 + $0x20] sm:$0xff]
    %v1798 = vld [vmem:[#allocation13 + $0x28] sm:$0xff]
    %v1799 = vld [vmem:[#allocation13 + $0x30] sm:$0xff]
    %v1800 = vld [vmem:[#allocation13 + $0x38] sm:$0xff]
    %v1801 = vld [vmem:[#allocation13 + $0x40] sm:$0xff]
    %v1802 = vld [vmem:[#allocation13 + $0x48] sm:$0xff]
    %v1803 = vld [vmem:[#allocation13 + $0x50] sm:$0xff]
    %v1804 = vld [vmem:[#allocation13 + $0x58] sm:$0xff]
    %v1805 = vld [vmem:[#allocation13 + $0x60] sm:$0xff]
    %v1806 = vld [vmem:[#allocation13 + $0x68] sm:$0xff]
    %v1807 = vld [vmem:[#allocation13 + $0x70] sm:$0xff]
    %v1808 = vld [vmem:[#allocation13 + $0x78] sm:$0xff]
    %v1809 = vld [vmem:[#allocation13 + $0x80] sm:$0xff]
    %v1810 = vld [vmem:[#allocation13 + $0x88] sm:$0xff]
    %v1811 = vld [vmem:[#allocation13 + $0x90] sm:$0xff]
    %v1812 = vld [vmem:[#allocation13 + $0x98] sm:$0xff]
    %v1813 = vld [vmem:[#allocation13 + $0xa0] sm:$0xff]
    %v1814 = vld [vmem:[#allocation13 + $0xa8] sm:$0xff]
    %v1815 = vld [vmem:[#allocation13 + $0xb0] sm:$0xff]
    %v1816 = vld [vmem:[#allocation13 + $0xb8] sm:$0xff]
    %v1817 = vld [vmem:[#allocation13 + $0xc0] sm:$0xff]
    %v1818 = vld [vmem:[#allocation13 + $0xc8] sm:$0xff]
    %v1819 = vld [vmem:[#allocation13 + $0xd0] sm:$0xff]
    %v1820 = vld [vmem:[#allocation13 + $0xd8] sm:$0xff]
    %v1821 = vld [vmem:[#allocation13 + $0xe0] sm:$0xff]
    %v1822 = vld [vmem:[#allocation13 + $0xe8] sm:$0xff]
    %v1823 = vld [vmem:[#allocation13 + $0xf0] sm:$0xff]
    %v1824 = vld [vmem:[#allocation13 + $0xf8] sm:$0xff]
    %v1825 = vld [vmem:[#allocation13 + $0x100] sm:$0xff]
    %v1826 = vld [vmem:[#allocation13 + $0x108] sm:$0xff]
    %v1827 = vld [vmem:[#allocation13 + $0x110] sm:$0xff]
    %v1828 = vld [vmem:[#allocation13 + $0x118] sm:$0xff]
    %v1829 = vld [vmem:[#allocation13 + $0x120] sm:$0xff]
    %v1830 = vld [vmem:[#allocation13 + $0x128] sm:$0xff]
    %v1831 = vld [vmem:[#allocation13 + $0x130] sm:$0xff]
    %v1832 = vld [vmem:[#allocation13 + $0x138] sm:$0xff]
    %v1833 = vld [vmem:[#allocation13 + $0x140] sm:$0xff]
    %v1834 = vld [vmem:[#allocation13 + $0x148] sm:$0xff]
    %v1835 = vld [vmem:[#allocation13 + $0x150] sm:$0xff]
    %v1836 = vld [vmem:[#allocation13 + $0x158] sm:$0xff]
    %v1837 = vld [vmem:[#allocation13 + $0x160] sm:$0xff]
    %v1838 = vld [vmem:[#allocation13 + $0x168] sm:$0xff]
    %v1839 = vld [vmem:[#allocation13 + $0x170] sm:$0xff]
    %v1840 = vld [vmem:[#allocation13 + $0x178] sm:$0xff]
    %v1841 = vld [vmem:[#allocation13 + $0x180] sm:$0xff]
    %v1842 = vld [vmem:[#allocation13 + $0x188] sm:$0xff]
    %v1843 = vld [vmem:[#allocation13 + $0x190] sm:$0xff]
    %v1844 = vld [vmem:[#allocation13 + $0x198] sm:$0xff]
    %v1845 = vld [vmem:[#allocation13 + $0x1a0] sm:$0xff]
    %v1846 = vld [vmem:[#allocation13 + $0x1a8] sm:$0xff]
    %v1847 = vld [vmem:[#allocation13 + $0x1b0] sm:$0xff]
    %v1848 = vld [vmem:[#allocation13 + $0x1b8] sm:$0xff]
    %v1849 = vld [vmem:[#allocation13 + $0x1c0] sm:$0xff]
    %v1850 = vld [vmem:[#allocation13 + $0x1c8] sm:$0xff]
    %v1851 = vld [vmem:[#allocation13 + $0x1d0] sm:$0xff]
    %v1852 = vld [vmem:[#allocation13 + $0x1d8] sm:$0xff]
    %v1853 = vld [vmem:[#allocation13 + $0x1e0] sm:$0xff]
    %v1854 = vld [vmem:[#allocation13 + $0x1e8] sm:$0xff]
    %v1855 = vld [vmem:[#allocation13 + $0x1f0] sm:$0xff]
    %v1856 = vld [vmem:[#allocation13 + $0x1f8] sm:$0xff]
    %v1857 = vld [vmem:[#allocation13 + $0x200] sm:$0xff]
    %v1858 = vld [vmem:[#allocation13 + $0x208] sm:$0xff]
    %v1859 = vld [vmem:[#allocation13 + $0x210] sm:$0xff]
    %v1860 = vld [vmem:[#allocation13 + $0x218] sm:$0xff]
    %v1861 = vld [vmem:[#allocation13 + $0x220] sm:$0xff]
    %v1862 = vld [vmem:[#allocation13 + $0x228] sm:$0xff]
    %v1863 = vld [vmem:[#allocation13 + $0x230] sm:$0xff]
    %v1864 = vld [vmem:[#allocation13 + $0x238] sm:$0xff]
    %v1865 = vld [vmem:[#allocation13 + $0x240] sm:$0xff]
    %v1866 = vld [vmem:[#allocation13 + $0x248] sm:$0xff]
    %v1867 = vld [vmem:[#allocation13 + $0x250] sm:$0xff]
    %v1868 = vld [vmem:[#allocation13 + $0x258] sm:$0xff]
    %v1869 = vld [vmem:[#allocation13 + $0x260] sm:$0xff]
    %v1870 = vld [vmem:[#allocation13 + $0x268] sm:$0xff]
    %v1871 = vld [vmem:[#allocation13 + $0x270] sm:$0xff]
    %v1872 = vld [vmem:[#allocation13 + $0x278] sm:$0xff]
    %v1873 = vld [vmem:[#allocation13 + $0x280] sm:$0xff]
    %v1874 = vld [vmem:[#allocation13 + $0x288] sm:$0xff]
    %v1875 = vld [vmem:[#allocation13 + $0x290] sm:$0xff]
    %v1876 = vld [vmem:[#allocation13 + $0x298] sm:$0xff]
    %v1877 = vld [vmem:[#allocation13 + $0x2a0] sm:$0xff]
    %v1878 = vld [vmem:[#allocation13 + $0x2a8] sm:$0xff]
    %v1879 = vld [vmem:[#allocation13 + $0x2b0] sm:$0xff]
    %v1880 = vld [vmem:[#allocation13 + $0x2b8] sm:$0xff]
    %v1881 = vld [vmem:[#allocation13 + $0x2c0] sm:$0xff]
    %v1882 = vld [vmem:[#allocation13 + $0x2c8] sm:$0xff]
    %v1883 = vld [vmem:[#allocation13 + $0x2d0] sm:$0xff]
    %v1884 = vld [vmem:[#allocation13 + $0x2d8] sm:$0xff]
    %v1885 = vld [vmem:[#allocation13 + $0x2e0] sm:$0xff]
    %v1886 = vld [vmem:[#allocation13 + $0x2e8] sm:$0xff]
    %v1887 = vld [vmem:[#allocation13 + $0x2f0] sm:$0xff]
    %v1888 = vld [vmem:[#allocation13 + $0x2f8] sm:$0xff]
    %v1889 = vld [vmem:[#allocation13 + $0x300] sm:$0xff]
    %v1890 = vld [vmem:[#allocation13 + $0x308] sm:$0xff]
    %v1891 = vld [vmem:[#allocation13 + $0x310] sm:$0xff]
    %v1892 = vld [vmem:[#allocation13 + $0x318] sm:$0xff]
    %v1893 = vld [vmem:[#allocation13 + $0x320] sm:$0xff]
    %v1894 = vld [vmem:[#allocation13 + $0x328] sm:$0xff]
    %v1895 = vld [vmem:[#allocation13 + $0x330] sm:$0xff]
    %v1896 = vld [vmem:[#allocation13 + $0x338] sm:$0xff]
    %v1897 = vld [vmem:[#allocation13 + $0x340] sm:$0xff]
    %v1898 = vld [vmem:[#allocation13 + $0x348] sm:$0xff]
    %v1899 = vld [vmem:[#allocation13 + $0x350] sm:$0xff]
    %v1900 = vld [vmem:[#allocation13 + $0x358] sm:$0xff]
    %v1901 = vld [vmem:[#allocation13 + $0x360] sm:$0xff]
    %v1902 = vld [vmem:[#allocation13 + $0x368] sm:$0xff]
    %v1903 = vld [vmem:[#allocation13 + $0x370] sm:$0xff]
    %v1904 = vld [vmem:[#allocation13 + $0x378] sm:$0xff]
    %v1905 = vld [vmem:[#allocation13 + $0x380] sm:$0xff]
    %v1906 = vld [vmem:[#allocation13 + $0x388] sm:$0xff]
    %v1907 = vld [vmem:[#allocation13 + $0x390] sm:$0xff]
    %v1908 = vld [vmem:[#allocation13 + $0x398] sm:$0xff]
    %v1909 = vld [vmem:[#allocation13 + $0x3a0] sm:$0xff]
    %v1910 = vld [vmem:[#allocation13 + $0x3a8] sm:$0xff]
    %v1911 = vld [vmem:[#allocation13 + $0x3b0] sm:$0xff]
    %v1912 = vld [vmem:[#allocation13 + $0x3b8] sm:$0xff]
    %v1913 = vld [vmem:[#allocation13 + $0x3c0] sm:$0xff]
    %v1914 = vld [vmem:[#allocation13 + $0x3c8] sm:$0xff]
    %v1915 = vld [vmem:[#allocation13 + $0x3d0] sm:$0xff]
    %v1916 = vld [vmem:[#allocation13 + $0x3d8] sm:$0xff]
    %v1917 = vld [vmem:[#allocation13 + $0x3e0] sm:$0xff]
    %v1918 = vld [vmem:[#allocation13 + $0x3e8] sm:$0xff]
    %v1919 = vld [vmem:[#allocation13 + $0x3f0] sm:$0xff]
    %v1920 = vld [vmem:[#allocation13 + $0x3f8] sm:$0xff]
    %1921 = vmatprep.subr.mxu0 %v1794
    %1922 = vmatpush1.msra.mxu0 %v1793
    %1923 = vmatprep.subr.mxu0 %v1802
    %1924 = vmatpush1.msra.mxu0 %v1801
    %1925 = vmatprep.subr.mxu0 %v1810
    %1926 = vmatpush1.msra.mxu0 %v1809
    %1927 = vmatprep.subr.mxu0 %v1818
    %1928 = vmatpush1.msra.mxu0 %v1817
    %1929 = vmatprep.subr.mxu0 %v1826
    %1930 = vmatpush1.msra.mxu0 %v1825
    %1931 = vmatprep.subr.mxu0 %v1834
    %1932 = vmatpush1.msra.mxu0 %v1833
    %1933 = vmatprep.subr.mxu0 %v1842
    %1934 = vmatpush1.msra.mxu0 %v1841
    %1935 = vmatprep.subr.mxu0 %v1850
    %1936 = vmatpush1.msra.mxu0 %v1849
    %1937 = vmatprep.subr.mxu0 %v1858
    %1938 = vmatpush1.msra.mxu0 %v1857
    %1939 = vmatprep.subr.mxu0 %v1866
    %1940 = vmatpush1.msra.mxu0 %v1865
    %1941 = vmatprep.subr.mxu0 %v1874
    %1942 = vmatpush1.msra.mxu0 %v1873
    %1943 = vmatprep.subr.mxu0 %v1882
    %1944 = vmatpush1.msra.mxu0 %v1881
    %1945 = vmatprep.subr.mxu0 %v1890
    %1946 = vmatpush1.msra.mxu0 %v1889
    %1947 = vmatprep.subr.mxu0 %v1898
    %1948 = vmatpush1.msra.mxu0 %v1897
    %1949 = vmatprep.subr.mxu0 %v1906
    %1950 = vmatpush1.msra.mxu0 %v1905
    %1951 = vmatprep.subr.mxu0 %v1914
    %1952 = vmatpush1.msra.mxu0 %v1913
    %1953 = vmatprep.subr.mxu0 0.0
    %1954 = vmatpush1.msra.mxu0 0.0
    %1955 = vmatprep.subr.mxu0 0.0
    %1956 = vmatpush1.msra.mxu0 0.0
    %1957 = vmatprep.subr.mxu0 0.0
    %1958 = vmatpush1.msra.mxu0 0.0
    %1959 = vmatprep.subr.mxu0 0.0
    %1960 = vmatpush1.msra.mxu0 0.0
    %1961 = vmatprep.subr.mxu0 0.0
    %1962 = vmatpush1.msra.mxu0 0.0
    %1963 = vmatprep.subr.mxu0 0.0
    %1964 = vmatpush1.msra.mxu0 0.0
    %1965 = vmatprep.subr.mxu0 0.0
    %1966 = vmatpush1.msra.mxu0 0.0
    %1967 = vmatprep.subr.mxu0 0.0
    %1968 = vmatpush1.msra.mxu0 0.0
    %1969 = vmatprep.subr.mxu0 0.0
    %1970 = vmatpush1.msra.mxu0 0.0
    %1971 = vmatprep.subr.mxu0 0.0
    %1972 = vmatpush1.msra.mxu0 0.0
    %1973 = vmatprep.subr.mxu0 0.0
    %1974 = vmatpush1.msra.mxu0 0.0
    %1975 = vmatprep.subr.mxu0 0.0
    %1976 = vmatpush1.msra.mxu0 0.0
    %1977 = vmatprep.subr.mxu0 0.0
    %1978 = vmatpush1.msra.mxu0 0.0
    %1979 = vmatprep.subr.mxu0 0.0
    %1980 = vmatpush1.msra.mxu0 0.0
    %1981 = vmatprep.subr.mxu0 0.0
    %1982 = vmatpush1.msra.mxu0 0.0
    %1983 = vmatprep.subr.mxu0 0.0
    %1984 = vmatpush1.msra.mxu0 0.0
    %1985 = vmatprep.mubr.f32.mxu0 0.0
    %1986 = vmatmul.mubr.f32.gmra.mrb[0].mxu0 %v1377
    %v1987 = vpop.f32.mrb[0].mxu0
    %v1988 = vadd.f32 0.0, %v1987
    %v1989 = vpop.f32.mrb[0].mxu0
    %v1990 = vadd.f32 0.0, %v1989
    %1991 = vmatprep.mubr.f32.mxu0 0.0
    %1992 = vmatmul.mubr.f32.gmra.mrb[0].mxu0 %v1378
    %v1993 = vpop.f32.mrb[0].mxu0
    %v1994 = vadd.f32 0.0, %v1993
    %v1995 = vpop.f32.mrb[0].mxu0
    %v1996 = vadd.f32 0.0, %v1995
    %1997 = vdwg.mxu0
    %1998 = vmatprep.subr.mxu0 %v1796
    %1999 = vmatpush1.msra.mxu0 %v1795
    %2000 = vmatprep.subr.mxu0 %v1804
    %2001 = vmatpush1.msra.mxu0 %v1803
    %2002 = vmatprep.subr.mxu0 %v1812
    %2003 = vmatpush1.msra.mxu0 %v1811
    %2004 = vmatprep.subr.mxu0 %v1820
    %2005 = vmatpush1.msra.mxu0 %v1819
    %2006 = vmatprep.subr.mxu0 %v1828
    %2007 = vmatpush1.msra.mxu0 %v1827
    %2008 = vmatprep.subr.mxu0 %v1836
    %2009 = vmatpush1.msra.mxu0 %v1835
    %2010 = vmatprep.subr.mxu0 %v1844
    %2011 = vmatpush1.msra.mxu0 %v1843
    %2012 = vmatprep.subr.mxu0 %v1852
    %2013 = vmatpush1.msra.mxu0 %v1851
    %2014 = vmatprep.subr.mxu0 %v1860
    %2015 = vmatpush1.msra.mxu0 %v1859
    %2016 = vmatprep.subr.mxu0 %v1868
    %2017 = vmatpush1.msra.mxu0 %v1867
    %2018 = vmatprep.subr.mxu0 %v1876
    %2019 = vmatpush1.msra.mxu0 %v1875
    %2020 = vmatprep.subr.mxu0 %v1884
    %2021 = vmatpush1.msra.mxu0 %v1883
    %2022 = vmatprep.subr.mxu0 %v1892
    %2023 = vmatpush1.msra.mxu0 %v1891
    %2024 = vmatprep.subr.mxu0 %v1900
    %2025 = vmatpush1.msra.mxu0 %v1899
    %2026 = vmatprep.subr.mxu0 %v1908
    %2027 = vmatpush1.msra.mxu0 %v1907
    %2028 = vmatprep.subr.mxu0 %v1916
    %2029 = vmatpush1.msra.mxu0 %v1915
    %2030 = vmatprep.subr.mxu0 0.0
    %2031 = vmatpush1.msra.mxu0 0.0
    %2032 = vmatprep.subr.mxu0 0.0
    %2033 = vmatpush1.msra.mxu0 0.0
    %2034 = vmatprep.subr.mxu0 0.0
    %2035 = vmatpush1.msra.mxu0 0.0
    %2036 = vmatprep.subr.mxu0 0.0
    %2037 = vmatpush1.msra.mxu0 0.0
    %2038 = vmatprep.subr.mxu0 0.0
    %2039 = vmatpush1.msra.mxu0 0.0
    %2040 = vmatprep.subr.mxu0 0.0
    %2041 = vmatpush1.msra.mxu0 0.0
    %2042 = vmatprep.subr.mxu0 0.0
    %2043 = vmatpush1.msra.mxu0 0.0
    %2044 = vmatprep.subr.mxu0 0.0
    %2045 = vmatpush1.msra.mxu0 0.0
    %2046 = vmatprep.subr.mxu0 0.0
    %2047 = vmatpush1.msra.mxu0 0.0
    %2048 = vmatprep.subr.mxu0 0.0
    %2049 = vmatpush1.msra.mxu0 0.0
    %2050 = vmatprep.subr.mxu0 0.0
    %2051 = vmatpush1.msra.mxu0 0.0
    %2052 = vmatprep.subr.mxu0 0.0
    %2053 = vmatpush1.msra.mxu0 0.0
    %2054 = vmatprep.subr.mxu0 0.0
    %2055 = vmatpush1.msra.mxu0 0.0
    %2056 = vmatprep.subr.mxu0 0.0
    %2057 = vmatpush1.msra.mxu0 0.0
    %2058 = vmatprep.subr.mxu0 0.0
    %2059 = vmatpush1.msra.mxu0 0.0
    %2060 = vmatprep.subr.mxu0 0.0
    %2061 = vmatpush1.msra.mxu0 0.0
    %2062 = vmatprep.mubr.f32.mxu0 0.0
    %2063 = vmatmul.mubr.f32.gmra.mrb[0].mxu0 %v1377
    %v2064 = vpop.f32.mrb[0].mxu0
    %v2065 = vadd.f32 0.0, %v2064
    %v2066 = vpop.f32.mrb[0].mxu0
    %v2067 = vadd.f32 0.0, %v2066
    %2068 = vmatprep.mubr.f32.mxu0 0.0
    %2069 = vmatmul.mubr.f32.gmra.mrb[0].mxu0 %v1378
    %v2070 = vpop.f32.mrb[0].mxu0
    %v2071 = vadd.f32 0.0, %v2070
    %v2072 = vpop.f32.mrb[0].mxu0
    %v2073 = vadd.f32 0.0, %v2072
    %2074 = vdwg.mxu0
    %2075 = vmatprep.subr.mxu0 %v1798
    %2076 = vmatpush1.msra.mxu0 %v1797
    %2077 = vmatprep.subr.mxu0 %v1806
    %2078 = vmatpush1.msra.mxu0 %v1805
    %2079 = vmatprep.subr.mxu0 %v1814
    %2080 = vmatpush1.msra.mxu0 %v1813
    %2081 = vmatprep.subr.mxu0 %v1822
    %2082 = vmatpush1.msra.mxu0 %v1821
    %2083 = vmatprep.subr.mxu0 %v1830
    %2084 = vmatpush1.msra.mxu0 %v1829
    %2085 = vmatprep.subr.mxu0 %v1838
    %2086 = vmatpush1.msra.mxu0 %v1837
    %2087 = vmatprep.subr.mxu0 %v1846
    %2088 = vmatpush1.msra.mxu0 %v1845
    %2089 = vmatprep.subr.mxu0 %v1854
    %2090 = vmatpush1.msra.mxu0 %v1853
    %2091 = vmatprep.subr.mxu0 %v1862
    %2092 = vmatpush1.msra.mxu0 %v1861
    %2093 = vmatprep.subr.mxu0 %v1870
    %2094 = vmatpush1.msra.mxu0 %v1869
    %2095 = vmatprep.subr.mxu0 %v1878
    %2096 = vmatpush1.msra.mxu0 %v1877
    %2097 = vmatprep.subr.mxu0 %v1886
    %2098 = vmatpush1.msra.mxu0 %v1885
    %2099 = vmatprep.subr.mxu0 %v1894
    %2100 = vmatpush1.msra.mxu0 %v1893
    %2101 = vmatprep.subr.mxu0 %v1902
    %2102 = vmatpush1.msra.mxu0 %v1901
    %2103 = vmatprep.subr.mxu0 %v1910
    %2104 = vmatpush1.msra.mxu0 %v1909
    %2105 = vmatprep.subr.mxu0 %v1918
    %2106 = vmatpush1.msra.mxu0 %v1917
    %2107 = vmatprep.subr.mxu0 0.0
    %2108 = vmatpush1.msra.mxu0 0.0
    %2109 = vmatprep.subr.mxu0 0.0
    %2110 = vmatpush1.msra.mxu0 0.0
    %2111 = vmatprep.subr.mxu0 0.0
    %2112 = vmatpush1.msra.mxu0 0.0
    %2113 = vmatprep.subr.mxu0 0.0
    %2114 = vmatpush1.msra.mxu0 0.0
    %2115 = vmatprep.subr.mxu0 0.0
    %2116 = vmatpush1.msra.mxu0 0.0
    %2117 = vmatprep.subr.mxu0 0.0
    %2118 = vmatpush1.msra.mxu0 0.0
    %2119 = vmatprep.subr.mxu0 0.0
    %2120 = vmatpush1.msra.mxu0 0.0
    %2121 = vmatprep.subr.mxu0 0.0
    %2122 = vmatpush1.msra.mxu0 0.0
    %2123 = vmatprep.subr.mxu0 0.0
    %2124 = vmatpush1.msra.mxu0 0.0
    %2125 = vmatprep.subr.mxu0 0.0
    %2126 = vmatpush1.msra.mxu0 0.0
    %2127 = vmatprep.subr.mxu0 0.0
    %2128 = vmatpush1.msra.mxu0 0.0
    %2129 = vmatprep.subr.mxu0 0.0
    %2130 = vmatpush1.msra.mxu0 0.0
    %2131 = vmatprep.subr.mxu0 0.0
    %2132 = vmatpush1.msra.mxu0 0.0
    %2133 = vmatprep.subr.mxu0 0.0
    %2134 = vmatpush1.msra.mxu0 0.0
    %2135 = vmatprep.subr.mxu0 0.0
    %2136 = vmatpush1.msra.mxu0 0.0
    %2137 = vmatprep.subr.mxu0 0.0
    %2138 = vmatpush1.msra.mxu0 0.0
    %2139 = vmatprep.mubr.f32.mxu0 0.0
    %2140 = vmatmul.mubr.f32.gmra.mrb[0].mxu0 %v1377
    %v2141 = vpop.f32.mrb[0].mxu0
    %v2142 = vadd.f32 0.0, %v2141
    %v2143 = vpop.f32.mrb[0].mxu0
    %v2144 = vadd.f32 0.0, %v2143
    %2145 = vmatprep.mubr.f32.mxu0 0.0
    %2146 = vmatmul.mubr.f32.gmra.mrb[0].mxu0 %v1378
    %v2147 = vpop.f32.mrb[0].mxu0
    %v2148 = vadd.f32 0.0, %v2147
    %v2149 = vpop.f32.mrb[0].mxu0
    %v2150 = vadd.f32 0.0, %v2149
    %2151 = vdwg.mxu0
    %2152 = vmatprep.subr.mxu0 %v1800
    %2153 = vmatpush1.msra.mxu0 %v1799
    %2154 = vmatprep.subr.mxu0 %v1808
    %2155 = vmatpush1.msra.mxu0 %v1807
    %2156 = vmatprep.subr.mxu0 %v1816
    %2157 = vmatpush1.msra.mxu0 %v1815
    %2158 = vmatprep.subr.mxu0 %v1824
    %2159 = vmatpush1.msra.mxu0 %v1823
    %2160 = vmatprep.subr.mxu0 %v1832
    %2161 = vmatpush1.msra.mxu0 %v1831
    %2162 = vmatprep.subr.mxu0 %v1840
    %2163 = vmatpush1.msra.mxu0 %v1839
    %2164 = vmatprep.subr.mxu0 %v1848
    %2165 = vmatpush1.msra.mxu0 %v1847
    %2166 = vmatprep.subr.mxu0 %v1856
    %2167 = vmatpush1.msra.mxu0 %v1855
    %2168 = vmatprep.subr.mxu0 %v1864
    %2169 = vmatpush1.msra.mxu0 %v1863
    %2170 = vmatprep.subr.mxu0 %v1872
    %2171 = vmatpush1.msra.mxu0 %v1871
    %2172 = vmatprep.subr.mxu0 %v1880
    %2173 = vmatpush1.msra.mxu0 %v1879
    %2174 = vmatprep.subr.mxu0 %v1888
    %2175 = vmatpush1.msra.mxu0 %v1887
    %2176 = vmatprep.subr.mxu0 %v1896
    %2177 = vmatpush1.msra.mxu0 %v1895
    %2178 = vmatprep.subr.mxu0 %v1904
    %2179 = vmatpush1.msra.mxu0 %v1903
    %2180 = vmatprep.subr.mxu0 %v1912
    %2181 = vmatpush1.msra.mxu0 %v1911
    %2182 = vmatprep.subr.mxu0 %v1920
    %2183 = vmatpush1.msra.mxu0 %v1919
    %2184 = vmatprep.subr.mxu0 0.0
    %2185 = vmatpush1.msra.mxu0 0.0
    %2186 = vmatprep.subr.mxu0 0.0
    %2187 = vmatpush1.msra.mxu0 0.0
    %2188 = vmatprep.subr.mxu0 0.0
    %2189 = vmatpush1.msra.mxu0 0.0
    %2190 = vmatprep.subr.mxu0 0.0
    %2191 = vmatpush1.msra.mxu0 0.0
    %2192 = vmatprep.subr.mxu0 0.0
    %2193 = vmatpush1.msra.mxu0 0.0
    %2194 = vmatprep.subr.mxu0 0.0
    %2195 = vmatpush1.msra.mxu0 0.0
    %2196 = vmatprep.subr.mxu0 0.0
    %2197 = vmatpush1.msra.mxu0 0.0
    %2198 = vmatprep.subr.mxu0 0.0
    %2199 = vmatpush1.msra.mxu0 0.0
    %2200 = vmatprep.subr.mxu0 0.0
    %2201 = vmatpush1.msra.mxu0 0.0
    %2202 = vmatprep.subr.mxu0 0.0
    %2203 = vmatpush1.msra.mxu0 0.0
    %2204 = vmatprep.subr.mxu0 0.0
    %2205 = vmatpush1.msra.mxu0 0.0
    %2206 = vmatprep.subr.mxu0 0.0
    %2207 = vmatpush1.msra.mxu0 0.0
    %2208 = vmatprep.subr.mxu0 0.0
    %2209 = vmatpush1.msra.mxu0 0.0
    %2210 = vmatprep.subr.mxu0 0.0
    %2211 = vmatpush1.msra.mxu0 0.0
    %2212 = vmatprep.subr.mxu0 0.0
    %2213 = vmatpush1.msra.mxu0 0.0
    %2214 = vmatprep.subr.mxu0 0.0
    %2215 = vmatpush1.msra.mxu0 0.0
    %2216 = vmatprep.mubr.f32.mxu0 0.0
    %2217 = vmatmul.mubr.f32.gmra.mrb[0].mxu0 %v1377
    %v2218 = vpop.f32.mrb[0].mxu0
    %v2219 = vadd.f32 0.0, %v2218
    %v2220 = vpop.f32.mrb[0].mxu0
    %v2221 = vadd.f32 0.0, %v2220
    %2222 = vmatprep.mubr.f32.mxu0 0.0
    %2223 = vmatmul.mubr.f32.gmra.mrb[0].mxu0 %v1378
    %v2224 = vpop.f32.mrb[0].mxu0
    %v2225 = vadd.f32 0.0, %v2224
    %v2226 = vpop.f32.mrb[0].mxu0
    %v2227 = vadd.f32 0.0, %v2226
    %2228 = vdwg.mxu0
    %v2229 = vmul.f32 %v1988, %v1777
    %v2230 = vmul.f32 %v1990, %v1778
    %v2231 = vmul.f32 %v2065, %v1779
    %v2232 = vmul.f32 %v2067, %v1780
    %v2233 = vmul.f32 %v2142, %v1781
    %v2234 = vmul.f32 %v2144, %v1782
    %v2235 = vmul.f32 %v2219, %v1783
    %v2236 = vmul.f32 %v2221, %v1784
    %v2237 = vmul.f32 %v1994, %v1785
    %v2238 = vmul.f32 %v1996, %v1786
    %v2239 = vmul.f32 %v2071, %v1787
    %v2240 = vmul.f32 %v2073, %v1788
    %v2241 = vmul.f32 %v2148, %v1789
    %v2242 = vmul.f32 %v2150, %v1790
    %v2243 = vmul.f32 %v2225, %v1791
    %v2244 = vmul.f32 %v2227, %v1792
    %v2245 = vld [vmem:[#allocation14] sm:$0xff]
    %v2246 = vld [vmem:[#allocation14 + $0x8] sm:$0xff]
    %v2247 = vld [vmem:[#allocation14 + $0x10] sm:$0xff]
    %v2248 = vld [vmem:[#allocation14 + $0x18] sm:$0xff]
    %v2249 = vld [vmem:[#allocation14 + $0x20] sm:$0xff]
    %v2250 = vld [vmem:[#allocation14 + $0x28] sm:$0xff]
    %v2251 = vld [vmem:[#allocation14 + $0x30] sm:$0xff]
    %v2252 = vld [vmem:[#allocation14 + $0x38] sm:$0xff]
    %v2253 = vld [vmem:[#allocation14 + $0x40] sm:$0xff]
    %v2254 = vld [vmem:[#allocation14 + $0x48] sm:$0xff]
    %v2255 = vld [vmem:[#allocation14 + $0x50] sm:$0xff]
    %v2256 = vld [vmem:[#allocation14 + $0x58] sm:$0xff]
    %v2257 = vld [vmem:[#allocation14 + $0x60] sm:$0xff]
    %v2258 = vld [vmem:[#allocation14 + $0x68] sm:$0xff]
    %v2259 = vld [vmem:[#allocation14 + $0x70] sm:$0xff]
    %v2260 = vld [vmem:[#allocation14 + $0x78] sm:$0xff]
    %v2261 = vld [vmem:[#allocation14 + $0x80] sm:$0xff]
    %v2262 = vld [vmem:[#allocation14 + $0x88] sm:$0xff]
    %v2263 = vld [vmem:[#allocation14 + $0x90] sm:$0xff]
    %v2264 = vld [vmem:[#allocation14 + $0x98] sm:$0xff]
    %v2265 = vld [vmem:[#allocation14 + $0xa0] sm:$0xff]
    %v2266 = vld [vmem:[#allocation14 + $0xa8] sm:$0xff]
    %v2267 = vld [vmem:[#allocation14 + $0xb0] sm:$0xff]
    %v2268 = vld [vmem:[#allocation14 + $0xb8] sm:$0xff]
    %v2269 = vld [vmem:[#allocation14 + $0xc0] sm:$0xff]
    %v2270 = vld [vmem:[#allocation14 + $0xc8] sm:$0xff]
    %v2271 = vld [vmem:[#allocation14 + $0xd0] sm:$0xff]
    %v2272 = vld [vmem:[#allocation14 + $0xd8] sm:$0xff]
    %v2273 = vld [vmem:[#allocation14 + $0xe0] sm:$0xff]
    %v2274 = vld [vmem:[#allocation14 + $0xe8] sm:$0xff]
    %v2275 = vld [vmem:[#allocation14 + $0xf0] sm:$0xff]
    %v2276 = vld [vmem:[#allocation14 + $0xf8] sm:$0xff]
    %v2277 = vld [vmem:[#allocation14 + $0x100] sm:$0xff]
    %v2278 = vld [vmem:[#allocation14 + $0x108] sm:$0xff]
    %v2279 = vld [vmem:[#allocation14 + $0x110] sm:$0xff]
    %v2280 = vld [vmem:[#allocation14 + $0x118] sm:$0xff]
    %v2281 = vld [vmem:[#allocation14 + $0x120] sm:$0xff]
    %v2282 = vld [vmem:[#allocation14 + $0x128] sm:$0xff]
    %v2283 = vld [vmem:[#allocation14 + $0x130] sm:$0xff]
    %v2284 = vld [vmem:[#allocation14 + $0x138] sm:$0xff]
    %v2285 = vld [vmem:[#allocation14 + $0x140] sm:$0xff]
    %v2286 = vld [vmem:[#allocation14 + $0x148] sm:$0xff]
    %v2287 = vld [vmem:[#allocation14 + $0x150] sm:$0xff]
    %v2288 = vld [vmem:[#allocation14 + $0x158] sm:$0xff]
    %v2289 = vld [vmem:[#allocation14 + $0x160] sm:$0xff]
    %v2290 = vld [vmem:[#allocation14 + $0x168] sm:$0xff]
    %v2291 = vld [vmem:[#allocation14 + $0x170] sm:$0xff]
    %v2292 = vld [vmem:[#allocation14 + $0x178] sm:$0xff]
    %v2293 = vld [vmem:[#allocation14 + $0x180] sm:$0xff]
    %v2294 = vld [vmem:[#allocation14 + $0x188] sm:$0xff]
    %v2295 = vld [vmem:[#allocation14 + $0x190] sm:$0xff]
    %v2296 = vld [vmem:[#allocation14 + $0x198] sm:$0xff]
    %v2297 = vld [vmem:[#allocation14 + $0x1a0] sm:$0xff]
    %v2298 = vld [vmem:[#allocation14 + $0x1a8] sm:$0xff]
    %v2299 = vld [vmem:[#allocation14 + $0x1b0] sm:$0xff]
    %v2300 = vld [vmem:[#allocation14 + $0x1b8] sm:$0xff]
    %v2301 = vld [vmem:[#allocation14 + $0x1c0] sm:$0xff]
    %v2302 = vld [vmem:[#allocation14 + $0x1c8] sm:$0xff]
    %v2303 = vld [vmem:[#allocation14 + $0x1d0] sm:$0xff]
    %v2304 = vld [vmem:[#allocation14 + $0x1d8] sm:$0xff]
    %v2305 = vld [vmem:[#allocation14 + $0x1e0] sm:$0xff]
    %v2306 = vld [vmem:[#allocation14 + $0x1e8] sm:$0xff]
    %v2307 = vld [vmem:[#allocation14 + $0x1f0] sm:$0xff]
    %v2308 = vld [vmem:[#allocation14 + $0x1f8] sm:$0xff]
    %v2309 = vld [vmem:[#allocation14 + $0x200] sm:$0xff]
    %v2310 = vld [vmem:[#allocation14 + $0x208] sm:$0xff]
    %v2311 = vld [vmem:[#allocation14 + $0x210] sm:$0xff]
    %v2312 = vld [vmem:[#allocation14 + $0x218] sm:$0xff]
    %v2313 = vld [vmem:[#allocation14 + $0x220] sm:$0xff]
    %v2314 = vld [vmem:[#allocation14 + $0x228] sm:$0xff]
    %v2315 = vld [vmem:[#allocation14 + $0x230] sm:$0xff]
    %v2316 = vld [vmem:[#allocation14 + $0x238] sm:$0xff]
    %v2317 = vld [vmem:[#allocation14 + $0x240] sm:$0xff]
    %v2318 = vld [vmem:[#allocation14 + $0x248] sm:$0xff]
    %v2319 = vld [vmem:[#allocation14 + $0x250] sm:$0xff]
    %v2320 = vld [vmem:[#allocation14 + $0x258] sm:$0xff]
    %v2321 = vld [vmem:[#allocation14 + $0x260] sm:$0xff]
    %v2322 = vld [vmem:[#allocation14 + $0x268] sm:$0xff]
    %v2323 = vld [vmem:[#allocation14 + $0x270] sm:$0xff]
    %v2324 = vld [vmem:[#allocation14 + $0x278] sm:$0xff]
    %v2325 = vld [vmem:[#allocation14 + $0x280] sm:$0xff]
    %v2326 = vld [vmem:[#allocation14 + $0x288] sm:$0xff]
    %v2327 = vld [vmem:[#allocation14 + $0x290] sm:$0xff]
    %v2328 = vld [vmem:[#allocation14 + $0x298] sm:$0xff]
    %v2329 = vld [vmem:[#allocation14 + $0x2a0] sm:$0xff]
    %v2330 = vld [vmem:[#allocation14 + $0x2a8] sm:$0xff]
    %v2331 = vld [vmem:[#allocation14 + $0x2b0] sm:$0xff]
    %v2332 = vld [vmem:[#allocation14 + $0x2b8] sm:$0xff]
    %v2333 = vld [vmem:[#allocation14 + $0x2c0] sm:$0xff]
    %v2334 = vld [vmem:[#allocation14 + $0x2c8] sm:$0xff]
    %v2335 = vld [vmem:[#allocation14 + $0x2d0] sm:$0xff]
    %v2336 = vld [vmem:[#allocation14 + $0x2d8] sm:$0xff]
    %v2337 = vld [vmem:[#allocation14 + $0x2e0] sm:$0xff]
    %v2338 = vld [vmem:[#allocation14 + $0x2e8] sm:$0xff]
    %v2339 = vld [vmem:[#allocation14 + $0x2f0] sm:$0xff]
    %v2340 = vld [vmem:[#allocation14 + $0x2f8] sm:$0xff]
    %v2341 = vld [vmem:[#allocation14 + $0x300] sm:$0xff]
    %v2342 = vld [vmem:[#allocation14 + $0x308] sm:$0xff]
    %v2343 = vld [vmem:[#allocation14 + $0x310] sm:$0xff]
    %v2344 = vld [vmem:[#allocation14 + $0x318] sm:$0xff]
    %v2345 = vld [vmem:[#allocation14 + $0x320] sm:$0xff]
    %v2346 = vld [vmem:[#allocation14 + $0x328] sm:$0xff]
    %v2347 = vld [vmem:[#allocation14 + $0x330] sm:$0xff]
    %v2348 = vld [vmem:[#allocation14 + $0x338] sm:$0xff]
    %v2349 = vld [vmem:[#allocation14 + $0x340] sm:$0xff]
    %v2350 = vld [vmem:[#allocation14 + $0x348] sm:$0xff]
    %v2351 = vld [vmem:[#allocation14 + $0x350] sm:$0xff]
    %v2352 = vld [vmem:[#allocation14 + $0x358] sm:$0xff]
    %v2353 = vld [vmem:[#allocation14 + $0x360] sm:$0xff]
    %v2354 = vld [vmem:[#allocation14 + $0x368] sm:$0xff]
    %v2355 = vld [vmem:[#allocation14 + $0x370] sm:$0xff]
    %v2356 = vld [vmem:[#allocation14 + $0x378] sm:$0xff]
    %v2357 = vld [vmem:[#allocation14 + $0x380] sm:$0xff]
    %v2358 = vld [vmem:[#allocation14 + $0x388] sm:$0xff]
    %v2359 = vld [vmem:[#allocation14 + $0x390] sm:$0xff]
    %v2360 = vld [vmem:[#allocation14 + $0x398] sm:$0xff]
    %v2361 = vld [vmem:[#allocation14 + $0x3a0] sm:$0xff]
    %v2362 = vld [vmem:[#allocation14 + $0x3a8] sm:$0xff]
    %v2363 = vld [vmem:[#allocation14 + $0x3b0] sm:$0xff]
    %v2364 = vld [vmem:[#allocation14 + $0x3b8] sm:$0xff]
    %v2365 = vld [vmem:[#allocation14 + $0x3c0] sm:$0xff]
    %v2366 = vld [vmem:[#allocation14 + $0x3c8] sm:$0xff]
    %v2367 = vld [vmem:[#allocation14 + $0x3d0] sm:$0xff]
    %v2368 = vld [vmem:[#allocation14 + $0x3d8] sm:$0xff]
    %v2369 = vld [vmem:[#allocation14 + $0x3e0] sm:$0xff]
    %v2370 = vld [vmem:[#allocation14 + $0x3e8] sm:$0xff]
    %v2371 = vld [vmem:[#allocation14 + $0x3f0] sm:$0xff]
    %v2372 = vld [vmem:[#allocation14 + $0x3f8] sm:$0xff]
    %2373 = vmatprep.subr.mxu0 0.0
    %2374 = vmatpush1.msra.mxu0 %v2245
    %2375 = vmatprep.subr.mxu0 0.0
    %2376 = vmatpush1.msra.mxu0 %v2246
    %2377 = vmatprep.subr.mxu0 0.0
    %2378 = vmatpush1.msra.mxu0 %v2247
    %2379 = vmatprep.subr.mxu0 0.0
    %2380 = vmatpush1.msra.mxu0 %v2248
    %2381 = vmatprep.subr.mxu0 0.0
    %2382 = vmatpush1.msra.mxu0 %v2249
    %2383 = vmatprep.subr.mxu0 0.0
    %2384 = vmatpush1.msra.mxu0 %v2250
    %2385 = vmatprep.subr.mxu0 0.0
    %2386 = vmatpush1.msra.mxu0 %v2251
    %2387 = vmatprep.subr.mxu0 0.0
    %2388 = vmatpush1.msra.mxu0 %v2252
    %2389 = vmatprep.subr.mxu0 0.0
    %2390 = vmatpush1.msra.mxu0 %v2253
    %2391 = vmatprep.subr.mxu0 0.0
    %2392 = vmatpush1.msra.mxu0 %v2254
    %2393 = vmatprep.subr.mxu0 0.0
    %2394 = vmatpush1.msra.mxu0 %v2255
    %2395 = vmatprep.subr.mxu0 0.0
    %2396 = vmatpush1.msra.mxu0 %v2256
    %2397 = vmatprep.subr.mxu0 0.0
    %2398 = vmatpush1.msra.mxu0 %v2257
    %2399 = vmatprep.subr.mxu0 0.0
    %2400 = vmatpush1.msra.mxu0 %v2258
    %2401 = vmatprep.subr.mxu0 0.0
    %2402 = vmatpush1.msra.mxu0 %v2259
    %2403 = vmatprep.subr.mxu0 0.0
    %2404 = vmatpush1.msra.mxu0 %v2260
    %2405 = vmatprep.subr.mxu0 0.0
    %2406 = vmatpush1.msra.mxu0 %v2261
    %2407 = vmatprep.subr.mxu0 0.0
    %2408 = vmatpush1.msra.mxu0 %v2262
    %2409 = vmatprep.subr.mxu0 0.0
    %2410 = vmatpush1.msra.mxu0 %v2263
    %2411 = vmatprep.subr.mxu0 0.0
    %2412 = vmatpush1.msra.mxu0 %v2264
    %2413 = vmatprep.subr.mxu0 0.0
    %2414 = vmatpush1.msra.mxu0 %v2265
    %2415 = vmatprep.subr.mxu0 0.0
    %2416 = vmatpush1.msra.mxu0 %v2266
    %2417 = vmatprep.subr.mxu0 0.0
    %2418 = vmatpush1.msra.mxu0 %v2267
    %2419 = vmatprep.subr.mxu0 0.0
    %2420 = vmatpush1.msra.mxu0 %v2268
    %2421 = vmatprep.subr.mxu0 0.0
    %2422 = vmatpush1.msra.mxu0 %v2269
    %2423 = vmatprep.subr.mxu0 0.0
    %2424 = vmatpush1.msra.mxu0 %v2270
    %2425 = vmatprep.subr.mxu0 0.0
    %2426 = vmatpush1.msra.mxu0 %v2271
    %2427 = vmatprep.subr.mxu0 0.0
    %2428 = vmatpush1.msra.mxu0 %v2272
    %2429 = vmatprep.subr.mxu0 0.0
    %2430 = vmatpush1.msra.mxu0 %v2273
    %2431 = vmatprep.subr.mxu0 0.0
    %2432 = vmatpush1.msra.mxu0 %v2274
    %2433 = vmatprep.subr.mxu0 0.0
    %2434 = vmatpush1.msra.mxu0 %v2275
    %2435 = vmatprep.subr.mxu0 0.0
    %2436 = vmatpush1.msra.mxu0 %v2276
    %2437 = vmatprep.mubr.f32.mxu0 %v2230
    %2438 = vmatmul.mubr.f32.gmra.mrb[0].mxu0 %v2229
    %v2439 = vpop.f32.mrb[0].mxu0
    %v2440 = vadd.f32 %v517, %v2439
    %v2441 = vpop.f32.mrb[0].mxu0
    %2442 = vmatprep.mubr.f32.mxu0 %v2238
    %2443 = vmatmul.mubr.f32.gmra.mrb[0].mxu0 %v2237
    %v2444 = vpop.f32.mrb[0].mxu0
    %v2445 = vadd.f32 %v518, %v2444
    %v2446 = vpop.f32.mrb[0].mxu0
    %2447 = vdwg.mxu0
    %2448 = vmatprep.subr.mxu0 0.0
    %2449 = vmatpush1.msra.mxu0 %v2277
    %2450 = vmatprep.subr.mxu0 0.0
    %2451 = vmatpush1.msra.mxu0 %v2278
    %2452 = vmatprep.subr.mxu0 0.0
    %2453 = vmatpush1.msra.mxu0 %v2279
    %2454 = vmatprep.subr.mxu0 0.0
    %2455 = vmatpush1.msra.mxu0 %v2280
    %2456 = vmatprep.subr.mxu0 0.0
    %2457 = vmatpush1.msra.mxu0 %v2281
    %2458 = vmatprep.subr.mxu0 0.0
    %2459 = vmatpush1.msra.mxu0 %v2282
    %2460 = vmatprep.subr.mxu0 0.0
    %2461 = vmatpush1.msra.mxu0 %v2283
    %2462 = vmatprep.subr.mxu0 0.0
    %2463 = vmatpush1.msra.mxu0 %v2284
    %2464 = vmatprep.subr.mxu0 0.0
    %2465 = vmatpush1.msra.mxu0 %v2285
    %2466 = vmatprep.subr.mxu0 0.0
    %2467 = vmatpush1.msra.mxu0 %v2286
    %2468 = vmatprep.subr.mxu0 0.0
    %2469 = vmatpush1.msra.mxu0 %v2287
    %2470 = vmatprep.subr.mxu0 0.0
    %2471 = vmatpush1.msra.mxu0 %v2288
    %2472 = vmatprep.subr.mxu0 0.0
    %2473 = vmatpush1.msra.mxu0 %v2289
    %2474 = vmatprep.subr.mxu0 0.0
    %2475 = vmatpush1.msra.mxu0 %v2290
    %2476 = vmatprep.subr.mxu0 0.0
    %2477 = vmatpush1.msra.mxu0 %v2291
    %2478 = vmatprep.subr.mxu0 0.0
    %2479 = vmatpush1.msra.mxu0 %v2292
    %2480 = vmatprep.subr.mxu0 0.0
    %2481 = vmatpush1.msra.mxu0 %v2293
    %2482 = vmatprep.subr.mxu0 0.0
    %2483 = vmatpush1.msra.mxu0 %v2294
    %2484 = vmatprep.subr.mxu0 0.0
    %2485 = vmatpush1.msra.mxu0 %v2295
    %2486 = vmatprep.subr.mxu0 0.0
    %2487 = vmatpush1.msra.mxu0 %v2296
    %2488 = vmatprep.subr.mxu0 0.0
    %2489 = vmatpush1.msra.mxu0 %v2297
    %2490 = vmatprep.subr.mxu0 0.0
    %2491 = vmatpush1.msra.mxu0 %v2298
    %2492 = vmatprep.subr.mxu0 0.0
    %2493 = vmatpush1.msra.mxu0 %v2299
    %2494 = vmatprep.subr.mxu0 0.0
    %2495 = vmatpush1.msra.mxu0 %v2300
    %2496 = vmatprep.subr.mxu0 0.0
    %2497 = vmatpush1.msra.mxu0 %v2301
    %2498 = vmatprep.subr.mxu0 0.0
    %2499 = vmatpush1.msra.mxu0 %v2302
    %2500 = vmatprep.subr.mxu0 0.0
    %2501 = vmatpush1.msra.mxu0 %v2303
    %2502 = vmatprep.subr.mxu0 0.0
    %2503 = vmatpush1.msra.mxu0 %v2304
    %2504 = vmatprep.subr.mxu0 0.0
    %2505 = vmatpush1.msra.mxu0 %v2305
    %2506 = vmatprep.subr.mxu0 0.0
    %2507 = vmatpush1.msra.mxu0 %v2306
    %2508 = vmatprep.subr.mxu0 0.0
    %2509 = vmatpush1.msra.mxu0 %v2307
    %2510 = vmatprep.subr.mxu0 0.0
    %2511 = vmatpush1.msra.mxu0 %v2308
    %2512 = vmatprep.mubr.f32.mxu0 %v2232
    %2513 = vmatmul.mubr.f32.gmra.mrb[0].mxu0 %v2231
    %v2514 = vpop.f32.mrb[0].mxu0
    %v2515 = vadd.f32 %v2440, %v2514
    %v2516 = vpop.f32.mrb[0].mxu0
    %2517 = vmatprep.mubr.f32.mxu0 %v2240
    %2518 = vmatmul.mubr.f32.gmra.mrb[0].mxu0 %v2239
    %v2519 = vpop.f32.mrb[0].mxu0
    %v2520 = vadd.f32 %v2445, %v2519
    %v2521 = vpop.f32.mrb[0].mxu0
    %2522 = vdwg.mxu0
    %2523 = vmatprep.subr.mxu0 0.0
    %2524 = vmatpush1.msra.mxu0 %v2309
    %2525 = vmatprep.subr.mxu0 0.0
    %2526 = vmatpush1.msra.mxu0 %v2310
    %2527 = vmatprep.subr.mxu0 0.0
    %2528 = vmatpush1.msra.mxu0 %v2311
    %2529 = vmatprep.subr.mxu0 0.0
    %2530 = vmatpush1.msra.mxu0 %v2312
    %2531 = vmatprep.subr.mxu0 0.0
    %2532 = vmatpush1.msra.mxu0 %v2313
    %2533 = vmatprep.subr.mxu0 0.0
    %2534 = vmatpush1.msra.mxu0 %v2314
    %2535 = vmatprep.subr.mxu0 0.0
    %2536 = vmatpush1.msra.mxu0 %v2315
    %2537 = vmatprep.subr.mxu0 0.0
    %2538 = vmatpush1.msra.mxu0 %v2316
    %2539 = vmatprep.subr.mxu0 0.0
    %2540 = vmatpush1.msra.mxu0 %v2317
    %2541 = vmatprep.subr.mxu0 0.0
    %2542 = vmatpush1.msra.mxu0 %v2318
    %2543 = vmatprep.subr.mxu0 0.0
    %2544 = vmatpush1.msra.mxu0 %v2319
    %2545 = vmatprep.subr.mxu0 0.0
    %2546 = vmatpush1.msra.mxu0 %v2320
    %2547 = vmatprep.subr.mxu0 0.0
    %2548 = vmatpush1.msra.mxu0 %v2321
    %2549 = vmatprep.subr.mxu0 0.0
    %2550 = vmatpush1.msra.mxu0 %v2322
    %2551 = vmatprep.subr.mxu0 0.0
    %2552 = vmatpush1.msra.mxu0 %v2323
    %2553 = vmatprep.subr.mxu0 0.0
    %2554 = vmatpush1.msra.mxu0 %v2324
    %2555 = vmatprep.subr.mxu0 0.0
    %2556 = vmatpush1.msra.mxu0 %v2325
    %2557 = vmatprep.subr.mxu0 0.0
    %2558 = vmatpush1.msra.mxu0 %v2326
    %2559 = vmatprep.subr.mxu0 0.0
    %2560 = vmatpush1.msra.mxu0 %v2327
    %2561 = vmatprep.subr.mxu0 0.0
    %2562 = vmatpush1.msra.mxu0 %v2328
    %2563 = vmatprep.subr.mxu0 0.0
    %2564 = vmatpush1.msra.mxu0 %v2329
    %2565 = vmatprep.subr.mxu0 0.0
    %2566 = vmatpush1.msra.mxu0 %v2330
    %2567 = vmatprep.subr.mxu0 0.0
    %2568 = vmatpush1.msra.mxu0 %v2331
    %2569 = vmatprep.subr.mxu0 0.0
    %2570 = vmatpush1.msra.mxu0 %v2332
    %2571 = vmatprep.subr.mxu0 0.0
    %2572 = vmatpush1.msra.mxu0 %v2333
    %2573 = vmatprep.subr.mxu0 0.0
    %2574 = vmatpush1.msra.mxu0 %v2334
    %2575 = vmatprep.subr.mxu0 0.0
    %2576 = vmatpush1.msra.mxu0 %v2335
    %2577 = vmatprep.subr.mxu0 0.0
    %2578 = vmatpush1.msra.mxu0 %v2336
    %2579 = vmatprep.subr.mxu0 0.0
    %2580 = vmatpush1.msra.mxu0 %v2337
    %2581 = vmatprep.subr.mxu0 0.0
    %2582 = vmatpush1.msra.mxu0 %v2338
    %2583 = vmatprep.subr.mxu0 0.0
    %2584 = vmatpush1.msra.mxu0 %v2339
    %2585 = vmatprep.subr.mxu0 0.0
    %2586 = vmatpush1.msra.mxu0 %v2340
    %2587 = vmatprep.mubr.f32.mxu0 %v2234
    %2588 = vmatmul.mubr.f32.gmra.mrb[0].mxu0 %v2233
    %v2589 = vpop.f32.mrb[0].mxu0
    %v2590 = vadd.f32 %v2515, %v2589
    %v2591 = vpop.f32.mrb[0].mxu0
    %2592 = vmatprep.mubr.f32.mxu0 %v2242
    %2593 = vmatmul.mubr.f32.gmra.mrb[0].mxu0 %v2241
    %v2594 = vpop.f32.mrb[0].mxu0
    %v2595 = vadd.f32 %v2520, %v2594
    %v2596 = vpop.f32.mrb[0].mxu0
    %2597 = vdwg.mxu0
    %2598 = vmatprep.subr.mxu0 0.0
    %2599 = vmatpush1.msra.mxu0 %v2341
    %2600 = vmatprep.subr.mxu0 0.0
    %2601 = vmatpush1.msra.mxu0 %v2342
    %2602 = vmatprep.subr.mxu0 0.0
    %2603 = vmatpush1.msra.mxu0 %v2343
    %2604 = vmatprep.subr.mxu0 0.0
    %2605 = vmatpush1.msra.mxu0 %v2344
    %2606 = vmatprep.subr.mxu0 0.0
    %2607 = vmatpush1.msra.mxu0 %v2345
    %2608 = vmatprep.subr.mxu0 0.0
    %2609 = vmatpush1.msra.mxu0 %v2346
    %2610 = vmatprep.subr.mxu0 0.0
    %2611 = vmatpush1.msra.mxu0 %v2347
    %2612 = vmatprep.subr.mxu0 0.0
    %2613 = vmatpush1.msra.mxu0 %v2348
    %2614 = vmatprep.subr.mxu0 0.0
    %2615 = vmatpush1.msra.mxu0 %v2349
    %2616 = vmatprep.subr.mxu0 0.0
    %2617 = vmatpush1.msra.mxu0 %v2350
    %2618 = vmatprep.subr.mxu0 0.0
    %2619 = vmatpush1.msra.mxu0 %v2351
    %2620 = vmatprep.subr.mxu0 0.0
    %2621 = vmatpush1.msra.mxu0 %v2352
    %2622 = vmatprep.subr.mxu0 0.0
    %2623 = vmatpush1.msra.mxu0 %v2353
    %2624 = vmatprep.subr.mxu0 0.0
    %2625 = vmatpush1.msra.mxu0 %v2354
    %2626 = vmatprep.subr.mxu0 0.0
    %2627 = vmatpush1.msra.mxu0 %v2355
    %2628 = vmatprep.subr.mxu0 0.0
    %2629 = vmatpush1.msra.mxu0 %v2356
    %2630 = vmatprep.subr.mxu0 0.0
    %2631 = vmatpush1.msra.mxu0 %v2357
    %2632 = vmatprep.subr.mxu0 0.0
    %2633 = vmatpush1.msra.mxu0 %v2358
    %2634 = vmatprep.subr.mxu0 0.0
    %2635 = vmatpush1.msra.mxu0 %v2359
    %2636 = vmatprep.subr.mxu0 0.0
    %2637 = vmatpush1.msra.mxu0 %v2360
    %2638 = vmatprep.subr.mxu0 0.0
    %2639 = vmatpush1.msra.mxu0 %v2361
    %2640 = vmatprep.subr.mxu0 0.0
    %2641 = vmatpush1.msra.mxu0 %v2362
    %2642 = vmatprep.subr.mxu0 0.0
    %2643 = vmatpush1.msra.mxu0 %v2363
    %2644 = vmatprep.subr.mxu0 0.0
    %2645 = vmatpush1.msra.mxu0 %v2364
    %2646 = vmatprep.subr.mxu0 0.0
    %2647 = vmatpush1.msra.mxu0 %v2365
    %2648 = vmatprep.subr.mxu0 0.0
    %2649 = vmatpush1.msra.mxu0 %v2366
    %2650 = vmatprep.subr.mxu0 0.0
    %2651 = vmatpush1.msra.mxu0 %v2367
    %2652 = vmatprep.subr.mxu0 0.0
    %2653 = vmatpush1.msra.mxu0 %v2368
    %2654 = vmatprep.subr.mxu0 0.0
    %2655 = vmatpush1.msra.mxu0 %v2369
    %2656 = vmatprep.subr.mxu0 0.0
    %2657 = vmatpush1.msra.mxu0 %v2370
    %2658 = vmatprep.subr.mxu0 0.0
    %2659 = vmatpush1.msra.mxu0 %v2371
    %2660 = vmatprep.subr.mxu0 0.0
    %2661 = vmatpush1.msra.mxu0 %v2372
    %2662 = vmatprep.mubr.f32.mxu0 %v2236
    %2663 = vmatmul.mubr.f32.gmra.mrb[0].mxu0 %v2235
    %v2664 = vpop.f32.mrb[0].mxu0
    %v2665 = vadd.f32 %v2590, %v2664
    %v2666 = vpop.f32.mrb[0].mxu0
    %2667 = vmatprep.mubr.f32.mxu0 %v2244
    %2668 = vmatmul.mubr.f32.gmra.mrb[0].mxu0 %v2243
    %v2669 = vpop.f32.mrb[0].mxu0
    %v2670 = vadd.f32 %v2595, %v2669
    %v2671 = vpop.f32.mrb[0].mxu0
    %2672 = vdwg.mxu0
    %2673 = vst [vmem:[#allocation16] sm:$0xff] %v2665
    %2674 = vst [vmem:[#allocation16 + $0x8] sm:$0xff] %v2670
    // Predicated region
    $region78: #{tpu_custom_call.1} parent=1 // pred_check
      _
    $region79: #{tpu_custom_call.1} parent=1 // pred_check_branch
      %2676 = sbr.rel (0) target = $region81
    $region80: #{tpu_custom_call.1} parent=1 // pred_region
      %s2678 = ssub.s32 256, 256
      %2679 = vsyncadd [#allocation4], %s2678
      %s2680 = sshll.u32 [#allocation16], 4
      %s2681 = int_to_ptr.vmem [resolvable:$true] %s2680
      %2686 = dma.vmem_to_hbm [thread:$0]  %s2681, 256, %s11, [#allocation4], 128, 128, 8
    $region81: #{tpu_custom_call.1} parent=1 // pred_fallthru
      _
    // Predicated region
    $region82: #{tpu_custom_call.1} parent=1 // pred_check
      _
    $region83: #{tpu_custom_call.1} parent=1 // pred_check_branch
      %2688 = sbr.rel (0) target = $region85
    $region84: #{tpu_custom_call.1} parent=1 // pred_region
      %2689 = dma.done [#allocation4], 256
    $region85: #{tpu_custom_call.1} parent=1 // pred_fallthru
      _
    %2690 = vsyncpa [#allocation3], 1
    %2691 = vsyncpa [#allocation6], 1
    %2692 = vsyncpa [#allocation9], 1
    %2693 = vsyncpa [#allocation12], 1
    %2694 = vsyncpa [#allocation15], 1
    %2695 = vsyncpa [#allocation4], 1

// kernel: tpu_custom_call.1
$region0: #{tpu_custom_call.1}
  #allocation0 [shape = 'u32[]', space=smem, size = 0x4, offset = 0x4, fixed_abs, tag = 'smem constant byte address 0x4 - core index']
  #allocation1 [shape = 'u32[144,128]{1,0:T(1,128)}', space=vmem, size = 0x12000, scoped, tag = 'internal scratch']
  %s0 = inlined_call_operand.hbm [shape: f32[16,128], index: 0, kind: input, shape index: {}]
  %s1 = inlined_call_operand.vmem [shape: f32[16,8], index: 1, kind: input, shape index: {}]
  %s2 = inlined_call_operand.hbm [shape: f32[8,32], index: 2, kind: input, shape index: {}]
  %s3 = inlined_call_operand.hbm [shape: f32[1,32], index: 3, kind: input, shape index: {}]
  %s4 = inlined_call_operand.vmem [shape: f32[32,32], index: 4, kind: input, shape index: {}]
  %s5 = inlined_call_operand.hbm [shape: f32[1,32], index: 5, kind: input, shape index: {}]
  %s6 = inlined_call_operand.hbm [shape: f32[32,2304], index: 6, kind: input, shape index: {}]
  %s7 = inlined_call_operand.vmem [shape: f32[1,2304], index: 7, kind: input, shape index: {}]
  %s8 = inlined_call_operand.hbm [shape: f32[1024,128], index: 8, kind: input, shape index: {}]
  %s9 = inlined_call_operand.hbm [shape: f32[128,1024], index: 9, kind: input, shape index: {}]
  %s10 = inlined_call_operand.hbm [shape: f32[1024,128], index: 10, kind: input, shape index: {}]
  %s11 = inlined_call_operand.hbm [shape: f32[16,128], index: 11, kind: output, shape index: {}]
  %s12 = sld [smem:[#allocation0]]
  $region86: #{tpu_custom_call.1} parent=0
    _
  %s14 = ssub.s32 1, %s12
  %s15 = scalar_select 0, %s14, %s12
  $region1: #{tpu_custom_call.1} parent=0
    #allocation2 [shape = 'u8[8192]{0}', space=vmem, size = 0x2000, scoped, tag = 'input window, operand 0, single buffered']
    #allocation3 [shape = 's32[1]{0}', space=sflag, size = 0x4, scoped, tag = 'scoped memory for tpu_custom_call.1']
    #allocation4 [shape = 's32[1]{0}', space=sflag, size = 0x4, scoped, tag = 'scoped memory for tpu_custom_call.1']
    #allocation5 [shape = 'u8[4096]{0}', space=vmem, size = 0x1000, scoped, tag = 'input window, operand 2, single buffered']
    #allocation6 [shape = 's32[1]{0}', space=sflag, size = 0x4, scoped, tag = 'scoped memory for tpu_custom_call.1']
    #allocation7 [shape = 'u8[512]{0}', space=vmem, size = 0x400, scoped, tag = 'input window, operand 3, single buffered']
    #allocation8 [shape = 'u8[512]{0}', space=vmem, size = 0x400, scoped, tag = 'input window, operand 5, single buffered']
    #allocation9 [shape = 's32[1]{0}', space=sflag, size = 0x4, scoped, tag = 'scoped memory for tpu_custom_call.1']
    #allocation10 [shape = 'u8[294912]{0}', space=vmem, size = 0x48000, scoped, tag = 'input window, operand 6, single buffered']
    #allocation11 [shape = 'u8[524288]{0}', space=vmem, size = 0x80000, scoped, tag = 'input window, operand 8, single buffered']
    #allocation12 [shape = 's32[1]{0}', space=sflag, size = 0x4, scoped, tag = 'scoped memory for tpu_custom_call.1']
    #allocation13 [shape = 'u8[524288]{0}', space=vmem, size = 0x80000, scoped, tag = 'input window, operand 9, single buffered']
    #allocation14 [shape = 'u8[524288]{0}', space=vmem, size = 0x80000, scoped, tag = 'input window, operand 10, single buffered']
    #allocation15 [shape = 's32[1]{0}', space=sflag, size = 0x4, scoped, tag = 'scoped memory for tpu_custom_call.1']
    #allocation16 [shape = 'u8[8192]{0}', space=vmem, size = 0x2000, scoped, tag = 'output window, operand 0, single buffered']
    %16 = vsyncpa [#allocation3], 0
    %17 = vsyncpa [#allocation6], 0
    %18 = vsyncpa [#allocation9], 0
    %19 = vsyncpa [#allocation12], 0
    %20 = vsyncpa [#allocation15], 0
    %21 = vsyncpa [#allocation4], 0
    // Predicated region
    $region2: #{tpu_custom_call.1} parent=1 // pred_check
      _
    $region3: #{tpu_custom_call.1} parent=1 // pred_check_branch
      %23 = sbr.rel (0) target = $region5
    $region4: #{tpu_custom_call.1} parent=1 // pred_region
      %s25 = ssub.s32 256, 256
      %26 = vsyncadd [#allocation3], %s25
      %s27 = sshll.u32 [#allocation2], 4
      %s28 = int_to_ptr.vmem [resolvable:$true] %s27
      %33 = dma.hbm_to_vmem [thread:$0]  %s0, 256, %s28, [#allocation3], 128, 128, 8
    $region5: #{tpu_custom_call.1} parent=1 // pred_fallthru
      _
    // Predicated region
    $region6: #{tpu_custom_call.1} parent=1 // pred_check
      _
    $region7: #{tpu_custom_call.1} parent=1 // pred_check_branch
      %35 = sbr.rel (0) target = $region9
    $region8: #{tpu_custom_call.1} parent=1 // pred_region
      _
    $region9: #{tpu_custom_call.1} parent=1 // pred_fallthru
      _
    // Predicated region
    $region10: #{tpu_custom_call.1} parent=1 // pred_check
      _
    $region11: #{tpu_custom_call.1} parent=1 // pred_check_branch
      %37 = sbr.rel (0) target = $region13
    $region12: #{tpu_custom_call.1} parent=1 // pred_region
      %s39 = ssub.s32 128, 128
      %40 = vsyncadd [#allocation6], %s39
      %s42 = sshll.u32 [#allocation5], 4
      %s43 = int_to_ptr.vmem [resolvable:$true] %s42
      %45 = dma.hbm_to_vmem [thread:$0]  %s2, 128, %s43, [#allocation6]
    $region13: #{tpu_custom_call.1} parent=1 // pred_fallthru
      _
    // Predicated region
    $region14: #{tpu_custom_call.1} parent=1 // pred_check
      _
    $region15: #{tpu_custom_call.1} parent=1 // pred_check_branch
      %47 = sbr.rel (0) target = $region17
    $region16: #{tpu_custom_call.1} parent=1 // pred_region
      %s49 = ssub.s32 16, 16
      %50 = vsyncadd [#allocation6], %s49
      %s52 = sshll.u32 [#allocation7], 4
      %s53 = int_to_ptr.vmem [resolvable:$true] %s52
      %55 = dma.hbm_to_vmem [thread:$0]  %s3, 16, %s53, [#allocation6]
    $region17: #{tpu_custom_call.1} parent=1 // pred_fallthru
      _
    // Predicated region
    $region18: #{tpu_custom_call.1} parent=1 // pred_check
      _
    $region19: #{tpu_custom_call.1} parent=1 // pred_check_branch
      %57 = sbr.rel (0) target = $region21
    $region20: #{tpu_custom_call.1} parent=1 // pred_region
      _
    $region21: #{tpu_custom_call.1} parent=1 // pred_fallthru
      _
    // Predicated region
    $region22: #{tpu_custom_call.1} parent=1 // pred_check
      _
    $region23: #{tpu_custom_call.1} parent=1 // pred_check_branch
      %59 = sbr.rel (0) target = $region25
    $region24: #{tpu_custom_call.1} parent=1 // pred_region
      %s61 = ssub.s32 16, 16
      %62 = vsyncadd [#allocation9], %s61
      %s64 = sshll.u32 [#allocation8], 4
      %s65 = int_to_ptr.vmem [resolvable:$true] %s64
      %67 = dma.hbm_to_vmem [thread:$0]  %s5, 16, %s65, [#allocation9]
    $region25: #{tpu_custom_call.1} parent=1 // pred_fallthru
      _
    // Predicated region
    $region26: #{tpu_custom_call.1} parent=1 // pred_check
      _
    $region27: #{tpu_custom_call.1} parent=1 // pred_check_branch
      %69 = sbr.rel (0) target = $region29
    $region28: #{tpu_custom_call.1} parent=1 // pred_region
      %s71 = ssub.s32 9216, 9216
      %72 = vsyncadd [#allocation9], %s71
      %s73 = sshll.u32 [#allocation10], 4
      %s74 = int_to_ptr.vmem [resolvable:$true] %s73
      %79 = dma.hbm_to_vmem [thread:$0]  %s6, 9216, %s74, [#allocation9], 2304, 2304, 144
    $region29: #{tpu_custom_call.1} parent=1 // pred_fallthru
      _
    // Predicated region
    $region30: #{tpu_custom_call.1} parent=1 // pred_check
      _
    $region31: #{tpu_custom_call.1} parent=1 // pred_check_branch
      %81 = sbr.rel (0) target = $region33
    $region32: #{tpu_custom_call.1} parent=1 // pred_region
      _
    $region33: #{tpu_custom_call.1} parent=1 // pred_fallthru
      _
    // Predicated region
    $region34: #{tpu_custom_call.1} parent=1 // pred_check
      _
    $region35: #{tpu_custom_call.1} parent=1 // pred_check_branch
      %83 = sbr.rel (0) target = $region37
    $region36: #{tpu_custom_call.1} parent=1 // pred_region
      %s85 = ssub.s32 16384, 16384
      %86 = vsyncadd [#allocation12], %s85
      %s87 = sshll.u32 [#allocation11], 4
      %s88 = int_to_ptr.vmem [resolvable:$true] %s87
      %93 = dma.hbm_to_vmem [thread:$0]  %s8, 16384, %s88, [#allocation12], 128, 128, 8
    $region37: #{tpu_custom_call.1} parent=1 // pred_fallthru
      _
    // Predicated region
    $region38: #{tpu_custom_call.1} parent=1 // pred_check
      _
    $region39: #{tpu_custom_call.1} parent=1 // pred_check_branch
      %95 = sbr.rel (0) target = $region41
    $region40: #{tpu_custom_call.1} parent=1 // pred_region
      %s97 = ssub.s32 16384, 16384
      %98 = vsyncadd [#allocation12], %s97
      %s99 = sshll.u32 [#allocation13], 4
      %s100 = int_to_ptr.vmem [resolvable:$true] %s99
      %105 = dma.hbm_to_vmem [thread:$0]  %s9, 16384, %s100, [#allocation12], 1024, 1024, 64
    $region41: #{tpu_custom_call.1} parent=1 // pred_fallthru
      _
    // Predicated region
    $region42: #{tpu_custom_call.1} parent=1 // pred_check
      _
    $region43: #{tpu_custom_call.1} parent=1 // pred_check_branch
      %107 = sbr.rel (0) target = $region45
    $region44: #{tpu_custom_call.1} parent=1 // pred_region
      %s109 = ssub.s32 16384, 16384
      %110 = vsyncadd [#allocation15], %s109
      %s111 = sshll.u32 [#allocation14], 4
      %s112 = int_to_ptr.vmem [resolvable:$true] %s111
      %117 = dma.hbm_to_vmem [thread:$0]  %s10, 16384, %s112, [#allocation15], 128, 128, 8
    $region45: #{tpu_custom_call.1} parent=1 // pred_fallthru
      _
    // Predicated region
    $region46: #{tpu_custom_call.1} parent=1 // pred_check
      _
    $region47: #{tpu_custom_call.1} parent=1 // pred_check_branch
      %119 = sbr.rel (0) target = $region49
    $region48: #{tpu_custom_call.1} parent=1 // pred_region
      %120 = dma.done [#allocation3], 256
    $region49: #{tpu_custom_call.1} parent=1 // pred_fallthru
      _
    // Predicated region
    $region50: #{tpu_custom_call.1} parent=1 // pred_check
      _
    $region51: #{tpu_custom_call.1} parent=1 // pred_check_branch
      %122 = sbr.rel (0) target = $region53
    $region52: #{tpu_custom_call.1} parent=1 // pred_region
      %123 = dma.done [#allocation6], 128
    $region53: #{tpu_custom_call.1} parent=1 // pred_fallthru
      _
    // Predicated region
    $region54: #{tpu_custom_call.1} parent=1 // pred_check
      _
    $region55: #{tpu_custom_call.1} parent=1 // pred_check_branch
      %125 = sbr.rel (0) target = $region57
    $region56: #{tpu_custom_call.1} parent=1 // pred_region
      %126 = dma.done [#allocation6], 16
    $region57: #{tpu_custom_call.1} parent=1 // pred_fallthru
      _
    // Predicated region
    $region58: #{tpu_custom_call.1} parent=1 // pred_check
      _
    $region59: #{tpu_custom_call.1} parent=1 // pred_check_branch
      %128 = sbr.rel (0) target = $region61
    $region60: #{tpu_custom_call.1} parent=1 // pred_region
      %129 = dma.done [#allocation9], 16
    $region61: #{tpu_custom_call.1} parent=1 // pred_fallthru
      _
    // Predicated region
    $region62: #{tpu_custom_call.1} parent=1 // pred_check
      _
    $region63: #{tpu_custom_call.1} parent=1 // pred_check_branch
      %131 = sbr.rel (0) target = $region65
    $region64: #{tpu_custom_call.1} parent=1 // pred_region
      %132 = dma.done [#allocation9], 9216
    $region65: #{tpu_custom_call.1} parent=1 // pred_fallthru
      _
    // Predicated region
    $region66: #{tpu_custom_call.1} parent=1 // pred_check
      _
    $region67: #{tpu_custom_call.1} parent=1 // pred_check_branch
      %134 = sbr.rel (0) target = $region69
    $region68: #{tpu_custom_call.1} parent=1 // pred_region
      %135 = dma.done [#allocation12], 16384
    $region69: #{tpu_custom_call.1} parent=1 // pred_fallthru
      _
    // Predicated region
    $region70: #{tpu_custom_call.1} parent=1 // pred_check
      _
    $region71: #{tpu_custom_call.1} parent=1 // pred_check_branch
      %137 = sbr.rel (0) target = $region73
    $region72: #{tpu_custom_call.1} parent=1 // pred_region
      %138 = dma.done [#allocation12], 16384
    $region73: #{tpu_custom_call.1} parent=1 // pred_fallthru
      _
    // Predicated region
    $region74: #{tpu_custom_call.1} parent=1 // pred_check
      _
    $region75: #{tpu_custom_call.1} parent=1 // pred_check_branch
      %140 = sbr.rel (0) target = $region77
    $region76: #{tpu_custom_call.1} parent=1 // pred_region
      %141 = dma.done [#allocation15], 16384
    $region77: #{tpu_custom_call.1} parent=1 // pred_fallthru
      _
    %v142 = vld [vmem:[%s1] sm:$0xff]
    %v143 = vld [vmem:[%s1 + $0x8] sm:$0xff]
    %v144 = vld [vmem:[#allocation5] sm:$0xff]
    %v145 = vld [vmem:[#allocation7] sm:$0x1]
    %v147 = vlaneseq
    %v148 = vshrl.u32 %v147, 7
    %v149 = vsub.s32 0, %v148
    %v150 = vrot.slane %v145, %v149
    %vm152 = vcmask 64512
    %v154 = vsel %vm152, %v142, 0
    %v157 = vsel %vm152, %v143, 0
    %159 = vmatprep.subr.mxu0 0.0
    %160 = vmatpush1.msra.mxu0 %v144
    %161 = vmatprep.subr.mxu0 0.0
    %162 = vmatpush1.msra.mxu0 0.0
    %163 = vmatprep.subr.mxu0 0.0
    %164 = vmatpush1.msra.mxu0 0.0
    %165 = vmatprep.subr.mxu0 0.0
    %166 = vmatpush1.msra.mxu0 0.0
    %167 = vmatprep.subr.mxu0 0.0
    %168 = vmatpush1.msra.mxu0 0.0
    %169 = vmatprep.subr.mxu0 0.0
    %170 = vmatpush1.msra.mxu0 0.0
    %171 = vmatprep.subr.mxu0 0.0
    %172 = vmatpush1.msra.mxu0 0.0
    %173 = vmatprep.subr.mxu0 0.0
    %174 = vmatpush1.msra.mxu0 0.0
    %175 = vmatprep.subr.mxu0 0.0
    %176 = vmatpush1.msra.mxu0 0.0
    %177 = vmatprep.subr.mxu0 0.0
    %178 = vmatpush1.msra.mxu0 0.0
    %179 = vmatprep.subr.mxu0 0.0
    %180 = vmatpush1.msra.mxu0 0.0
    %181 = vmatprep.subr.mxu0 0.0
    %182 = vmatpush1.msra.mxu0 0.0
    %183 = vmatprep.subr.mxu0 0.0
    %184 = vmatpush1.msra.mxu0 0.0
    %185 = vmatprep.subr.mxu0 0.0
    %186 = vmatpush1.msra.mxu0 0.0
    %187 = vmatprep.subr.mxu0 0.0
    %188 = vmatpush1.msra.mxu0 0.0
    %189 = vmatprep.subr.mxu0 0.0
    %190 = vmatpush1.msra.mxu0 0.0
    %191 = vmatprep.subr.mxu0 0.0
    %192 = vmatpush1.msra.mxu0 0.0
    %193 = vmatprep.subr.mxu0 0.0
    %194 = vmatpush1.msra.mxu0 0.0
    %195 = vmatprep.subr.mxu0 0.0
    %196 = vmatpush1.msra.mxu0 0.0
    %197 = vmatprep.subr.mxu0 0.0
    %198 = vmatpush1.msra.mxu0 0.0
    %199 = vmatprep.subr.mxu0 0.0
    %200 = vmatpush1.msra.mxu0 0.0
    %201 = vmatprep.subr.mxu0 0.0
    %202 = vmatpush1.msra.mxu0 0.0
    %203 = vmatprep.subr.mxu0 0.0
    %204 = vmatpush1.msra.mxu0 0.0
    %205 = vmatprep.subr.mxu0 0.0
    %206 = vmatpush1.msra.mxu0 0.0
    %207 = vmatprep.subr.mxu0 0.0
    %208 = vmatpush1.msra.mxu0 0.0
    %209 = vmatprep.subr.mxu0 0.0
    %210 = vmatpush1.msra.mxu0 0.0
    %211 = vmatprep.subr.mxu0 0.0
    %212 = vmatpush1.msra.mxu0 0.0
    %213 = vmatprep.subr.mxu0 0.0
    %214 = vmatpush1.msra.mxu0 0.0
    %215 = vmatprep.subr.mxu0 0.0
    %216 = vmatpush1.msra.mxu0 0.0
    %217 = vmatprep.subr.mxu0 0.0
    %218 = vmatpush1.msra.mxu0 0.0
    %219 = vmatprep.subr.mxu0 0.0
    %220 = vmatpush1.msra.mxu0 0.0
    %221 = vmatprep.subr.mxu0 0.0
    %222 = vmatpush1.msra.mxu0 0.0
    %223 = vmatprep.mubr.f32.mxu0 0.0
    %224 = vmatmul.mubr.f32.gmra.mrb[0].mxu0 %v154
    %v225 = vpop.f32.mrb[0].mxu0
    %v226 = vadd.f32 %v150, %v225
    %v227 = vpop.f32.mrb[0].mxu0
    %228 = vmatprep.mubr.f32.mxu0 0.0
    %229 = vmatmul.mubr.f32.gmra.mrb[0].mxu0 %v157
    %v230 = vpop.f32.mrb[0].mxu0
    %v231 = vadd.f32 %v150, %v230
    %v232 = vpop.f32.mrb[0].mxu0
    %233 = vdwg.mxu0
    %v234 = vmax.f32 %v226, 0.0
    %v235 = vmax.f32 %v231, 0.0
    %v236 = vld [vmem:[%s4] sm:$0xff]
    %v237 = vld [vmem:[%s4 + $0x8] sm:$0xff]
    %v238 = vld [vmem:[%s4 + $0x10] sm:$0xff]
    %v239 = vld [vmem:[%s4 + $0x18] sm:$0xff]
    %v240 = vld [vmem:[#allocation8] sm:$0x1]
    %v242 = vlaneseq
    %v243 = vshrl.u32 %v242, 7
    %v244 = vsub.s32 0, %v243
    %v245 = vrot.slane %v240, %v244
    %vm247 = vcmask 261120
    %v249 = vsel %vm247, %v234, 0
    %v252 = vsel %vm247, %v235, 0
    %254 = vmatprep.subr.mxu0 0.0
    %255 = vmatpush1.msra.mxu0 %v236
    %256 = vmatprep.subr.mxu0 0.0
    %257 = vmatpush1.msra.mxu0 %v237
    %258 = vmatprep.subr.mxu0 0.0
    %259 = vmatpush1.msra.mxu0 %v238
    %260 = vmatprep.subr.mxu0 0.0
    %261 = vmatpush1.msra.mxu0 %v239
    %262 = vmatprep.subr.mxu0 0.0
    %263 = vmatpush1.msra.mxu0 0.0
    %264 = vmatprep.subr.mxu0 0.0
    %265 = vmatpush1.msra.mxu0 0.0
    %266 = vmatprep.subr.mxu0 0.0
    %267 = vmatpush1.msra.mxu0 0.0
    %268 = vmatprep.subr.mxu0 0.0
    %269 = vmatpush1.msra.mxu0 0.0
    %270 = vmatprep.subr.mxu0 0.0
    %271 = vmatpush1.msra.mxu0 0.0
    %272 = vmatprep.subr.mxu0 0.0
    %273 = vmatpush1.msra.mxu0 0.0
    %274 = vmatprep.subr.mxu0 0.0
    %275 = vmatpush1.msra.mxu0 0.0
    %276 = vmatprep.subr.mxu0 0.0
    %277 = vmatpush1.msra.mxu0 0.0
    %278 = vmatprep.subr.mxu0 0.0
    %279 = vmatpush1.msra.mxu0 0.0
    %280 = vmatprep.subr.mxu0 0.0
    %281 = vmatpush1.msra.mxu0 0.0
    %282 = vmatprep.subr.mxu0 0.0
    %283 = vmatpush1.msra.mxu0 0.0
    %284 = vmatprep.subr.mxu0 0.0
    %285 = vmatpush1.msra.mxu0 0.0
    %286 = vmatprep.subr.mxu0 0.0
    %287 = vmatpush1.msra.mxu0 0.0
    %288 = vmatprep.subr.mxu0 0.0
    %289 = vmatpush1.msra.mxu0 0.0
    %290 = vmatprep.subr.mxu0 0.0
    %291 = vmatpush1.msra.mxu0 0.0
    %292 = vmatprep.subr.mxu0 0.0
    %293 = vmatpush1.msra.mxu0 0.0
    %294 = vmatprep.subr.mxu0 0.0
    %295 = vmatpush1.msra.mxu0 0.0
    %296 = vmatprep.subr.mxu0 0.0
    %297 = vmatpush1.msra.mxu0 0.0
    %298 = vmatprep.subr.mxu0 0.0
    %299 = vmatpush1.msra.mxu0 0.0
    %300 = vmatprep.subr.mxu0 0.0
    %301 = vmatpush1.msra.mxu0 0.0
    %302 = vmatprep.subr.mxu0 0.0
    %303 = vmatpush1.msra.mxu0 0.0
    %304 = vmatprep.subr.mxu0 0.0
    %305 = vmatpush1.msra.mxu0 0.0
    %306 = vmatprep.subr.mxu0 0.0
    %307 = vmatpush1.msra.mxu0 0.0
    %308 = vmatprep.subr.mxu0 0.0
    %309 = vmatpush1.msra.mxu0 0.0
    %310 = vmatprep.subr.mxu0 0.0
    %311 = vmatpush1.msra.mxu0 0.0
    %312 = vmatprep.subr.mxu0 0.0
    %313 = vmatpush1.msra.mxu0 0.0
    %314 = vmatprep.subr.mxu0 0.0
    %315 = vmatpush1.msra.mxu0 0.0
    %316 = vmatprep.subr.mxu0 0.0
    %317 = vmatpush1.msra.mxu0 0.0
    %318 = vmatprep.mubr.f32.mxu0 0.0
    %319 = vmatmul.mubr.f32.gmra.mrb[0].mxu0 %v249
    %v320 = vpop.f32.mrb[0].mxu0
    %v321 = vadd.f32 %v245, %v320
    %v322 = vpop.f32.mrb[0].mxu0
    %323 = vmatprep.mubr.f32.mxu0 0.0
    %324 = vmatmul.mubr.f32.gmra.mrb[0].mxu0 %v252
    %v325 = vpop.f32.mrb[0].mxu0
    %v326 = vadd.f32 %v245, %v325
    %v327 = vpop.f32.mrb[0].mxu0
    %328 = vdwg.mxu0
    %v329 = vmax.f32 %v321, 0.0
    %v330 = vmax.f32 %v326, 0.0
    %v331 = vld [vmem:[#allocation2] sm:$0xff]
    %v332 = vld [vmem:[#allocation2 + $0x8] sm:$0xff]
    %v333 = vld [vmem:[#allocation10 + $0x80] sm:$0xff]
    %v334 = vld [vmem:[#allocation10 + $0x110] sm:$0xff]
    %v335 = vld [vmem:[#allocation10 + $0x1a0] sm:$0xff]
    %v336 = vld [vmem:[#allocation10 + $0x230] sm:$0xff]
    %v337 = vld [vmem:[%s7 + $0x10] sm:$0x1]
    %v339 = vlaneseq
    %v340 = vshrl.u32 %v339, 7
    %v341 = vsub.s32 0, %v340
    %v342 = vrot.slane %v337, %v341
    %v345 = vsel %vm247, %v329, 0
    %v348 = vsel %vm247, %v330, 0
    %350 = vmatprep.subr.mxu0 0.0
    %351 = vmatpush1.msra.mxu0 %v333
    %352 = vmatprep.subr.mxu0 0.0
    %353 = vmatpush1.msra.mxu0 %v334
    %354 = vmatprep.subr.mxu0 0.0
    %355 = vmatpush1.msra.mxu0 %v335
    %356 = vmatprep.subr.mxu0 0.0
    %357 = vmatpush1.msra.mxu0 %v336
    %358 = vmatprep.subr.mxu0 0.0
    %359 = vmatpush1.msra.mxu0 0.0
    %360 = vmatprep.subr.mxu0 0.0
    %361 = vmatpush1.msra.mxu0 0.0
    %362 = vmatprep.subr.mxu0 0.0
    %363 = vmatpush1.msra.mxu0 0.0
    %364 = vmatprep.subr.mxu0 0.0
    %365 = vmatpush1.msra.mxu0 0.0
    %366 = vmatprep.subr.mxu0 0.0
    %367 = vmatpush1.msra.mxu0 0.0
    %368 = vmatprep.subr.mxu0 0.0
    %369 = vmatpush1.msra.mxu0 0.0
    %370 = vmatprep.subr.mxu0 0.0
    %371 = vmatpush1.msra.mxu0 0.0
    %372 = vmatprep.subr.mxu0 0.0
    %373 = vmatpush1.msra.mxu0 0.0
    %374 = vmatprep.subr.mxu0 0.0
    %375 = vmatpush1.msra.mxu0 0.0
    %376 = vmatprep.subr.mxu0 0.0
    %377 = vmatpush1.msra.mxu0 0.0
    %378 = vmatprep.subr.mxu0 0.0
    %379 = vmatpush1.msra.mxu0 0.0
    %380 = vmatprep.subr.mxu0 0.0
    %381 = vmatpush1.msra.mxu0 0.0
    %382 = vmatprep.subr.mxu0 0.0
    %383 = vmatpush1.msra.mxu0 0.0
    %384 = vmatprep.subr.mxu0 0.0
    %385 = vmatpush1.msra.mxu0 0.0
    %386 = vmatprep.subr.mxu0 0.0
    %387 = vmatpush1.msra.mxu0 0.0
    %388 = vmatprep.subr.mxu0 0.0
    %389 = vmatpush1.msra.mxu0 0.0
    %390 = vmatprep.subr.mxu0 0.0
    %391 = vmatpush1.msra.mxu0 0.0
    %392 = vmatprep.subr.mxu0 0.0
    %393 = vmatpush1.msra.mxu0 0.0
    %394 = vmatprep.subr.mxu0 0.0
    %395 = vmatpush1.msra.mxu0 0.0
    %396 = vmatprep.subr.mxu0 0.0
    %397 = vmatpush1.msra.mxu0 0.0
    %398 = vmatprep.subr.mxu0 0.0
    %399 = vmatpush1.msra.mxu0 0.0
    %400 = vmatprep.subr.mxu0 0.0
    %401 = vmatpush1.msra.mxu0 0.0
    %402 = vmatprep.subr.mxu0 0.0
    %403 = vmatpush1.msra.mxu0 0.0
    %404 = vmatprep.subr.mxu0 0.0
    %405 = vmatpush1.msra.mxu0 0.0
    %406 = vmatprep.subr.mxu0 0.0
    %407 = vmatpush1.msra.mxu0 0.0
    %408 = vmatprep.subr.mxu0 0.0
    %409 = vmatpush1.msra.mxu0 0.0
    %410 = vmatprep.subr.mxu0 0.0
    %411 = vmatpush1.msra.mxu0 0.0
    %412 = vmatprep.subr.mxu0 0.0
    %413 = vmatpush1.msra.mxu0 0.0
    %414 = vmatprep.mubr.f32.mxu0 0.0
    %415 = vmatmul.mubr.f32.gmra.mrb[0].mxu0 %v345
    %v416 = vpop.f32.mrb[0].mxu0
    %v417 = vadd.f32 %v342, %v416
    %v418 = vpop.f32.mrb[0].mxu0
    %419 = vmatprep.mubr.f32.mxu0 0.0
    %420 = vmatmul.mubr.f32.gmra.mrb[0].mxu0 %v348
    %v421 = vpop.f32.mrb[0].mxu0
    %v422 = vadd.f32 %v342, %v421
    %v423 = vpop.f32.mrb[0].mxu0
    %424 = vdwg.mxu0
    %v425 = vtanh.pop %v417
    %v426 = vtanh.pop %v422
    %v427 = vmul.f32 %v425, 5.0
    %v428 = vmul.f32 %v426, 5.0
    %v429 = vld [vmem:[#allocation10 + $0x88] sm:$0xff]
    %v430 = vld [vmem:[#allocation10 + $0x118] sm:$0xff]
    %v431 = vld [vmem:[#allocation10 + $0x1a8] sm:$0xff]
    %v432 = vld [vmem:[#allocation10 + $0x238] sm:$0xff]
    %v433 = vld [vmem:[%s7 + $0x11] sm:$0x1]
    %v435 = vlaneseq
    %v436 = vshrl.u32 %v435, 7
    %v437 = vsub.s32 0, %v436
    %v438 = vrot.slane %v433, %v437
    %440 = vmatprep.subr.mxu0 0.0
    %441 = vmatpush1.msra.mxu0 %v429
    %442 = vmatprep.subr.mxu0 0.0
    %443 = vmatpush1.msra.mxu0 %v430
    %444 = vmatprep.subr.mxu0 0.0
    %445 = vmatpush1.msra.mxu0 %v431
    %446 = vmatprep.subr.mxu0 0.0
    %447 = vmatpush1.msra.mxu0 %v432
    %448 = vmatprep.subr.mxu0 0.0
    %449 = vmatpush1.msra.mxu0 0.0
    %450 = vmatprep.subr.mxu0 0.0
    %451 = vmatpush1.msra.mxu0 0.0
    %452 = vmatprep.subr.mxu0 0.0
    %453 = vmatpush1.msra.mxu0 0.0
    %454 = vmatprep.subr.mxu0 0.0
    %455 = vmatpush1.msra.mxu0 0.0
    %456 = vmatprep.subr.mxu0 0.0
    %457 = vmatpush1.msra.mxu0 0.0
    %458 = vmatprep.subr.mxu0 0.0
    %459 = vmatpush1.msra.mxu0 0.0
    %460 = vmatprep.subr.mxu0 0.0
    %461 = vmatpush1.msra.mxu0 0.0
    %462 = vmatprep.subr.mxu0 0.0
    %463 = vmatpush1.msra.mxu0 0.0
    %464 = vmatprep.subr.mxu0 0.0
    %465 = vmatpush1.msra.mxu0 0.0
    %466 = vmatprep.subr.mxu0 0.0
    %467 = vmatpush1.msra.mxu0 0.0
    %468 = vmatprep.subr.mxu0 0.0
    %469 = vmatpush1.msra.mxu0 0.0
    %470 = vmatprep.subr.mxu0 0.0
    %471 = vmatpush1.msra.mxu0 0.0
    %472 = vmatprep.subr.mxu0 0.0
    %473 = vmatpush1.msra.mxu0 0.0
    %474 = vmatprep.subr.mxu0 0.0
    %475 = vmatpush1.msra.mxu0 0.0
    %476 = vmatprep.subr.mxu0 0.0
    %477 = vmatpush1.msra.mxu0 0.0
    %478 = vmatprep.subr.mxu0 0.0
    %479 = vmatpush1.msra.mxu0 0.0
    %480 = vmatprep.subr.mxu0 0.0
    %481 = vmatpush1.msra.mxu0 0.0
    %482 = vmatprep.subr.mxu0 0.0
    %483 = vmatpush1.msra.mxu0 0.0
    %484 = vmatprep.subr.mxu0 0.0
    %485 = vmatpush1.msra.mxu0 0.0
    %486 = vmatprep.subr.mxu0 0.0
    %487 = vmatpush1.msra.mxu0 0.0
    %488 = vmatprep.subr.mxu0 0.0
    %489 = vmatpush1.msra.mxu0 0.0
    %490 = vmatprep.subr.mxu0 0.0
    %491 = vmatpush1.msra.mxu0 0.0
    %492 = vmatprep.subr.mxu0 0.0
    %493 = vmatpush1.msra.mxu0 0.0
    %494 = vmatprep.subr.mxu0 0.0
    %495 = vmatpush1.msra.mxu0 0.0
    %496 = vmatprep.subr.mxu0 0.0
    %497 = vmatpush1.msra.mxu0 0.0
    %498 = vmatprep.subr.mxu0 0.0
    %499 = vmatpush1.msra.mxu0 0.0
    %500 = vmatprep.subr.mxu0 0.0
    %501 = vmatpush1.msra.mxu0 0.0
    %502 = vmatprep.subr.mxu0 0.0
    %503 = vmatpush1.msra.mxu0 0.0
    %504 = vmatprep.mubr.f32.mxu0 0.0
    %505 = vmatmul.mubr.f32.gmra.mrb[0].mxu0 %v345
    %v506 = vpop.f32.mrb[0].mxu0
    %v507 = vadd.f32 %v438, %v506
    %v508 = vpop.f32.mrb[0].mxu0
    %509 = vmatprep.mubr.f32.mxu0 0.0
    %510 = vmatmul.mubr.f32.gmra.mrb[0].mxu0 %v348
    %v511 = vpop.f32.mrb[0].mxu0
    %v512 = vadd.f32 %v438, %v511
    %v513 = vpop.f32.mrb[0].mxu0
    %514 = vdwg.mxu0
    %v515 = vtanh.pop %v507
    %v516 = vtanh.pop %v512
    %v517 = vmul.f32 %v515, 5.0
    %v518 = vmul.f32 %v516, 5.0
    %v519 = vld [vmem:[#allocation10] sm:$0xff]
    %v520 = vld [vmem:[#allocation10 + $0x8] sm:$0xff]
    %v521 = vld [vmem:[#allocation10 + $0x10] sm:$0xff]
    %v522 = vld [vmem:[#allocation10 + $0x18] sm:$0xff]
    %v523 = vld [vmem:[#allocation10 + $0x20] sm:$0xff]
    %v524 = vld [vmem:[#allocation10 + $0x28] sm:$0xff]
    %v525 = vld [vmem:[#allocation10 + $0x30] sm:$0xff]
    %v526 = vld [vmem:[#allocation10 + $0x38] sm:$0xff]
    %v527 = vld [vmem:[#allocation10 + $0x90] sm:$0xff]
    %v528 = vld [vmem:[#allocation10 + $0x98] sm:$0xff]
    %v529 = vld [vmem:[#allocation10 + $0xa0] sm:$0xff]
    %v530 = vld [vmem:[#allocation10 + $0xa8] sm:$0xff]
    %v531 = vld [vmem:[#allocation10 + $0xb0] sm:$0xff]
    %v532 = vld [vmem:[#allocation10 + $0xb8] sm:$0xff]
    %v533 = vld [vmem:[#allocation10 + $0xc0] sm:$0xff]
    %v534 = vld [vmem:[#allocation10 + $0xc8] sm:$0xff]
    %v535 = vld [vmem:[#allocation10 + $0x120] sm:$0xff]
    %v536 = vld [vmem:[#allocation10 + $0x128] sm:$0xff]
    %v537 = vld [vmem:[#allocation10 + $0x130] sm:$0xff]
    %v538 = vld [vmem:[#allocation10 + $0x138] sm:$0xff]
    %v539 = vld [vmem:[#allocation10 + $0x140] sm:$0xff]
    %v540 = vld [vmem:[#allocation10 + $0x148] sm:$0xff]
    %v541 = vld [vmem:[#allocation10 + $0x150] sm:$0xff]
    %v542 = vld [vmem:[#allocation10 + $0x158] sm:$0xff]
    %v543 = vld [vmem:[#allocation10 + $0x1b0] sm:$0xff]
    %v544 = vld [vmem:[#allocation10 + $0x1b8] sm:$0xff]
    %v545 = vld [vmem:[#allocation10 + $0x1c0] sm:$0xff]
    %v546 = vld [vmem:[#allocation10 + $0x1c8] sm:$0xff]
    %v547 = vld [vmem:[#allocation10 + $0x1d0] sm:$0xff]
    %v548 = vld [vmem:[#allocation10 + $0x1d8] sm:$0xff]
    %v549 = vld [vmem:[#allocation10 + $0x1e0] sm:$0xff]
    %v550 = vld [vmem:[#allocation10 + $0x1e8] sm:$0xff]
    %v551 = vld [vmem:[%s7] sm:$0xff]
    %v553 = vlaneseq
    %v554 = vshrl.u32 %v553, 7
    %v555 = vsub.s32 0, %v554
    %v556 = vrot.slane %v551, %v555
    %v557 = vlaneseq
    %v558 = vshrl.u32 %v557, 7
    %v559 = vsub.s32 1, %v558
    %v560 = vrot.slane %v551, %v559
    %v561 = vlaneseq
    %v562 = vshrl.u32 %v561, 7
    %v563 = vsub.s32 2, %v562
    %v564 = vrot.slane %v551, %v563
    %v565 = vlaneseq
    %v566 = vshrl.u32 %v565, 7
    %v567 = vsub.s32 3, %v566
    %v568 = vrot.slane %v551, %v567
    %v569 = vlaneseq
    %v570 = vshrl.u32 %v569, 7
    %v571 = vsub.s32 4, %v570
    %v572 = vrot.slane %v551, %v571
    %v573 = vlaneseq
    %v574 = vshrl.u32 %v573, 7
    %v575 = vsub.s32 5, %v574
    %v576 = vrot.slane %v551, %v575
    %v577 = vlaneseq
    %v578 = vshrl.u32 %v577, 7
    %v579 = vsub.s32 6, %v578
    %v580 = vrot.slane %v551, %v579
    %v581 = vlaneseq
    %v582 = vshrl.u32 %v581, 7
    %v583 = vsub.s32 7, %v582
    %v584 = vrot.slane %v551, %v583
    %593 = vmatprep.subr.mxu0 %v520
    %594 = vmatpush1.msra.mxu0 %v519
    %595 = vmatprep.subr.mxu0 %v528
    %596 = vmatpush1.msra.mxu0 %v527
    %597 = vmatprep.subr.mxu0 %v536
    %598 = vmatpush1.msra.mxu0 %v535
    %599 = vmatprep.subr.mxu0 %v544
    %600 = vmatpush1.msra.mxu0 %v543
    %601 = vmatprep.subr.mxu0 0.0
    %602 = vmatpush1.msra.mxu0 0.0
    %603 = vmatprep.subr.mxu0 0.0
    %604 = vmatpush1.msra.mxu0 0.0
    %605 = vmatprep.subr.mxu0 0.0
    %606 = vmatpush1.msra.mxu0 0.0
    %607 = vmatprep.subr.mxu0 0.0
    %608 = vmatpush1.msra.mxu0 0.0
    %609 = vmatprep.subr.mxu0 0.0
    %610 = vmatpush1.msra.mxu0 0.0
    %611 = vmatprep.subr.mxu0 0.0
    %612 = vmatpush1.msra.mxu0 0.0
    %613 = vmatprep.subr.mxu0 0.0
    %614 = vmatpush1.msra.mxu0 0.0
    %615 = vmatprep.subr.mxu0 0.0
    %616 = vmatpush1.msra.mxu0 0.0
    %617 = vmatprep.subr.mxu0 0.0
    %618 = vmatpush1.msra.mxu0 0.0
    %619 = vmatprep.subr.mxu0 0.0
    %620 = vmatpush1.msra.mxu0 0.0
    %621 = vmatprep.subr.mxu0 0.0
    %622 = vmatpush1.msra.mxu0 0.0
    %623 = vmatprep.subr.mxu0 0.0
    %624 = vmatpush1.msra.mxu0 0.0
    %625 = vmatprep.subr.mxu0 0.0
    %626 = vmatpush1.msra.mxu0 0.0
    %627 = vmatprep.subr.mxu0 0.0
    %628 = vmatpush1.msra.mxu0 0.0
    %629 = vmatprep.subr.mxu0 0.0
    %630 = vmatpush1.msra.mxu0 0.0
    %631 = vmatprep.subr.mxu0 0.0
    %632 = vmatpush1.msra.mxu0 0.0
    %633 = vmatprep.subr.mxu0 0.0
    %634 = vmatpush1.msra.mxu0 0.0
    %635 = vmatprep.subr.mxu0 0.0
    %636 = vmatpush1.msra.mxu0 0.0
    %637 = vmatprep.subr.mxu0 0.0
    %638 = vmatpush1.msra.mxu0 0.0
    %639 = vmatprep.subr.mxu0 0.0
    %640 = vmatpush1.msra.mxu0 0.0
    %641 = vmatprep.subr.mxu0 0.0
    %642 = vmatpush1.msra.mxu0 0.0
    %643 = vmatprep.subr.mxu0 0.0
    %644 = vmatpush1.msra.mxu0 0.0
    %645 = vmatprep.subr.mxu0 0.0
    %646 = vmatpush1.msra.mxu0 0.0
    %647 = vmatprep.subr.mxu0 0.0
    %648 = vmatpush1.msra.mxu0 0.0
    %649 = vmatprep.subr.mxu0 0.0
    %650 = vmatpush1.msra.mxu0 0.0
    %651 = vmatprep.subr.mxu0 0.0
    %652 = vmatpush1.msra.mxu0 0.0
    %653 = vmatprep.subr.mxu0 0.0
    %654 = vmatpush1.msra.mxu0 0.0
    %655 = vmatprep.subr.mxu0 0.0
    %656 = vmatpush1.msra.mxu0 0.0
    %657 = vmatprep.mubr.f32.mxu0 0.0
    %658 = vmatmul.mubr.f32.gmra.mrb[0].mxu0 %v345
    %v659 = vpop.f32.mrb[0].mxu0
    %v660 = vadd.f32 %v556, %v659
    %v661 = vpop.f32.mrb[0].mxu0
    %v662 = vadd.f32 %v560, %v661
    %663 = vmatprep.mubr.f32.mxu0 0.0
    %664 = vmatmul.mubr.f32.gmra.mrb[0].mxu0 %v348
    %v665 = vpop.f32.mrb[0].mxu0
    %v666 = vadd.f32 %v556, %v665
    %v667 = vpop.f32.mrb[0].mxu0
    %v668 = vadd.f32 %v560, %v667
    %669 = vdwg.mxu0
    %670 = vmatprep.subr.mxu0 %v522
    %671 = vmatpush1.msra.mxu0 %v521
    %672 = vmatprep.subr.mxu0 %v530
    %673 = vmatpush1.msra.mxu0 %v529
    %674 = vmatprep.subr.mxu0 %v538
    %675 = vmatpush1.msra.mxu0 %v537
    %676 = vmatprep.subr.mxu0 %v546
    %677 = vmatpush1.msra.mxu0 %v545
    %678 = vmatprep.subr.mxu0 0.0
    %679 = vmatpush1.msra.mxu0 0.0
    %680 = vmatprep.subr.mxu0 0.0
    %681 = vmatpush1.msra.mxu0 0.0
    %682 = vmatprep.subr.mxu0 0.0
    %683 = vmatpush1.msra.mxu0 0.0
    %684 = vmatprep.subr.mxu0 0.0
    %685 = vmatpush1.msra.mxu0 0.0
    %686 = vmatprep.subr.mxu0 0.0
    %687 = vmatpush1.msra.mxu0 0.0
    %688 = vmatprep.subr.mxu0 0.0
    %689 = vmatpush1.msra.mxu0 0.0
    %690 = vmatprep.subr.mxu0 0.0
    %691 = vmatpush1.msra.mxu0 0.0
    %692 = vmatprep.subr.mxu0 0.0
    %693 = vmatpush1.msra.mxu0 0.0
    %694 = vmatprep.subr.mxu0 0.0
    %695 = vmatpush1.msra.mxu0 0.0
    %696 = vmatprep.subr.mxu0 0.0
    %697 = vmatpush1.msra.mxu0 0.0
    %698 = vmatprep.subr.mxu0 0.0
    %699 = vmatpush1.msra.mxu0 0.0
    %700 = vmatprep.subr.mxu0 0.0
    %701 = vmatpush1.msra.mxu0 0.0
    %702 = vmatprep.subr.mxu0 0.0
    %703 = vmatpush1.msra.mxu0 0.0
    %704 = vmatprep.subr.mxu0 0.0
    %705 = vmatpush1.msra.mxu0 0.0
    %706 = vmatprep.subr.mxu0 0.0
    %707 = vmatpush1.msra.mxu0 0.0
    %708 = vmatprep.subr.mxu0 0.0
    %709 = vmatpush1.msra.mxu0 0.0
    %710 = vmatprep.subr.mxu0 0.0
    %711 = vmatpush1.msra.mxu0 0.0
    %712 = vmatprep.subr.mxu0 0.0
    %713 = vmatpush1.msra.mxu0 0.0
    %714 = vmatprep.subr.mxu0 0.0
    %715 = vmatpush1.msra.mxu0 0.0
    %716 = vmatprep.subr.mxu0 0.0
    %717 = vmatpush1.msra.mxu0 0.0
    %718 = vmatprep.subr.mxu0 0.0
    %719 = vmatpush1.msra.mxu0 0.0
    %720 = vmatprep.subr.mxu0 0.0
    %721 = vmatpush1.msra.mxu0 0.0
    %722 = vmatprep.subr.mxu0 0.0
    %723 = vmatpush1.msra.mxu0 0.0
    %724 = vmatprep.subr.mxu0 0.0
    %725 = vmatpush1.msra.mxu0 0.0
    %726 = vmatprep.subr.mxu0 0.0
    %727 = vmatpush1.msra.mxu0 0.0
    %728 = vmatprep.subr.mxu0 0.0
    %729 = vmatpush1.msra.mxu0 0.0
    %730 = vmatprep.subr.mxu0 0.0
    %731 = vmatpush1.msra.mxu0 0.0
    %732 = vmatprep.subr.mxu0 0.0
    %733 = vmatpush1.msra.mxu0 0.0
    %734 = vmatprep.mubr.f32.mxu0 0.0
    %735 = vmatmul.mubr.f32.gmra.mrb[0].mxu0 %v345
    %v736 = vpop.f32.mrb[0].mxu0
    %v737 = vadd.f32 %v564, %v736
    %v738 = vpop.f32.mrb[0].mxu0
    %v739 = vadd.f32 %v568, %v738
    %740 = vmatprep.mubr.f32.mxu0 0.0
    %741 = vmatmul.mubr.f32.gmra.mrb[0].mxu0 %v348
    %v742 = vpop.f32.mrb[0].mxu0
    %v743 = vadd.f32 %v564, %v742
    %v744 = vpop.f32.mrb[0].mxu0
    %v745 = vadd.f32 %v568, %v744
    %746 = vdwg.mxu0
    %747 = vmatprep.subr.mxu0 %v524
    %748 = vmatpush1.msra.mxu0 %v523
    %749 = vmatprep.subr.mxu0 %v532
    %750 = vmatpush1.msra.mxu0 %v531
    %751 = vmatprep.subr.mxu0 %v540
    %752 = vmatpush1.msra.mxu0 %v539
    %753 = vmatprep.subr.mxu0 %v548
    %754 = vmatpush1.msra.mxu0 %v547
    %755 = vmatprep.subr.mxu0 0.0
    %756 = vmatpush1.msra.mxu0 0.0
    %757 = vmatprep.subr.mxu0 0.0
    %758 = vmatpush1.msra.mxu0 0.0
    %759 = vmatprep.subr.mxu0 0.0
    %760 = vmatpush1.msra.mxu0 0.0
    %761 = vmatprep.subr.mxu0 0.0
    %762 = vmatpush1.msra.mxu0 0.0
    %763 = vmatprep.subr.mxu0 0.0
    %764 = vmatpush1.msra.mxu0 0.0
    %765 = vmatprep.subr.mxu0 0.0
    %766 = vmatpush1.msra.mxu0 0.0
    %767 = vmatprep.subr.mxu0 0.0
    %768 = vmatpush1.msra.mxu0 0.0
    %769 = vmatprep.subr.mxu0 0.0
    %770 = vmatpush1.msra.mxu0 0.0
    %771 = vmatprep.subr.mxu0 0.0
    %772 = vmatpush1.msra.mxu0 0.0
    %773 = vmatprep.subr.mxu0 0.0
    %774 = vmatpush1.msra.mxu0 0.0
    %775 = vmatprep.subr.mxu0 0.0
    %776 = vmatpush1.msra.mxu0 0.0
    %777 = vmatprep.subr.mxu0 0.0
    %778 = vmatpush1.msra.mxu0 0.0
    %779 = vmatprep.subr.mxu0 0.0
    %780 = vmatpush1.msra.mxu0 0.0
    %781 = vmatprep.subr.mxu0 0.0
    %782 = vmatpush1.msra.mxu0 0.0
    %783 = vmatprep.subr.mxu0 0.0
    %784 = vmatpush1.msra.mxu0 0.0
    %785 = vmatprep.subr.mxu0 0.0
    %786 = vmatpush1.msra.mxu0 0.0
    %787 = vmatprep.subr.mxu0 0.0
    %788 = vmatpush1.msra.mxu0 0.0
    %789 = vmatprep.subr.mxu0 0.0
    %790 = vmatpush1.msra.mxu0 0.0
    %791 = vmatprep.subr.mxu0 0.0
    %792 = vmatpush1.msra.mxu0 0.0
    %793 = vmatprep.subr.mxu0 0.0
    %794 = vmatpush1.msra.mxu0 0.0
    %795 = vmatprep.subr.mxu0 0.0
    %796 = vmatpush1.msra.mxu0 0.0
    %797 = vmatprep.subr.mxu0 0.0
    %798 = vmatpush1.msra.mxu0 0.0
    %799 = vmatprep.subr.mxu0 0.0
    %800 = vmatpush1.msra.mxu0 0.0
    %801 = vmatprep.subr.mxu0 0.0
    %802 = vmatpush1.msra.mxu0 0.0
    %803 = vmatprep.subr.mxu0 0.0
    %804 = vmatpush1.msra.mxu0 0.0
    %805 = vmatprep.subr.mxu0 0.0
    %806 = vmatpush1.msra.mxu0 0.0
    %807 = vmatprep.subr.mxu0 0.0
    %808 = vmatpush1.msra.mxu0 0.0
    %809 = vmatprep.subr.mxu0 0.0
    %810 = vmatpush1.msra.mxu0 0.0
    %811 = vmatprep.mubr.f32.mxu0 0.0
    %812 = vmatmul.mubr.f32.gmra.mrb[0].mxu0 %v345
    %v813 = vpop.f32.mrb[0].mxu0
    %v814 = vadd.f32 %v572, %v813
    %v815 = vpop.f32.mrb[0].mxu0
    %v816 = vadd.f32 %v576, %v815
    %817 = vmatprep.mubr.f32.mxu0 0.0
    %818 = vmatmul.mubr.f32.gmra.mrb[0].mxu0 %v348
    %v819 = vpop.f32.mrb[0].mxu0
    %v820 = vadd.f32 %v572, %v819
    %v821 = vpop.f32.mrb[0].mxu0
    %v822 = vadd.f32 %v576, %v821
    %823 = vdwg.mxu0
    %824 = vmatprep.subr.mxu0 %v526
    %825 = vmatpush1.msra.mxu0 %v525
    %826 = vmatprep.subr.mxu0 %v534
    %827 = vmatpush1.msra.mxu0 %v533
    %828 = vmatprep.subr.mxu0 %v542
    %829 = vmatpush1.msra.mxu0 %v541
    %830 = vmatprep.subr.mxu0 %v550
    %831 = vmatpush1.msra.mxu0 %v549
    %832 = vmatprep.subr.mxu0 0.0
    %833 = vmatpush1.msra.mxu0 0.0
    %834 = vmatprep.subr.mxu0 0.0
    %835 = vmatpush1.msra.mxu0 0.0
    %836 = vmatprep.subr.mxu0 0.0
    %837 = vmatpush1.msra.mxu0 0.0
    %838 = vmatprep.subr.mxu0 0.0
    %839 = vmatpush1.msra.mxu0 0.0
    %840 = vmatprep.subr.mxu0 0.0
    %841 = vmatpush1.msra.mxu0 0.0
    %842 = vmatprep.subr.mxu0 0.0
    %843 = vmatpush1.msra.mxu0 0.0
    %844 = vmatprep.subr.mxu0 0.0
    %845 = vmatpush1.msra.mxu0 0.0
    %846 = vmatprep.subr.mxu0 0.0
    %847 = vmatpush1.msra.mxu0 0.0
    %848 = vmatprep.subr.mxu0 0.0
    %849 = vmatpush1.msra.mxu0 0.0
    %850 = vmatprep.subr.mxu0 0.0
    %851 = vmatpush1.msra.mxu0 0.0
    %852 = vmatprep.subr.mxu0 0.0
    %853 = vmatpush1.msra.mxu0 0.0
    %854 = vmatprep.subr.mxu0 0.0
    %855 = vmatpush1.msra.mxu0 0.0
    %856 = vmatprep.subr.mxu0 0.0
    %857 = vmatpush1.msra.mxu0 0.0
    %858 = vmatprep.subr.mxu0 0.0
    %859 = vmatpush1.msra.mxu0 0.0
    %860 = vmatprep.subr.mxu0 0.0
    %861 = vmatpush1.msra.mxu0 0.0
    %862 = vmatprep.subr.mxu0 0.0
    %863 = vmatpush1.msra.mxu0 0.0
    %864 = vmatprep.subr.mxu0 0.0
    %865 = vmatpush1.msra.mxu0 0.0
    %866 = vmatprep.subr.mxu0 0.0
    %867 = vmatpush1.msra.mxu0 0.0
    %868 = vmatprep.subr.mxu0 0.0
    %869 = vmatpush1.msra.mxu0 0.0
    %870 = vmatprep.subr.mxu0 0.0
    %871 = vmatpush1.msra.mxu0 0.0
    %872 = vmatprep.subr.mxu0 0.0
    %873 = vmatpush1.msra.mxu0 0.0
    %874 = vmatprep.subr.mxu0 0.0
    %875 = vmatpush1.msra.mxu0 0.0
    %876 = vmatprep.subr.mxu0 0.0
    %877 = vmatpush1.msra.mxu0 0.0
    %878 = vmatprep.subr.mxu0 0.0
    %879 = vmatpush1.msra.mxu0 0.0
    %880 = vmatprep.subr.mxu0 0.0
    %881 = vmatpush1.msra.mxu0 0.0
    %882 = vmatprep.subr.mxu0 0.0
    %883 = vmatpush1.msra.mxu0 0.0
    %884 = vmatprep.subr.mxu0 0.0
    %885 = vmatpush1.msra.mxu0 0.0
    %886 = vmatprep.subr.mxu0 0.0
    %887 = vmatpush1.msra.mxu0 0.0
    %888 = vmatprep.mubr.f32.mxu0 0.0
    %889 = vmatmul.mubr.f32.gmra.mrb[0].mxu0 %v345
    %v890 = vpop.f32.mrb[0].mxu0
    %v891 = vadd.f32 %v580, %v890
    %v892 = vpop.f32.mrb[0].mxu0
    %v893 = vadd.f32 %v584, %v892
    %894 = vmatprep.mubr.f32.mxu0 0.0
    %895 = vmatmul.mubr.f32.gmra.mrb[0].mxu0 %v348
    %v896 = vpop.f32.mrb[0].mxu0
    %v897 = vadd.f32 %v580, %v896
    %v898 = vpop.f32.mrb[0].mxu0
    %v899 = vadd.f32 %v584, %v898
    %900 = vdwg.mxu0
    %v901 = vtanh.pop %v660
    %v902 = vtanh.pop %v662
    %v903 = vtanh.pop %v737
    %v904 = vtanh.pop %v739
    %v905 = vtanh.pop %v814
    %v906 = vtanh.pop %v816
    %v907 = vtanh.pop %v891
    %v908 = vtanh.pop %v893
    %v909 = vtanh.pop %v666
    %v910 = vtanh.pop %v668
    %v911 = vtanh.pop %v743
    %v912 = vtanh.pop %v745
    %v913 = vtanh.pop %v820
    %v914 = vtanh.pop %v822
    %v915 = vtanh.pop %v897
    %v916 = vtanh.pop %v899
    %v917 = vmul.f32 %v901, 5.0
    %v918 = vmul.f32 %v902, 5.0
    %v919 = vmul.f32 %v903, 5.0
    %v920 = vmul.f32 %v904, 5.0
    %v921 = vmul.f32 %v905, 5.0
    %v922 = vmul.f32 %v906, 5.0
    %v923 = vmul.f32 %v907, 5.0
    %v924 = vmul.f32 %v908, 5.0
    %v925 = vmul.f32 %v909, 5.0
    %v926 = vmul.f32 %v910, 5.0
    %v927 = vmul.f32 %v911, 5.0
    %v928 = vmul.f32 %v912, 5.0
    %v929 = vmul.f32 %v913, 5.0
    %v930 = vmul.f32 %v914, 5.0
    %v931 = vmul.f32 %v915, 5.0
    %v932 = vmul.f32 %v916, 5.0
    %v933 = vmul.f32 %v917, %v331
    %v934 = vmul.f32 %v918, %v331
    %v935 = vmul.f32 %v919, %v331
    %v936 = vmul.f32 %v920, %v331
    %v937 = vmul.f32 %v921, %v331
    %v938 = vmul.f32 %v922, %v331
    %v939 = vmul.f32 %v923, %v331
    %v940 = vmul.f32 %v924, %v331
    %v941 = vmul.f32 %v925, %v332
    %v942 = vmul.f32 %v926, %v332
    %v943 = vmul.f32 %v927, %v332
    %v944 = vmul.f32 %v928, %v332
    %v945 = vmul.f32 %v929, %v332
    %v946 = vmul.f32 %v930, %v332
    %v947 = vmul.f32 %v931, %v332
    %v948 = vmul.f32 %v932, %v332
    %v949 = vld [vmem:[#allocation11] sm:$0xff]
    %v950 = vld [vmem:[#allocation11 + $0x8] sm:$0xff]
    %v951 = vld [vmem:[#allocation11 + $0x10] sm:$0xff]
    %v952 = vld [vmem:[#allocation11 + $0x18] sm:$0xff]
    %v953 = vld [vmem:[#allocation11 + $0x20] sm:$0xff]
    %v954 = vld [vmem:[#allocation11 + $0x28] sm:$0xff]
    %v955 = vld [vmem:[#allocation11 + $0x30] sm:$0xff]
    %v956 = vld [vmem:[#allocation11 + $0x38] sm:$0xff]
    %v957 = vld [vmem:[#allocation11 + $0x40] sm:$0xff]
    %v958 = vld [vmem:[#allocation11 + $0x48] sm:$0xff]
    %v959 = vld [vmem:[#allocation11 + $0x50] sm:$0xff]
    %v960 = vld [vmem:[#allocation11 + $0x58] sm:$0xff]
    %v961 = vld [vmem:[#allocation11 + $0x60] sm:$0xff]
    %v962 = vld [vmem:[#allocation11 + $0x68] sm:$0xff]
    %v963 = vld [vmem:[#allocation11 + $0x70] sm:$0xff]
    %v964 = vld [vmem:[#allocation11 + $0x78] sm:$0xff]
    %v965 = vld [vmem:[#allocation11 + $0x80] sm:$0xff]
    %v966 = vld [vmem:[#allocation11 + $0x88] sm:$0xff]
    %v967 = vld [vmem:[#allocation11 + $0x90] sm:$0xff]
    %v968 = vld [vmem:[#allocation11 + $0x98] sm:$0xff]
    %v969 = vld [vmem:[#allocation11 + $0xa0] sm:$0xff]
    %v970 = vld [vmem:[#allocation11 + $0xa8] sm:$0xff]
    %v971 = vld [vmem:[#allocation11 + $0xb0] sm:$0xff]
    %v972 = vld [vmem:[#allocation11 + $0xb8] sm:$0xff]
    %v973 = vld [vmem:[#allocation11 + $0xc0] sm:$0xff]
    %v974 = vld [vmem:[#allocation11 + $0xc8] sm:$0xff]
    %v975 = vld [vmem:[#allocation11 + $0xd0] sm:$0xff]
    %v976 = vld [vmem:[#allocation11 + $0xd8] sm:$0xff]
    %v977 = vld [vmem:[#allocation11 + $0xe0] sm:$0xff]
    %v978 = vld [vmem:[#allocation11 + $0xe8] sm:$0xff]
    %v979 = vld [vmem:[#allocation11 + $0xf0] sm:$0xff]
    %v980 = vld [vmem:[#allocation11 + $0xf8] sm:$0xff]
    %v981 = vld [vmem:[#allocation11 + $0x100] sm:$0xff]
    %v982 = vld [vmem:[#allocation11 + $0x108] sm:$0xff]
    %v983 = vld [vmem:[#allocation11 + $0x110] sm:$0xff]
    %v984 = vld [vmem:[#allocation11 + $0x118] sm:$0xff]
    %v985 = vld [vmem:[#allocation11 + $0x120] sm:$0xff]
    %v986 = vld [vmem:[#allocation11 + $0x128] sm:$0xff]
    %v987 = vld [vmem:[#allocation11 + $0x130] sm:$0xff]
    %v988 = vld [vmem:[#allocation11 + $0x138] sm:$0xff]
    %v989 = vld [vmem:[#allocation11 + $0x140] sm:$0xff]
    %v990 = vld [vmem:[#allocation11 + $0x148] sm:$0xff]
    %v991 = vld [vmem:[#allocation11 + $0x150] sm:$0xff]
    %v992 = vld [vmem:[#allocation11 + $0x158] sm:$0xff]
    %v993 = vld [vmem:[#allocation11 + $0x160] sm:$0xff]
    %v994 = vld [vmem:[#allocation11 + $0x168] sm:$0xff]
    %v995 = vld [vmem:[#allocation11 + $0x170] sm:$0xff]
    %v996 = vld [vmem:[#allocation11 + $0x178] sm:$0xff]
    %v997 = vld [vmem:[#allocation11 + $0x180] sm:$0xff]
    %v998 = vld [vmem:[#allocation11 + $0x188] sm:$0xff]
    %v999 = vld [vmem:[#allocation11 + $0x190] sm:$0xff]
    %v1000 = vld [vmem:[#allocation11 + $0x198] sm:$0xff]
    %v1001 = vld [vmem:[#allocation11 + $0x1a0] sm:$0xff]
    %v1002 = vld [vmem:[#allocation11 + $0x1a8] sm:$0xff]
    %v1003 = vld [vmem:[#allocation11 + $0x1b0] sm:$0xff]
    %v1004 = vld [vmem:[#allocation11 + $0x1b8] sm:$0xff]
    %v1005 = vld [vmem:[#allocation11 + $0x1c0] sm:$0xff]
    %v1006 = vld [vmem:[#allocation11 + $0x1c8] sm:$0xff]
    %v1007 = vld [vmem:[#allocation11 + $0x1d0] sm:$0xff]
    %v1008 = vld [vmem:[#allocation11 + $0x1d8] sm:$0xff]
    %v1009 = vld [vmem:[#allocation11 + $0x1e0] sm:$0xff]
    %v1010 = vld [vmem:[#allocation11 + $0x1e8] sm:$0xff]
    %v1011 = vld [vmem:[#allocation11 + $0x1f0] sm:$0xff]
    %v1012 = vld [vmem:[#allocation11 + $0x1f8] sm:$0xff]
    %v1013 = vld [vmem:[#allocation11 + $0x200] sm:$0xff]
    %v1014 = vld [vmem:[#allocation11 + $0x208] sm:$0xff]
    %v1015 = vld [vmem:[#allocation11 + $0x210] sm:$0xff]
    %v1016 = vld [vmem:[#allocation11 + $0x218] sm:$0xff]
    %v1017 = vld [vmem:[#allocation11 + $0x220] sm:$0xff]
    %v1018 = vld [vmem:[#allocation11 + $0x228] sm:$0xff]
    %v1019 = vld [vmem:[#allocation11 + $0x230] sm:$0xff]
    %v1020 = vld [vmem:[#allocation11 + $0x238] sm:$0xff]
    %v1021 = vld [vmem:[#allocation11 + $0x240] sm:$0xff]
    %v1022 = vld [vmem:[#allocation11 + $0x248] sm:$0xff]
    %v1023 = vld [vmem:[#allocation11 + $0x250] sm:$0xff]
    %v1024 = vld [vmem:[#allocation11 + $0x258] sm:$0xff]
    %v1025 = vld [vmem:[#allocation11 + $0x260] sm:$0xff]
    %v1026 = vld [vmem:[#allocation11 + $0x268] sm:$0xff]
    %v1027 = vld [vmem:[#allocation11 + $0x270] sm:$0xff]
    %v1028 = vld [vmem:[#allocation11 + $0x278] sm:$0xff]
    %v1029 = vld [vmem:[#allocation11 + $0x280] sm:$0xff]
    %v1030 = vld [vmem:[#allocation11 + $0x288] sm:$0xff]
    %v1031 = vld [vmem:[#allocation11 + $0x290] sm:$0xff]
    %v1032 = vld [vmem:[#allocation11 + $0x298] sm:$0xff]
    %v1033 = vld [vmem:[#allocation11 + $0x2a0] sm:$0xff]
    %v1034 = vld [vmem:[#allocation11 + $0x2a8] sm:$0xff]
    %v1035 = vld [vmem:[#allocation11 + $0x2b0] sm:$0xff]
    %v1036 = vld [vmem:[#allocation11 + $0x2b8] sm:$0xff]
    %v1037 = vld [vmem:[#allocation11 + $0x2c0] sm:$0xff]
    %v1038 = vld [vmem:[#allocation11 + $0x2c8] sm:$0xff]
    %v1039 = vld [vmem:[#allocation11 + $0x2d0] sm:$0xff]
    %v1040 = vld [vmem:[#allocation11 + $0x2d8] sm:$0xff]
    %v1041 = vld [vmem:[#allocation11 + $0x2e0] sm:$0xff]
    %v1042 = vld [vmem:[#allocation11 + $0x2e8] sm:$0xff]
    %v1043 = vld [vmem:[#allocation11 + $0x2f0] sm:$0xff]
    %v1044 = vld [vmem:[#allocation11 + $0x2f8] sm:$0xff]
    %v1045 = vld [vmem:[#allocation11 + $0x300] sm:$0xff]
    %v1046 = vld [vmem:[#allocation11 + $0x308] sm:$0xff]
    %v1047 = vld [vmem:[#allocation11 + $0x310] sm:$0xff]
    %v1048 = vld [vmem:[#allocation11 + $0x318] sm:$0xff]
    %v1049 = vld [vmem:[#allocation11 + $0x320] sm:$0xff]
    %v1050 = vld [vmem:[#allocation11 + $0x328] sm:$0xff]
    %v1051 = vld [vmem:[#allocation11 + $0x330] sm:$0xff]
    %v1052 = vld [vmem:[#allocation11 + $0x338] sm:$0xff]
    %v1053 = vld [vmem:[#allocation11 + $0x340] sm:$0xff]
    %v1054 = vld [vmem:[#allocation11 + $0x348] sm:$0xff]
    %v1055 = vld [vmem:[#allocation11 + $0x350] sm:$0xff]
    %v1056 = vld [vmem:[#allocation11 + $0x358] sm:$0xff]
    %v1057 = vld [vmem:[#allocation11 + $0x360] sm:$0xff]
    %v1058 = vld [vmem:[#allocation11 + $0x368] sm:$0xff]
    %v1059 = vld [vmem:[#allocation11 + $0x370] sm:$0xff]
    %v1060 = vld [vmem:[#allocation11 + $0x378] sm:$0xff]
    %v1061 = vld [vmem:[#allocation11 + $0x380] sm:$0xff]
    %v1062 = vld [vmem:[#allocation11 + $0x388] sm:$0xff]
    %v1063 = vld [vmem:[#allocation11 + $0x390] sm:$0xff]
    %v1064 = vld [vmem:[#allocation11 + $0x398] sm:$0xff]
    %v1065 = vld [vmem:[#allocation11 + $0x3a0] sm:$0xff]
    %v1066 = vld [vmem:[#allocation11 + $0x3a8] sm:$0xff]
    %v1067 = vld [vmem:[#allocation11 + $0x3b0] sm:$0xff]
    %v1068 = vld [vmem:[#allocation11 + $0x3b8] sm:$0xff]
    %v1069 = vld [vmem:[#allocation11 + $0x3c0] sm:$0xff]
    %v1070 = vld [vmem:[#allocation11 + $0x3c8] sm:$0xff]
    %v1071 = vld [vmem:[#allocation11 + $0x3d0] sm:$0xff]
    %v1072 = vld [vmem:[#allocation11 + $0x3d8] sm:$0xff]
    %v1073 = vld [vmem:[#allocation11 + $0x3e0] sm:$0xff]
    %v1074 = vld [vmem:[#allocation11 + $0x3e8] sm:$0xff]
    %v1075 = vld [vmem:[#allocation11 + $0x3f0] sm:$0xff]
    %v1076 = vld [vmem:[#allocation11 + $0x3f8] sm:$0xff]
    %1077 = vmatprep.subr.mxu0 0.0
    %1078 = vmatpush1.msra.mxu0 %v949
    %1079 = vmatprep.subr.mxu0 0.0
    %1080 = vmatpush1.msra.mxu0 %v950
    %1081 = vmatprep.subr.mxu0 0.0
    %1082 = vmatpush1.msra.mxu0 %v951
    %1083 = vmatprep.subr.mxu0 0.0
    %1084 = vmatpush1.msra.mxu0 %v952
    %1085 = vmatprep.subr.mxu0 0.0
    %1086 = vmatpush1.msra.mxu0 %v953
    %1087 = vmatprep.subr.mxu0 0.0
    %1088 = vmatpush1.msra.mxu0 %v954
    %1089 = vmatprep.subr.mxu0 0.0
    %1090 = vmatpush1.msra.mxu0 %v955
    %1091 = vmatprep.subr.mxu0 0.0
    %1092 = vmatpush1.msra.mxu0 %v956
    %1093 = vmatprep.subr.mxu0 0.0
    %1094 = vmatpush1.msra.mxu0 %v957
    %1095 = vmatprep.subr.mxu0 0.0
    %1096 = vmatpush1.msra.mxu0 %v958
    %1097 = vmatprep.subr.mxu0 0.0
    %1098 = vmatpush1.msra.mxu0 %v959
    %1099 = vmatprep.subr.mxu0 0.0
    %1100 = vmatpush1.msra.mxu0 %v960
    %1101 = vmatprep.subr.mxu0 0.0
    %1102 = vmatpush1.msra.mxu0 %v961
    %1103 = vmatprep.subr.mxu0 0.0
    %1104 = vmatpush1.msra.mxu0 %v962
    %1105 = vmatprep.subr.mxu0 0.0
    %1106 = vmatpush1.msra.mxu0 %v963
    %1107 = vmatprep.subr.mxu0 0.0
    %1108 = vmatpush1.msra.mxu0 %v964
    %1109 = vmatprep.subr.mxu0 0.0
    %1110 = vmatpush1.msra.mxu0 %v965
    %1111 = vmatprep.subr.mxu0 0.0
    %1112 = vmatpush1.msra.mxu0 %v966
    %1113 = vmatprep.subr.mxu0 0.0
    %1114 = vmatpush1.msra.mxu0 %v967
    %1115 = vmatprep.subr.mxu0 0.0
    %1116 = vmatpush1.msra.mxu0 %v968
    %1117 = vmatprep.subr.mxu0 0.0
    %1118 = vmatpush1.msra.mxu0 %v969
    %1119 = vmatprep.subr.mxu0 0.0
    %1120 = vmatpush1.msra.mxu0 %v970
    %1121 = vmatprep.subr.mxu0 0.0
    %1122 = vmatpush1.msra.mxu0 %v971
    %1123 = vmatprep.subr.mxu0 0.0
    %1124 = vmatpush1.msra.mxu0 %v972
    %1125 = vmatprep.subr.mxu0 0.0
    %1126 = vmatpush1.msra.mxu0 %v973
    %1127 = vmatprep.subr.mxu0 0.0
    %1128 = vmatpush1.msra.mxu0 %v974
    %1129 = vmatprep.subr.mxu0 0.0
    %1130 = vmatpush1.msra.mxu0 %v975
    %1131 = vmatprep.subr.mxu0 0.0
    %1132 = vmatpush1.msra.mxu0 %v976
    %1133 = vmatprep.subr.mxu0 0.0
    %1134 = vmatpush1.msra.mxu0 %v977
    %1135 = vmatprep.subr.mxu0 0.0
    %1136 = vmatpush1.msra.mxu0 %v978
    %1137 = vmatprep.subr.mxu0 0.0
    %1138 = vmatpush1.msra.mxu0 %v979
    %1139 = vmatprep.subr.mxu0 0.0
    %1140 = vmatpush1.msra.mxu0 %v980
    %1141 = vmatprep.mubr.f32.mxu0 %v934
    %1142 = vmatmul.mubr.f32.gmra.mrb[0].mxu0 %v933
    %v1143 = vpop.f32.mrb[0].mxu0
    %v1144 = vadd.f32 %v427, %v1143
    %v1145 = vpop.f32.mrb[0].mxu0
    %1146 = vmatprep.mubr.f32.mxu0 %v942
    %1147 = vmatmul.mubr.f32.gmra.mrb[0].mxu0 %v941
    %v1148 = vpop.f32.mrb[0].mxu0
    %v1149 = vadd.f32 %v428, %v1148
    %v1150 = vpop.f32.mrb[0].mxu0
    %1151 = vdwg.mxu0
    %1152 = vmatprep.subr.mxu0 0.0
    %1153 = vmatpush1.msra.mxu0 %v981
    %1154 = vmatprep.subr.mxu0 0.0
    %1155 = vmatpush1.msra.mxu0 %v982
    %1156 = vmatprep.subr.mxu0 0.0
    %1157 = vmatpush1.msra.mxu0 %v983
    %1158 = vmatprep.subr.mxu0 0.0
    %1159 = vmatpush1.msra.mxu0 %v984
    %1160 = vmatprep.subr.mxu0 0.0
    %1161 = vmatpush1.msra.mxu0 %v985
    %1162 = vmatprep.subr.mxu0 0.0
    %1163 = vmatpush1.msra.mxu0 %v986
    %1164 = vmatprep.subr.mxu0 0.0
    %1165 = vmatpush1.msra.mxu0 %v987
    %1166 = vmatprep.subr.mxu0 0.0
    %1167 = vmatpush1.msra.mxu0 %v988
    %1168 = vmatprep.subr.mxu0 0.0
    %1169 = vmatpush1.msra.mxu0 %v989
    %1170 = vmatprep.subr.mxu0 0.0
    %1171 = vmatpush1.msra.mxu0 %v990
    %1172 = vmatprep.subr.mxu0 0.0
    %1173 = vmatpush1.msra.mxu0 %v991
    %1174 = vmatprep.subr.mxu0 0.0
    %1175 = vmatpush1.msra.mxu0 %v992
    %1176 = vmatprep.subr.mxu0 0.0
    %1177 = vmatpush1.msra.mxu0 %v993
    %1178 = vmatprep.subr.mxu0 0.0
    %1179 = vmatpush1.msra.mxu0 %v994
    %1180 = vmatprep.subr.mxu0 0.0
    %1181 = vmatpush1.msra.mxu0 %v995
    %1182 = vmatprep.subr.mxu0 0.0
    %1183 = vmatpush1.msra.mxu0 %v996
    %1184 = vmatprep.subr.mxu0 0.0
    %1185 = vmatpush1.msra.mxu0 %v997
    %1186 = vmatprep.subr.mxu0 0.0
    %1187 = vmatpush1.msra.mxu0 %v998
    %1188 = vmatprep.subr.mxu0 0.0
    %1189 = vmatpush1.msra.mxu0 %v999
    %1190 = vmatprep.subr.mxu0 0.0
    %1191 = vmatpush1.msra.mxu0 %v1000
    %1192 = vmatprep.subr.mxu0 0.0
    %1193 = vmatpush1.msra.mxu0 %v1001
    %1194 = vmatprep.subr.mxu0 0.0
    %1195 = vmatpush1.msra.mxu0 %v1002
    %1196 = vmatprep.subr.mxu0 0.0
    %1197 = vmatpush1.msra.mxu0 %v1003
    %1198 = vmatprep.subr.mxu0 0.0
    %1199 = vmatpush1.msra.mxu0 %v1004
    %1200 = vmatprep.subr.mxu0 0.0
    %1201 = vmatpush1.msra.mxu0 %v1005
    %1202 = vmatprep.subr.mxu0 0.0
    %1203 = vmatpush1.msra.mxu0 %v1006
    %1204 = vmatprep.subr.mxu0 0.0
    %1205 = vmatpush1.msra.mxu0 %v1007
    %1206 = vmatprep.subr.mxu0 0.0
    %1207 = vmatpush1.msra.mxu0 %v1008
    %1208 = vmatprep.subr.mxu0 0.0
    %1209 = vmatpush1.msra.mxu0 %v1009
    %1210 = vmatprep.subr.mxu0 0.0
    %1211 = vmatpush1.msra.mxu0 %v1010
    %1212 = vmatprep.subr.mxu0 0.0
    %1213 = vmatpush1.msra.mxu0 %v1011
    %1214 = vmatprep.subr.mxu0 0.0
    %1215 = vmatpush1.msra.mxu0 %v1012
    %1216 = vmatprep.mubr.f32.mxu0 %v936
    %1217 = vmatmul.mubr.f32.gmra.mrb[0].mxu0 %v935
    %v1218 = vpop.f32.mrb[0].mxu0
    %v1219 = vadd.f32 %v1144, %v1218
    %v1220 = vpop.f32.mrb[0].mxu0
    %1221 = vmatprep.mubr.f32.mxu0 %v944
    %1222 = vmatmul.mubr.f32.gmra.mrb[0].mxu0 %v943
    %v1223 = vpop.f32.mrb[0].mxu0
    %v1224 = vadd.f32 %v1149, %v1223
    %v1225 = vpop.f32.mrb[0].mxu0
    %1226 = vdwg.mxu0
    %1227 = vmatprep.subr.mxu0 0.0
    %1228 = vmatpush1.msra.mxu0 %v1013
    %1229 = vmatprep.subr.mxu0 0.0
    %1230 = vmatpush1.msra.mxu0 %v1014
    %1231 = vmatprep.subr.mxu0 0.0
    %1232 = vmatpush1.msra.mxu0 %v1015
    %1233 = vmatprep.subr.mxu0 0.0
    %1234 = vmatpush1.msra.mxu0 %v1016
    %1235 = vmatprep.subr.mxu0 0.0
    %1236 = vmatpush1.msra.mxu0 %v1017
    %1237 = vmatprep.subr.mxu0 0.0
    %1238 = vmatpush1.msra.mxu0 %v1018
    %1239 = vmatprep.subr.mxu0 0.0
    %1240 = vmatpush1.msra.mxu0 %v1019
    %1241 = vmatprep.subr.mxu0 0.0
    %1242 = vmatpush1.msra.mxu0 %v1020
    %1243 = vmatprep.subr.mxu0 0.0
    %1244 = vmatpush1.msra.mxu0 %v1021
    %1245 = vmatprep.subr.mxu0 0.0
    %1246 = vmatpush1.msra.mxu0 %v1022
    %1247 = vmatprep.subr.mxu0 0.0
    %1248 = vmatpush1.msra.mxu0 %v1023
    %1249 = vmatprep.subr.mxu0 0.0
    %1250 = vmatpush1.msra.mxu0 %v1024
    %1251 = vmatprep.subr.mxu0 0.0
    %1252 = vmatpush1.msra.mxu0 %v1025
    %1253 = vmatprep.subr.mxu0 0.0
    %1254 = vmatpush1.msra.mxu0 %v1026
    %1255 = vmatprep.subr.mxu0 0.0
    %1256 = vmatpush1.msra.mxu0 %v1027
    %1257 = vmatprep.subr.mxu0 0.0
    %1258 = vmatpush1.msra.mxu0 %v1028
    %1259 = vmatprep.subr.mxu0 0.0
    %1260 = vmatpush1.msra.mxu0 %v1029
    %1261 = vmatprep.subr.mxu0 0.0
    %1262 = vmatpush1.msra.mxu0 %v1030
    %1263 = vmatprep.subr.mxu0 0.0
    %1264 = vmatpush1.msra.mxu0 %v1031
    %1265 = vmatprep.subr.mxu0 0.0
    %1266 = vmatpush1.msra.mxu0 %v1032
    %1267 = vmatprep.subr.mxu0 0.0
    %1268 = vmatpush1.msra.mxu0 %v1033
    %1269 = vmatprep.subr.mxu0 0.0
    %1270 = vmatpush1.msra.mxu0 %v1034
    %1271 = vmatprep.subr.mxu0 0.0
    %1272 = vmatpush1.msra.mxu0 %v1035
    %1273 = vmatprep.subr.mxu0 0.0
    %1274 = vmatpush1.msra.mxu0 %v1036
    %1275 = vmatprep.subr.mxu0 0.0
    %1276 = vmatpush1.msra.mxu0 %v1037
    %1277 = vmatprep.subr.mxu0 0.0
    %1278 = vmatpush1.msra.mxu0 %v1038
    %1279 = vmatprep.subr.mxu0 0.0
    %1280 = vmatpush1.msra.mxu0 %v1039
    %1281 = vmatprep.subr.mxu0 0.0
    %1282 = vmatpush1.msra.mxu0 %v1040
    %1283 = vmatprep.subr.mxu0 0.0
    %1284 = vmatpush1.msra.mxu0 %v1041
    %1285 = vmatprep.subr.mxu0 0.0
    %1286 = vmatpush1.msra.mxu0 %v1042
    %1287 = vmatprep.subr.mxu0 0.0
    %1288 = vmatpush1.msra.mxu0 %v1043
    %1289 = vmatprep.subr.mxu0 0.0
    %1290 = vmatpush1.msra.mxu0 %v1044
    %1291 = vmatprep.mubr.f32.mxu0 %v938
    %1292 = vmatmul.mubr.f32.gmra.mrb[0].mxu0 %v937
    %v1293 = vpop.f32.mrb[0].mxu0
    %v1294 = vadd.f32 %v1219, %v1293
    %v1295 = vpop.f32.mrb[0].mxu0
    %1296 = vmatprep.mubr.f32.mxu0 %v946
    %1297 = vmatmul.mubr.f32.gmra.mrb[0].mxu0 %v945
    %v1298 = vpop.f32.mrb[0].mxu0
    %v1299 = vadd.f32 %v1224, %v1298
    %v1300 = vpop.f32.mrb[0].mxu0
    %1301 = vdwg.mxu0
    %1302 = vmatprep.subr.mxu0 0.0
    %1303 = vmatpush1.msra.mxu0 %v1045
    %1304 = vmatprep.subr.mxu0 0.0
    %1305 = vmatpush1.msra.mxu0 %v1046
    %1306 = vmatprep.subr.mxu0 0.0
    %1307 = vmatpush1.msra.mxu0 %v1047
    %1308 = vmatprep.subr.mxu0 0.0
    %1309 = vmatpush1.msra.mxu0 %v1048
    %1310 = vmatprep.subr.mxu0 0.0
    %1311 = vmatpush1.msra.mxu0 %v1049
    %1312 = vmatprep.subr.mxu0 0.0
    %1313 = vmatpush1.msra.mxu0 %v1050
    %1314 = vmatprep.subr.mxu0 0.0
    %1315 = vmatpush1.msra.mxu0 %v1051
    %1316 = vmatprep.subr.mxu0 0.0
    %1317 = vmatpush1.msra.mxu0 %v1052
    %1318 = vmatprep.subr.mxu0 0.0
    %1319 = vmatpush1.msra.mxu0 %v1053
    %1320 = vmatprep.subr.mxu0 0.0
    %1321 = vmatpush1.msra.mxu0 %v1054
    %1322 = vmatprep.subr.mxu0 0.0
    %1323 = vmatpush1.msra.mxu0 %v1055
    %1324 = vmatprep.subr.mxu0 0.0
    %1325 = vmatpush1.msra.mxu0 %v1056
    %1326 = vmatprep.subr.mxu0 0.0
    %1327 = vmatpush1.msra.mxu0 %v1057
    %1328 = vmatprep.subr.mxu0 0.0
    %1329 = vmatpush1.msra.mxu0 %v1058
    %1330 = vmatprep.subr.mxu0 0.0
    %1331 = vmatpush1.msra.mxu0 %v1059
    %1332 = vmatprep.subr.mxu0 0.0
    %1333 = vmatpush1.msra.mxu0 %v1060
    %1334 = vmatprep.subr.mxu0 0.0
    %1335 = vmatpush1.msra.mxu0 %v1061
    %1336 = vmatprep.subr.mxu0 0.0
    %1337 = vmatpush1.msra.mxu0 %v1062
    %1338 = vmatprep.subr.mxu0 0.0
    %1339 = vmatpush1.msra.mxu0 %v1063
    %1340 = vmatprep.subr.mxu0 0.0
    %1341 = vmatpush1.msra.mxu0 %v1064
    %1342 = vmatprep.subr.mxu0 0.0
    %1343 = vmatpush1.msra.mxu0 %v1065
    %1344 = vmatprep.subr.mxu0 0.0
    %1345 = vmatpush1.msra.mxu0 %v1066
    %1346 = vmatprep.subr.mxu0 0.0
    %1347 = vmatpush1.msra.mxu0 %v1067
    %1348 = vmatprep.subr.mxu0 0.0
    %1349 = vmatpush1.msra.mxu0 %v1068
    %1350 = vmatprep.subr.mxu0 0.0
    %1351 = vmatpush1.msra.mxu0 %v1069
    %1352 = vmatprep.subr.mxu0 0.0
    %1353 = vmatpush1.msra.mxu0 %v1070
    %1354 = vmatprep.subr.mxu0 0.0
    %1355 = vmatpush1.msra.mxu0 %v1071
    %1356 = vmatprep.subr.mxu0 0.0
    %1357 = vmatpush1.msra.mxu0 %v1072
    %1358 = vmatprep.subr.mxu0 0.0
    %1359 = vmatpush1.msra.mxu0 %v1073
    %1360 = vmatprep.subr.mxu0 0.0
    %1361 = vmatpush1.msra.mxu0 %v1074
    %1362 = vmatprep.subr.mxu0 0.0
    %1363 = vmatpush1.msra.mxu0 %v1075
    %1364 = vmatprep.subr.mxu0 0.0
    %1365 = vmatpush1.msra.mxu0 %v1076
    %1366 = vmatprep.mubr.f32.mxu0 %v940
    %1367 = vmatmul.mubr.f32.gmra.mrb[0].mxu0 %v939
    %v1368 = vpop.f32.mrb[0].mxu0
    %v1369 = vadd.f32 %v1294, %v1368
    %v1370 = vpop.f32.mrb[0].mxu0
    %1371 = vmatprep.mubr.f32.mxu0 %v948
    %1372 = vmatmul.mubr.f32.gmra.mrb[0].mxu0 %v947
    %v1373 = vpop.f32.mrb[0].mxu0
    %v1374 = vadd.f32 %v1299, %v1373
    %v1375 = vpop.f32.mrb[0].mxu0
    %1376 = vdwg.mxu0
    %v1377 = vmax.f32 %v1369, 0.0
    %v1378 = vmax.f32 %v1374, 0.0
    %v1379 = vld [vmem:[#allocation10 + $0x40] sm:$0xff]
    %v1380 = vld [vmem:[#allocation10 + $0x48] sm:$0xff]
    %v1381 = vld [vmem:[#allocation10 + $0x50] sm:$0xff]
    %v1382 = vld [vmem:[#allocation10 + $0x58] sm:$0xff]
    %v1383 = vld [vmem:[#allocation10 + $0x60] sm:$0xff]
    %v1384 = vld [vmem:[#allocation10 + $0x68] sm:$0xff]
    %v1385 = vld [vmem:[#allocation10 + $0x70] sm:$0xff]
    %v1386 = vld [vmem:[#allocation10 + $0x78] sm:$0xff]
    %v1387 = vld [vmem:[#allocation10 + $0xd0] sm:$0xff]
    %v1388 = vld [vmem:[#allocation10 + $0xd8] sm:$0xff]
    %v1389 = vld [vmem:[#allocation10 + $0xe0] sm:$0xff]
    %v1390 = vld [vmem:[#allocation10 + $0xe8] sm:$0xff]
    %v1391 = vld [vmem:[#allocation10 + $0xf0] sm:$0xff]
    %v1392 = vld [vmem:[#allocation10 + $0xf8] sm:$0xff]
    %v1393 = vld [vmem:[#allocation10 + $0x100] sm:$0xff]
    %v1394 = vld [vmem:[#allocation10 + $0x108] sm:$0xff]
    %v1395 = vld [vmem:[#allocation10 + $0x160] sm:$0xff]
    %v1396 = vld [vmem:[#allocation10 + $0x168] sm:$0xff]
    %v1397 = vld [vmem:[#allocation10 + $0x170] sm:$0xff]
    %v1398 = vld [vmem:[#allocation10 + $0x178] sm:$0xff]
    %v1399 = vld [vmem:[#allocation10 + $0x180] sm:$0xff]
    %v1400 = vld [vmem:[#allocation10 + $0x188] sm:$0xff]
    %v1401 = vld [vmem:[#allocation10 + $0x190] sm:$0xff]
    %v1402 = vld [vmem:[#allocation10 + $0x198] sm:$0xff]
    %v1403 = vld [vmem:[#allocation10 + $0x1f0] sm:$0xff]
    %v1404 = vld [vmem:[#allocation10 + $0x1f8] sm:$0xff]
    %v1405 = vld [vmem:[#allocation10 + $0x200] sm:$0xff]
    %v1406 = vld [vmem:[#allocation10 + $0x208] sm:$0xff]
    %v1407 = vld [vmem:[#allocation10 + $0x210] sm:$0xff]
    %v1408 = vld [vmem:[#allocation10 + $0x218] sm:$0xff]
    %v1409 = vld [vmem:[#allocation10 + $0x220] sm:$0xff]
    %v1410 = vld [vmem:[#allocation10 + $0x228] sm:$0xff]
    %v1411 = vld [vmem:[%s7 + $0x8] sm:$0xff]
    %v1413 = vlaneseq
    %v1414 = vshrl.u32 %v1413, 7
    %v1415 = vsub.s32 0, %v1414
    %v1416 = vrot.slane %v1411, %v1415
    %v1417 = vlaneseq
    %v1418 = vshrl.u32 %v1417, 7
    %v1419 = vsub.s32 1, %v1418
    %v1420 = vrot.slane %v1411, %v1419
    %v1421 = vlaneseq
    %v1422 = vshrl.u32 %v1421, 7
    %v1423 = vsub.s32 2, %v1422
    %v1424 = vrot.slane %v1411, %v1423
    %v1425 = vlaneseq
    %v1426 = vshrl.u32 %v1425, 7
    %v1427 = vsub.s32 3, %v1426
    %v1428 = vrot.slane %v1411, %v1427
    %v1429 = vlaneseq
    %v1430 = vshrl.u32 %v1429, 7
    %v1431 = vsub.s32 4, %v1430
    %v1432 = vrot.slane %v1411, %v1431
    %v1433 = vlaneseq
    %v1434 = vshrl.u32 %v1433, 7
    %v1435 = vsub.s32 5, %v1434
    %v1436 = vrot.slane %v1411, %v1435
    %v1437 = vlaneseq
    %v1438 = vshrl.u32 %v1437, 7
    %v1439 = vsub.s32 6, %v1438
    %v1440 = vrot.slane %v1411, %v1439
    %v1441 = vlaneseq
    %v1442 = vshrl.u32 %v1441, 7
    %v1443 = vsub.s32 7, %v1442
    %v1444 = vrot.slane %v1411, %v1443
    %1453 = vmatprep.subr.mxu0 %v1380
    %1454 = vmatpush1.msra.mxu0 %v1379
    %1455 = vmatprep.subr.mxu0 %v1388
    %1456 = vmatpush1.msra.mxu0 %v1387
    %1457 = vmatprep.subr.mxu0 %v1396
    %1458 = vmatpush1.msra.mxu0 %v1395
    %1459 = vmatprep.subr.mxu0 %v1404
    %1460 = vmatpush1.msra.mxu0 %v1403
    %1461 = vmatprep.subr.mxu0 0.0
    %1462 = vmatpush1.msra.mxu0 0.0
    %1463 = vmatprep.subr.mxu0 0.0
    %1464 = vmatpush1.msra.mxu0 0.0
    %1465 = vmatprep.subr.mxu0 0.0
    %1466 = vmatpush1.msra.mxu0 0.0
    %1467 = vmatprep.subr.mxu0 0.0
    %1468 = vmatpush1.msra.mxu0 0.0
    %1469 = vmatprep.subr.mxu0 0.0
    %1470 = vmatpush1.msra.mxu0 0.0
    %1471 = vmatprep.subr.mxu0 0.0
    %1472 = vmatpush1.msra.mxu0 0.0
    %1473 = vmatprep.subr.mxu0 0.0
    %1474 = vmatpush1.msra.mxu0 0.0
    %1475 = vmatprep.subr.mxu0 0.0
    %1476 = vmatpush1.msra.mxu0 0.0
    %1477 = vmatprep.subr.mxu0 0.0
    %1478 = vmatpush1.msra.mxu0 0.0
    %1479 = vmatprep.subr.mxu0 0.0
    %1480 = vmatpush1.msra.mxu0 0.0
    %1481 = vmatprep.subr.mxu0 0.0
    %1482 = vmatpush1.msra.mxu0 0.0
    %1483 = vmatprep.subr.mxu0 0.0
    %1484 = vmatpush1.msra.mxu0 0.0
    %1485 = vmatprep.subr.mxu0 0.0
    %1486 = vmatpush1.msra.mxu0 0.0
    %1487 = vmatprep.subr.mxu0 0.0
    %1488 = vmatpush1.msra.mxu0 0.0
    %1489 = vmatprep.subr.mxu0 0.0
    %1490 = vmatpush1.msra.mxu0 0.0
    %1491 = vmatprep.subr.mxu0 0.0
    %1492 = vmatpush1.msra.mxu0 0.0
    %1493 = vmatprep.subr.mxu0 0.0
    %1494 = vmatpush1.msra.mxu0 0.0
    %1495 = vmatprep.subr.mxu0 0.0
    %1496 = vmatpush1.msra.mxu0 0.0
    %1497 = vmatprep.subr.mxu0 0.0
    %1498 = vmatpush1.msra.mxu0 0.0
    %1499 = vmatprep.subr.mxu0 0.0
    %1500 = vmatpush1.msra.mxu0 0.0
    %1501 = vmatprep.subr.mxu0 0.0
    %1502 = vmatpush1.msra.mxu0 0.0
    %1503 = vmatprep.subr.mxu0 0.0
    %1504 = vmatpush1.msra.mxu0 0.0
    %1505 = vmatprep.subr.mxu0 0.0
    %1506 = vmatpush1.msra.mxu0 0.0
    %1507 = vmatprep.subr.mxu0 0.0
    %1508 = vmatpush1.msra.mxu0 0.0
    %1509 = vmatprep.subr.mxu0 0.0
    %1510 = vmatpush1.msra.mxu0 0.0
    %1511 = vmatprep.subr.mxu0 0.0
    %1512 = vmatpush1.msra.mxu0 0.0
    %1513 = vmatprep.subr.mxu0 0.0
    %1514 = vmatpush1.msra.mxu0 0.0
    %1515 = vmatprep.subr.mxu0 0.0
    %1516 = vmatpush1.msra.mxu0 0.0
    %1517 = vmatprep.mubr.f32.mxu0 0.0
    %1518 = vmatmul.mubr.f32.gmra.mrb[0].mxu0 %v345
    %v1519 = vpop.f32.mrb[0].mxu0
    %v1520 = vadd.f32 %v1416, %v1519
    %v1521 = vpop.f32.mrb[0].mxu0
    %v1522 = vadd.f32 %v1420, %v1521
    %1523 = vmatprep.mubr.f32.mxu0 0.0
    %1524 = vmatmul.mubr.f32.gmra.mrb[0].mxu0 %v348
    %v1525 = vpop.f32.mrb[0].mxu0
    %v1526 = vadd.f32 %v1416, %v1525
    %v1527 = vpop.f32.mrb[0].mxu0
    %v1528 = vadd.f32 %v1420, %v1527
    %1529 = vdwg.mxu0
    %1530 = vmatprep.subr.mxu0 %v1382
    %1531 = vmatpush1.msra.mxu0 %v1381
    %1532 = vmatprep.subr.mxu0 %v1390
    %1533 = vmatpush1.msra.mxu0 %v1389
    %1534 = vmatprep.subr.mxu0 %v1398
    %1535 = vmatpush1.msra.mxu0 %v1397
    %1536 = vmatprep.subr.mxu0 %v1406
    %1537 = vmatpush1.msra.mxu0 %v1405
    %1538 = vmatprep.subr.mxu0 0.0
    %1539 = vmatpush1.msra.mxu0 0.0
    %1540 = vmatprep.subr.mxu0 0.0
    %1541 = vmatpush1.msra.mxu0 0.0
    %1542 = vmatprep.subr.mxu0 0.0
    %1543 = vmatpush1.msra.mxu0 0.0
    %1544 = vmatprep.subr.mxu0 0.0
    %1545 = vmatpush1.msra.mxu0 0.0
    %1546 = vmatprep.subr.mxu0 0.0
    %1547 = vmatpush1.msra.mxu0 0.0
    %1548 = vmatprep.subr.mxu0 0.0
    %1549 = vmatpush1.msra.mxu0 0.0
    %1550 = vmatprep.subr.mxu0 0.0
    %1551 = vmatpush1.msra.mxu0 0.0
    %1552 = vmatprep.subr.mxu0 0.0
    %1553 = vmatpush1.msra.mxu0 0.0
    %1554 = vmatprep.subr.mxu0 0.0
    %1555 = vmatpush1.msra.mxu0 0.0
    %1556 = vmatprep.subr.mxu0 0.0
    %1557 = vmatpush1.msra.mxu0 0.0
    %1558 = vmatprep.subr.mxu0 0.0
    %1559 = vmatpush1.msra.mxu0 0.0
    %1560 = vmatprep.subr.mxu0 0.0
    %1561 = vmatpush1.msra.mxu0 0.0
    %1562 = vmatprep.subr.mxu0 0.0
    %1563 = vmatpush1.msra.mxu0 0.0
    %1564 = vmatprep.subr.mxu0 0.0
    %1565 = vmatpush1.msra.mxu0 0.0
    %1566 = vmatprep.subr.mxu0 0.0
    %1567 = vmatpush1.msra.mxu0 0.0
    %1568 = vmatprep.subr.mxu0 0.0
    %1569 = vmatpush1.msra.mxu0 0.0
    %1570 = vmatprep.subr.mxu0 0.0
    %1571 = vmatpush1.msra.mxu0 0.0
    %1572 = vmatprep.subr.mxu0 0.0
    %1573 = vmatpush1.msra.mxu0 0.0
    %1574 = vmatprep.subr.mxu0 0.0
    %1575 = vmatpush1.msra.mxu0 0.0
    %1576 = vmatprep.subr.mxu0 0.0
    %1577 = vmatpush1.msra.mxu0 0.0
    %1578 = vmatprep.subr.mxu0 0.0
    %1579 = vmatpush1.msra.mxu0 0.0
    %1580 = vmatprep.subr.mxu0 0.0
    %1581 = vmatpush1.msra.mxu0 0.0
    %1582 = vmatprep.subr.mxu0 0.0
    %1583 = vmatpush1.msra.mxu0 0.0
    %1584 = vmatprep.subr.mxu0 0.0
    %1585 = vmatpush1.msra.mxu0 0.0
    %1586 = vmatprep.subr.mxu0 0.0
    %1587 = vmatpush1.msra.mxu0 0.0
    %1588 = vmatprep.subr.mxu0 0.0
    %1589 = vmatpush1.msra.mxu0 0.0
    %1590 = vmatprep.subr.mxu0 0.0
    %1591 = vmatpush1.msra.mxu0 0.0
    %1592 = vmatprep.subr.mxu0 0.0
    %1593 = vmatpush1.msra.mxu0 0.0
    %1594 = vmatprep.mubr.f32.mxu0 0.0
    %1595 = vmatmul.mubr.f32.gmra.mrb[0].mxu0 %v345
    %v1596 = vpop.f32.mrb[0].mxu0
    %v1597 = vadd.f32 %v1424, %v1596
    %v1598 = vpop.f32.mrb[0].mxu0
    %v1599 = vadd.f32 %v1428, %v1598
    %1600 = vmatprep.mubr.f32.mxu0 0.0
    %1601 = vmatmul.mubr.f32.gmra.mrb[0].mxu0 %v348
    %v1602 = vpop.f32.mrb[0].mxu0
    %v1603 = vadd.f32 %v1424, %v1602
    %v1604 = vpop.f32.mrb[0].mxu0
    %v1605 = vadd.f32 %v1428, %v1604
    %1606 = vdwg.mxu0
    %1607 = vmatprep.subr.mxu0 %v1384
    %1608 = vmatpush1.msra.mxu0 %v1383
    %1609 = vmatprep.subr.mxu0 %v1392
    %1610 = vmatpush1.msra.mxu0 %v1391
    %1611 = vmatprep.subr.mxu0 %v1400
    %1612 = vmatpush1.msra.mxu0 %v1399
    %1613 = vmatprep.subr.mxu0 %v1408
    %1614 = vmatpush1.msra.mxu0 %v1407
    %1615 = vmatprep.subr.mxu0 0.0
    %1616 = vmatpush1.msra.mxu0 0.0
    %1617 = vmatprep.subr.mxu0 0.0
    %1618 = vmatpush1.msra.mxu0 0.0
    %1619 = vmatprep.subr.mxu0 0.0
    %1620 = vmatpush1.msra.mxu0 0.0
    %1621 = vmatprep.subr.mxu0 0.0
    %1622 = vmatpush1.msra.mxu0 0.0
    %1623 = vmatprep.subr.mxu0 0.0
    %1624 = vmatpush1.msra.mxu0 0.0
    %1625 = vmatprep.subr.mxu0 0.0
    %1626 = vmatpush1.msra.mxu0 0.0
    %1627 = vmatprep.subr.mxu0 0.0
    %1628 = vmatpush1.msra.mxu0 0.0
    %1629 = vmatprep.subr.mxu0 0.0
    %1630 = vmatpush1.msra.mxu0 0.0
    %1631 = vmatprep.subr.mxu0 0.0
    %1632 = vmatpush1.msra.mxu0 0.0
    %1633 = vmatprep.subr.mxu0 0.0
    %1634 = vmatpush1.msra.mxu0 0.0
    %1635 = vmatprep.subr.mxu0 0.0
    %1636 = vmatpush1.msra.mxu0 0.0
    %1637 = vmatprep.subr.mxu0 0.0
    %1638 = vmatpush1.msra.mxu0 0.0
    %1639 = vmatprep.subr.mxu0 0.0
    %1640 = vmatpush1.msra.mxu0 0.0
    %1641 = vmatprep.subr.mxu0 0.0
    %1642 = vmatpush1.msra.mxu0 0.0
    %1643 = vmatprep.subr.mxu0 0.0
    %1644 = vmatpush1.msra.mxu0 0.0
    %1645 = vmatprep.subr.mxu0 0.0
    %1646 = vmatpush1.msra.mxu0 0.0
    %1647 = vmatprep.subr.mxu0 0.0
    %1648 = vmatpush1.msra.mxu0 0.0
    %1649 = vmatprep.subr.mxu0 0.0
    %1650 = vmatpush1.msra.mxu0 0.0
    %1651 = vmatprep.subr.mxu0 0.0
    %1652 = vmatpush1.msra.mxu0 0.0
    %1653 = vmatprep.subr.mxu0 0.0
    %1654 = vmatpush1.msra.mxu0 0.0
    %1655 = vmatprep.subr.mxu0 0.0
    %1656 = vmatpush1.msra.mxu0 0.0
    %1657 = vmatprep.subr.mxu0 0.0
    %1658 = vmatpush1.msra.mxu0 0.0
    %1659 = vmatprep.subr.mxu0 0.0
    %1660 = vmatpush1.msra.mxu0 0.0
    %1661 = vmatprep.subr.mxu0 0.0
    %1662 = vmatpush1.msra.mxu0 0.0
    %1663 = vmatprep.subr.mxu0 0.0
    %1664 = vmatpush1.msra.mxu0 0.0
    %1665 = vmatprep.subr.mxu0 0.0
    %1666 = vmatpush1.msra.mxu0 0.0
    %1667 = vmatprep.subr.mxu0 0.0
    %1668 = vmatpush1.msra.mxu0 0.0
    %1669 = vmatprep.subr.mxu0 0.0
    %1670 = vmatpush1.msra.mxu0 0.0
    %1671 = vmatprep.mubr.f32.mxu0 0.0
    %1672 = vmatmul.mubr.f32.gmra.mrb[0].mxu0 %v345
    %v1673 = vpop.f32.mrb[0].mxu0
    %v1674 = vadd.f32 %v1432, %v1673
    %v1675 = vpop.f32.mrb[0].mxu0
    %v1676 = vadd.f32 %v1436, %v1675
    %1677 = vmatprep.mubr.f32.mxu0 0.0
    %1678 = vmatmul.mubr.f32.gmra.mrb[0].mxu0 %v348
    %v1679 = vpop.f32.mrb[0].mxu0
    %v1680 = vadd.f32 %v1432, %v1679
    %v1681 = vpop.f32.mrb[0].mxu0
    %v1682 = vadd.f32 %v1436, %v1681
    %1683 = vdwg.mxu0
    %1684 = vmatprep.subr.mxu0 %v1386
    %1685 = vmatpush1.msra.mxu0 %v1385
    %1686 = vmatprep.subr.mxu0 %v1394
    %1687 = vmatpush1.msra.mxu0 %v1393
    %1688 = vmatprep.subr.mxu0 %v1402
    %1689 = vmatpush1.msra.mxu0 %v1401
    %1690 = vmatprep.subr.mxu0 %v1410
    %1691 = vmatpush1.msra.mxu0 %v1409
    %1692 = vmatprep.subr.mxu0 0.0
    %1693 = vmatpush1.msra.mxu0 0.0
    %1694 = vmatprep.subr.mxu0 0.0
    %1695 = vmatpush1.msra.mxu0 0.0
    %1696 = vmatprep.subr.mxu0 0.0
    %1697 = vmatpush1.msra.mxu0 0.0
    %1698 = vmatprep.subr.mxu0 0.0
    %1699 = vmatpush1.msra.mxu0 0.0
    %1700 = vmatprep.subr.mxu0 0.0
    %1701 = vmatpush1.msra.mxu0 0.0
    %1702 = vmatprep.subr.mxu0 0.0
    %1703 = vmatpush1.msra.mxu0 0.0
    %1704 = vmatprep.subr.mxu0 0.0
    %1705 = vmatpush1.msra.mxu0 0.0
    %1706 = vmatprep.subr.mxu0 0.0
    %1707 = vmatpush1.msra.mxu0 0.0
    %1708 = vmatprep.subr.mxu0 0.0
    %1709 = vmatpush1.msra.mxu0 0.0
    %1710 = vmatprep.subr.mxu0 0.0
    %1711 = vmatpush1.msra.mxu0 0.0
    %1712 = vmatprep.subr.mxu0 0.0
    %1713 = vmatpush1.msra.mxu0 0.0
    %1714 = vmatprep.subr.mxu0 0.0
    %1715 = vmatpush1.msra.mxu0 0.0
    %1716 = vmatprep.subr.mxu0 0.0
    %1717 = vmatpush1.msra.mxu0 0.0
    %1718 = vmatprep.subr.mxu0 0.0
    %1719 = vmatpush1.msra.mxu0 0.0
    %1720 = vmatprep.subr.mxu0 0.0
    %1721 = vmatpush1.msra.mxu0 0.0
    %1722 = vmatprep.subr.mxu0 0.0
    %1723 = vmatpush1.msra.mxu0 0.0
    %1724 = vmatprep.subr.mxu0 0.0
    %1725 = vmatpush1.msra.mxu0 0.0
    %1726 = vmatprep.subr.mxu0 0.0
    %1727 = vmatpush1.msra.mxu0 0.0
    %1728 = vmatprep.subr.mxu0 0.0
    %1729 = vmatpush1.msra.mxu0 0.0
    %1730 = vmatprep.subr.mxu0 0.0
    %1731 = vmatpush1.msra.mxu0 0.0
    %1732 = vmatprep.subr.mxu0 0.0
    %1733 = vmatpush1.msra.mxu0 0.0
    %1734 = vmatprep.subr.mxu0 0.0
    %1735 = vmatpush1.msra.mxu0 0.0
    %1736 = vmatprep.subr.mxu0 0.0
    %1737 = vmatpush1.msra.mxu0 0.0
    %1738 = vmatprep.subr.mxu0 0.0
    %1739 = vmatpush1.msra.mxu0 0.0
    %1740 = vmatprep.subr.mxu0 0.0
    %1741 = vmatpush1.msra.mxu0 0.0
    %1742 = vmatprep.subr.mxu0 0.0
    %1743 = vmatpush1.msra.mxu0 0.0
    %1744 = vmatprep.subr.mxu0 0.0
    %1745 = vmatpush1.msra.mxu0 0.0
    %1746 = vmatprep.subr.mxu0 0.0
    %1747 = vmatpush1.msra.mxu0 0.0
    %1748 = vmatprep.mubr.f32.mxu0 0.0
    %1749 = vmatmul.mubr.f32.gmra.mrb[0].mxu0 %v345
    %v1750 = vpop.f32.mrb[0].mxu0
    %v1751 = vadd.f32 %v1440, %v1750
    %v1752 = vpop.f32.mrb[0].mxu0
    %v1753 = vadd.f32 %v1444, %v1752
    %1754 = vmatprep.mubr.f32.mxu0 0.0
    %1755 = vmatmul.mubr.f32.gmra.mrb[0].mxu0 %v348
    %v1756 = vpop.f32.mrb[0].mxu0
    %v1757 = vadd.f32 %v1440, %v1756
    %v1758 = vpop.f32.mrb[0].mxu0
    %v1759 = vadd.f32 %v1444, %v1758
    %1760 = vdwg.mxu0
    %v1761 = vtanh.pop %v1520
    %v1762 = vtanh.pop %v1522
    %v1763 = vtanh.pop %v1597
    %v1764 = vtanh.pop %v1599
    %v1765 = vtanh.pop %v1674
    %v1766 = vtanh.pop %v1676
    %v1767 = vtanh.pop %v1751
    %v1768 = vtanh.pop %v1753
    %v1769 = vtanh.pop %v1526
    %v1770 = vtanh.pop %v1528
    %v1771 = vtanh.pop %v1603
    %v1772 = vtanh.pop %v1605
    %v1773 = vtanh.pop %v1680
    %v1774 = vtanh.pop %v1682
    %v1775 = vtanh.pop %v1757
    %v1776 = vtanh.pop %v1759
    %v1777 = vmul.f32 %v1761, 5.0
    %v1778 = vmul.f32 %v1762, 5.0
    %v1779 = vmul.f32 %v1763, 5.0
    %v1780 = vmul.f32 %v1764, 5.0
    %v1781 = vmul.f32 %v1765, 5.0
    %v1782 = vmul.f32 %v1766, 5.0
    %v1783 = vmul.f32 %v1767, 5.0
    %v1784 = vmul.f32 %v1768, 5.0
    %v1785 = vmul.f32 %v1769, 5.0
    %v1786 = vmul.f32 %v1770, 5.0
    %v1787 = vmul.f32 %v1771, 5.0
    %v1788 = vmul.f32 %v1772, 5.0
    %v1789 = vmul.f32 %v1773, 5.0
    %v1790 = vmul.f32 %v1774, 5.0
    %v1791 = vmul.f32 %v1775, 5.0
    %v1792 = vmul.f32 %v1776, 5.0
    %v1793 = vld [vmem:[#allocation13] sm:$0xff]
    %v1794 = vld [vmem:[#allocation13 + $0x8] sm:$0xff]
    %v1795 = vld [vmem:[#allocation13 + $0x10] sm:$0xff]
    %v1796 = vld [vmem:[#allocation13 + $0x18] sm:$0xff]
    %v1797 = vld [vmem:[#allocation13 + $0x20] sm:$0xff]
    %v1798 = vld [vmem:[#allocation13 + $0x28] sm:$0xff]
    %v1799 = vld [vmem:[#allocation13 + $0x30] sm:$0xff]
    %v1800 = vld [vmem:[#allocation13 + $0x38] sm:$0xff]
    %v1801 = vld [vmem:[#allocation13 + $0x40] sm:$0xff]
    %v1802 = vld [vmem:[#allocation13 + $0x48] sm:$0xff]
    %v1803 = vld [vmem:[#allocation13 + $0x50] sm:$0xff]
    %v1804 = vld [vmem:[#allocation13 + $0x58] sm:$0xff]
    %v1805 = vld [vmem:[#allocation13 + $0x60] sm:$0xff]
    %v1806 = vld [vmem:[#allocation13 + $0x68] sm:$0xff]
    %v1807 = vld [vmem:[#allocation13 + $0x70] sm:$0xff]
    %v1808 = vld [vmem:[#allocation13 + $0x78] sm:$0xff]
    %v1809 = vld [vmem:[#allocation13 + $0x80] sm:$0xff]
    %v1810 = vld [vmem:[#allocation13 + $0x88] sm:$0xff]
    %v1811 = vld [vmem:[#allocation13 + $0x90] sm:$0xff]
    %v1812 = vld [vmem:[#allocation13 + $0x98] sm:$0xff]
    %v1813 = vld [vmem:[#allocation13 + $0xa0] sm:$0xff]
    %v1814 = vld [vmem:[#allocation13 + $0xa8] sm:$0xff]
    %v1815 = vld [vmem:[#allocation13 + $0xb0] sm:$0xff]
    %v1816 = vld [vmem:[#allocation13 + $0xb8] sm:$0xff]
    %v1817 = vld [vmem:[#allocation13 + $0xc0] sm:$0xff]
    %v1818 = vld [vmem:[#allocation13 + $0xc8] sm:$0xff]
    %v1819 = vld [vmem:[#allocation13 + $0xd0] sm:$0xff]
    %v1820 = vld [vmem:[#allocation13 + $0xd8] sm:$0xff]
    %v1821 = vld [vmem:[#allocation13 + $0xe0] sm:$0xff]
    %v1822 = vld [vmem:[#allocation13 + $0xe8] sm:$0xff]
    %v1823 = vld [vmem:[#allocation13 + $0xf0] sm:$0xff]
    %v1824 = vld [vmem:[#allocation13 + $0xf8] sm:$0xff]
    %v1825 = vld [vmem:[#allocation13 + $0x100] sm:$0xff]
    %v1826 = vld [vmem:[#allocation13 + $0x108] sm:$0xff]
    %v1827 = vld [vmem:[#allocation13 + $0x110] sm:$0xff]
    %v1828 = vld [vmem:[#allocation13 + $0x118] sm:$0xff]
    %v1829 = vld [vmem:[#allocation13 + $0x120] sm:$0xff]
    %v1830 = vld [vmem:[#allocation13 + $0x128] sm:$0xff]
    %v1831 = vld [vmem:[#allocation13 + $0x130] sm:$0xff]
    %v1832 = vld [vmem:[#allocation13 + $0x138] sm:$0xff]
    %v1833 = vld [vmem:[#allocation13 + $0x140] sm:$0xff]
    %v1834 = vld [vmem:[#allocation13 + $0x148] sm:$0xff]
    %v1835 = vld [vmem:[#allocation13 + $0x150] sm:$0xff]
    %v1836 = vld [vmem:[#allocation13 + $0x158] sm:$0xff]
    %v1837 = vld [vmem:[#allocation13 + $0x160] sm:$0xff]
    %v1838 = vld [vmem:[#allocation13 + $0x168] sm:$0xff]
    %v1839 = vld [vmem:[#allocation13 + $0x170] sm:$0xff]
    %v1840 = vld [vmem:[#allocation13 + $0x178] sm:$0xff]
    %v1841 = vld [vmem:[#allocation13 + $0x180] sm:$0xff]
    %v1842 = vld [vmem:[#allocation13 + $0x188] sm:$0xff]
    %v1843 = vld [vmem:[#allocation13 + $0x190] sm:$0xff]
    %v1844 = vld [vmem:[#allocation13 + $0x198] sm:$0xff]
    %v1845 = vld [vmem:[#allocation13 + $0x1a0] sm:$0xff]
    %v1846 = vld [vmem:[#allocation13 + $0x1a8] sm:$0xff]
    %v1847 = vld [vmem:[#allocation13 + $0x1b0] sm:$0xff]
    %v1848 = vld [vmem:[#allocation13 + $0x1b8] sm:$0xff]
    %v1849 = vld [vmem:[#allocation13 + $0x1c0] sm:$0xff]
    %v1850 = vld [vmem:[#allocation13 + $0x1c8] sm:$0xff]
    %v1851 = vld [vmem:[#allocation13 + $0x1d0] sm:$0xff]
    %v1852 = vld [vmem:[#allocation13 + $0x1d8] sm:$0xff]
    %v1853 = vld [vmem:[#allocation13 + $0x1e0] sm:$0xff]
    %v1854 = vld [vmem:[#allocation13 + $0x1e8] sm:$0xff]
    %v1855 = vld [vmem:[#allocation13 + $0x1f0] sm:$0xff]
    %v1856 = vld [vmem:[#allocation13 + $0x1f8] sm:$0xff]
    %v1857 = vld [vmem:[#allocation13 + $0x200] sm:$0xff]
    %v1858 = vld [vmem:[#allocation13 + $0x208] sm:$0xff]
    %v1859 = vld [vmem:[#allocation13 + $0x210] sm:$0xff]
    %v1860 = vld [vmem:[#allocation13 + $0x218] sm:$0xff]
    %v1861 = vld [vmem:[#allocation13 + $0x220] sm:$0xff]
    %v1862 = vld [vmem:[#allocation13 + $0x228] sm:$0xff]
    %v1863 = vld [vmem:[#allocation13 + $0x230] sm:$0xff]
    %v1864 = vld [vmem:[#allocation13 + $0x238] sm:$0xff]
    %v1865 = vld [vmem:[#allocation13 + $0x240] sm:$0xff]
    %v1866 = vld [vmem:[#allocation13 + $0x248] sm:$0xff]
    %v1867 = vld [vmem:[#allocation13 + $0x250] sm:$0xff]
    %v1868 = vld [vmem:[#allocation13 + $0x258] sm:$0xff]
    %v1869 = vld [vmem:[#allocation13 + $0x260] sm:$0xff]
    %v1870 = vld [vmem:[#allocation13 + $0x268] sm:$0xff]
    %v1871 = vld [vmem:[#allocation13 + $0x270] sm:$0xff]
    %v1872 = vld [vmem:[#allocation13 + $0x278] sm:$0xff]
    %v1873 = vld [vmem:[#allocation13 + $0x280] sm:$0xff]
    %v1874 = vld [vmem:[#allocation13 + $0x288] sm:$0xff]
    %v1875 = vld [vmem:[#allocation13 + $0x290] sm:$0xff]
    %v1876 = vld [vmem:[#allocation13 + $0x298] sm:$0xff]
    %v1877 = vld [vmem:[#allocation13 + $0x2a0] sm:$0xff]
    %v1878 = vld [vmem:[#allocation13 + $0x2a8] sm:$0xff]
    %v1879 = vld [vmem:[#allocation13 + $0x2b0] sm:$0xff]
    %v1880 = vld [vmem:[#allocation13 + $0x2b8] sm:$0xff]
    %v1881 = vld [vmem:[#allocation13 + $0x2c0] sm:$0xff]
    %v1882 = vld [vmem:[#allocation13 + $0x2c8] sm:$0xff]
    %v1883 = vld [vmem:[#allocation13 + $0x2d0] sm:$0xff]
    %v1884 = vld [vmem:[#allocation13 + $0x2d8] sm:$0xff]
    %v1885 = vld [vmem:[#allocation13 + $0x2e0] sm:$0xff]
    %v1886 = vld [vmem:[#allocation13 + $0x2e8] sm:$0xff]
    %v1887 = vld [vmem:[#allocation13 + $0x2f0] sm:$0xff]
    %v1888 = vld [vmem:[#allocation13 + $0x2f8] sm:$0xff]
    %v1889 = vld [vmem:[#allocation13 + $0x300] sm:$0xff]
    %v1890 = vld [vmem:[#allocation13 + $0x308] sm:$0xff]
    %v1891 = vld [vmem:[#allocation13 + $0x310] sm:$0xff]
    %v1892 = vld [vmem:[#allocation13 + $0x318] sm:$0xff]
    %v1893 = vld [vmem:[#allocation13 + $0x320] sm:$0xff]
    %v1894 = vld [vmem:[#allocation13 + $0x328] sm:$0xff]
    %v1895 = vld [vmem:[#allocation13 + $0x330] sm:$0xff]
    %v1896 = vld [vmem:[#allocation13 + $0x338] sm:$0xff]
    %v1897 = vld [vmem:[#allocation13 + $0x340] sm:$0xff]
    %v1898 = vld [vmem:[#allocation13 + $0x348] sm:$0xff]
    %v1899 = vld [vmem:[#allocation13 + $0x350] sm:$0xff]
    %v1900 = vld [vmem:[#allocation13 + $0x358] sm:$0xff]
    %v1901 = vld [vmem:[#allocation13 + $0x360] sm:$0xff]
    %v1902 = vld [vmem:[#allocation13 + $0x368] sm:$0xff]
    %v1903 = vld [vmem:[#allocation13 + $0x370] sm:$0xff]
    %v1904 = vld [vmem:[#allocation13 + $0x378] sm:$0xff]
    %v1905 = vld [vmem:[#allocation13 + $0x380] sm:$0xff]
    %v1906 = vld [vmem:[#allocation13 + $0x388] sm:$0xff]
    %v1907 = vld [vmem:[#allocation13 + $0x390] sm:$0xff]
    %v1908 = vld [vmem:[#allocation13 + $0x398] sm:$0xff]
    %v1909 = vld [vmem:[#allocation13 + $0x3a0] sm:$0xff]
    %v1910 = vld [vmem:[#allocation13 + $0x3a8] sm:$0xff]
    %v1911 = vld [vmem:[#allocation13 + $0x3b0] sm:$0xff]
    %v1912 = vld [vmem:[#allocation13 + $0x3b8] sm:$0xff]
    %v1913 = vld [vmem:[#allocation13 + $0x3c0] sm:$0xff]
    %v1914 = vld [vmem:[#allocation13 + $0x3c8] sm:$0xff]
    %v1915 = vld [vmem:[#allocation13 + $0x3d0] sm:$0xff]
    %v1916 = vld [vmem:[#allocation13 + $0x3d8] sm:$0xff]
    %v1917 = vld [vmem:[#allocation13 + $0x3e0] sm:$0xff]
    %v1918 = vld [vmem:[#allocation13 + $0x3e8] sm:$0xff]
    %v1919 = vld [vmem:[#allocation13 + $0x3f0] sm:$0xff]
    %v1920 = vld [vmem:[#allocation13 + $0x3f8] sm:$0xff]
    %1921 = vmatprep.subr.mxu0 %v1794
    %1922 = vmatpush1.msra.mxu0 %v1793
    %1923 = vmatprep.subr.mxu0 %v1802
    %1924 = vmatpush1.msra.mxu0 %v1801
    %1925 = vmatprep.subr.mxu0 %v1810
    %1926 = vmatpush1.msra.mxu0 %v1809
    %1927 = vmatprep.subr.mxu0 %v1818
    %1928 = vmatpush1.msra.mxu0 %v1817
    %1929 = vmatprep.subr.mxu0 %v1826
    %1930 = vmatpush1.msra.mxu0 %v1825
    %1931 = vmatprep.subr.mxu0 %v1834
    %1932 = vmatpush1.msra.mxu0 %v1833
    %1933 = vmatprep.subr.mxu0 %v1842
    %1934 = vmatpush1.msra.mxu0 %v1841
    %1935 = vmatprep.subr.mxu0 %v1850
    %1936 = vmatpush1.msra.mxu0 %v1849
    %1937 = vmatprep.subr.mxu0 %v1858
    %1938 = vmatpush1.msra.mxu0 %v1857
    %1939 = vmatprep.subr.mxu0 %v1866
    %1940 = vmatpush1.msra.mxu0 %v1865
    %1941 = vmatprep.subr.mxu0 %v1874
    %1942 = vmatpush1.msra.mxu0 %v1873
    %1943 = vmatprep.subr.mxu0 %v1882
    %1944 = vmatpush1.msra.mxu0 %v1881
    %1945 = vmatprep.subr.mxu0 %v1890
    %1946 = vmatpush1.msra.mxu0 %v1889
    %1947 = vmatprep.subr.mxu0 %v1898
    %1948 = vmatpush1.msra.mxu0 %v1897
    %1949 = vmatprep.subr.mxu0 %v1906
    %1950 = vmatpush1.msra.mxu0 %v1905
    %1951 = vmatprep.subr.mxu0 %v1914
    %1952 = vmatpush1.msra.mxu0 %v1913
    %1953 = vmatprep.subr.mxu0 0.0
    %1954 = vmatpush1.msra.mxu0 0.0
    %1955 = vmatprep.subr.mxu0 0.0
    %1956 = vmatpush1.msra.mxu0 0.0
    %1957 = vmatprep.subr.mxu0 0.0
    %1958 = vmatpush1.msra.mxu0 0.0
    %1959 = vmatprep.subr.mxu0 0.0
    %1960 = vmatpush1.msra.mxu0 0.0
    %1961 = vmatprep.subr.mxu0 0.0
    %1962 = vmatpush1.msra.mxu0 0.0
    %1963 = vmatprep.subr.mxu0 0.0
    %1964 = vmatpush1.msra.mxu0 0.0
    %1965 = vmatprep.subr.mxu0 0.0
    %1966 = vmatpush1.msra.mxu0 0.0
    %1967 = vmatprep.subr.mxu0 0.0
    %1968 = vmatpush1.msra.mxu0 0.0
    %1969 = vmatprep.subr.mxu0 0.0
    %1970 = vmatpush1.msra.mxu0 0.0
    %1971 = vmatprep.subr.mxu0 0.0
    %1972 = vmatpush1.msra.mxu0 0.0
    %1973 = vmatprep.subr.mxu0 0.0
    %1974 = vmatpush1.msra.mxu0 0.0
    %1975 = vmatprep.subr.mxu0 0.0
    %1976 = vmatpush1.msra.mxu0 0.0
    %1977 = vmatprep.subr.mxu0 0.0
    %1978 = vmatpush1.msra.mxu0 0.0
    %1979 = vmatprep.subr.mxu0 0.0
    %1980 = vmatpush1.msra.mxu0 0.0
    %1981 = vmatprep.subr.mxu0 0.0
    %1982 = vmatpush1.msra.mxu0 0.0
    %1983 = vmatprep.subr.mxu0 0.0
    %1984 = vmatpush1.msra.mxu0 0.0
    %1985 = vmatprep.mubr.f32.mxu0 0.0
    %1986 = vmatmul.mubr.f32.gmra.mrb[0].mxu0 %v1377
    %v1987 = vpop.f32.mrb[0].mxu0
    %v1988 = vadd.f32 0.0, %v1987
    %v1989 = vpop.f32.mrb[0].mxu0
    %v1990 = vadd.f32 0.0, %v1989
    %1991 = vmatprep.mubr.f32.mxu0 0.0
    %1992 = vmatmul.mubr.f32.gmra.mrb[0].mxu0 %v1378
    %v1993 = vpop.f32.mrb[0].mxu0
    %v1994 = vadd.f32 0.0, %v1993
    %v1995 = vpop.f32.mrb[0].mxu0
    %v1996 = vadd.f32 0.0, %v1995
    %1997 = vdwg.mxu0
    %1998 = vmatprep.subr.mxu0 %v1796
    %1999 = vmatpush1.msra.mxu0 %v1795
    %2000 = vmatprep.subr.mxu0 %v1804
    %2001 = vmatpush1.msra.mxu0 %v1803
    %2002 = vmatprep.subr.mxu0 %v1812
    %2003 = vmatpush1.msra.mxu0 %v1811
    %2004 = vmatprep.subr.mxu0 %v1820
    %2005 = vmatpush1.msra.mxu0 %v1819
    %2006 = vmatprep.subr.mxu0 %v1828
    %2007 = vmatpush1.msra.mxu0 %v1827
    %2008 = vmatprep.subr.mxu0 %v1836
    %2009 = vmatpush1.msra.mxu0 %v1835
    %2010 = vmatprep.subr.mxu0 %v1844
    %2011 = vmatpush1.msra.mxu0 %v1843
    %2012 = vmatprep.subr.mxu0 %v1852
    %2013 = vmatpush1.msra.mxu0 %v1851
    %2014 = vmatprep.subr.mxu0 %v1860
    %2015 = vmatpush1.msra.mxu0 %v1859
    %2016 = vmatprep.subr.mxu0 %v1868
    %2017 = vmatpush1.msra.mxu0 %v1867
    %2018 = vmatprep.subr.mxu0 %v1876
    %2019 = vmatpush1.msra.mxu0 %v1875
    %2020 = vmatprep.subr.mxu0 %v1884
    %2021 = vmatpush1.msra.mxu0 %v1883
    %2022 = vmatprep.subr.mxu0 %v1892
    %2023 = vmatpush1.msra.mxu0 %v1891
    %2024 = vmatprep.subr.mxu0 %v1900
    %2025 = vmatpush1.msra.mxu0 %v1899
    %2026 = vmatprep.subr.mxu0 %v1908
    %2027 = vmatpush1.msra.mxu0 %v1907
    %2028 = vmatprep.subr.mxu0 %v1916
    %2029 = vmatpush1.msra.mxu0 %v1915
    %2030 = vmatprep.subr.mxu0 0.0
    %2031 = vmatpush1.msra.mxu0 0.0
    %2032 = vmatprep.subr.mxu0 0.0
    %2033 = vmatpush1.msra.mxu0 0.0
    %2034 = vmatprep.subr.mxu0 0.0
    %2035 = vmatpush1.msra.mxu0 0.0
    %2036 = vmatprep.subr.mxu0 0.0
    %2037 = vmatpush1.msra.mxu0 0.0
    %2038 = vmatprep.subr.mxu0 0.0
    %2039 = vmatpush1.msra.mxu0 0.0
    %2040 = vmatprep.subr.mxu0 0.0
    %2041 = vmatpush1.msra.mxu0 0.0
    %2042 = vmatprep.subr.mxu0 0.0
    %2043 = vmatpush1.msra.mxu0 0.0
    %2044 = vmatprep.subr.mxu0 0.0
    %2045 = vmatpush1.msra.mxu0 0.0
    %2046 = vmatprep.subr.mxu0 0.0
    %2047 = vmatpush1.msra.mxu0 0.0
    %2048 = vmatprep.subr.mxu0 0.0
    %2049 = vmatpush1.msra.mxu0 0.0
    %2050 = vmatprep.subr.mxu0 0.0
    %2051 = vmatpush1.msra.mxu0 0.0
    %2052 = vmatprep.subr.mxu0 0.0
    %2053 = vmatpush1.msra.mxu0 0.0
    %2054 = vmatprep.subr.mxu0 0.0
    %2055 = vmatpush1.msra.mxu0 0.0
    %2056 = vmatprep.subr.mxu0 0.0
    %2057 = vmatpush1.msra.mxu0 0.0
    %2058 = vmatprep.subr.mxu0 0.0
    %2059 = vmatpush1.msra.mxu0 0.0
    %2060 = vmatprep.subr.mxu0 0.0
    %2061 = vmatpush1.msra.mxu0 0.0
    %2062 = vmatprep.mubr.f32.mxu0 0.0
    %2063 = vmatmul.mubr.f32.gmra.mrb[0].mxu0 %v1377
    %v2064 = vpop.f32.mrb[0].mxu0
    %v2065 = vadd.f32 0.0, %v2064
    %v2066 = vpop.f32.mrb[0].mxu0
    %v2067 = vadd.f32 0.0, %v2066
    %2068 = vmatprep.mubr.f32.mxu0 0.0
    %2069 = vmatmul.mubr.f32.gmra.mrb[0].mxu0 %v1378
    %v2070 = vpop.f32.mrb[0].mxu0
    %v2071 = vadd.f32 0.0, %v2070
    %v2072 = vpop.f32.mrb[0].mxu0
    %v2073 = vadd.f32 0.0, %v2072
    %2074 = vdwg.mxu0
    %2075 = vmatprep.subr.mxu0 %v1798
    %2076 = vmatpush1.msra.mxu0 %v1797
    %2077 = vmatprep.subr.mxu0 %v1806
    %2078 = vmatpush1.msra.mxu0 %v1805
    %2079 = vmatprep.subr.mxu0 %v1814
    %2080 = vmatpush1.msra.mxu0 %v1813
    %2081 = vmatprep.subr.mxu0 %v1822
    %2082 = vmatpush1.msra.mxu0 %v1821
    %2083 = vmatprep.subr.mxu0 %v1830
    %2084 = vmatpush1.msra.mxu0 %v1829
    %2085 = vmatprep.subr.mxu0 %v1838
    %2086 = vmatpush1.msra.mxu0 %v1837
    %2087 = vmatprep.subr.mxu0 %v1846
    %2088 = vmatpush1.msra.mxu0 %v1845
    %2089 = vmatprep.subr.mxu0 %v1854
    %2090 = vmatpush1.msra.mxu0 %v1853
    %2091 = vmatprep.subr.mxu0 %v1862
    %2092 = vmatpush1.msra.mxu0 %v1861
    %2093 = vmatprep.subr.mxu0 %v1870
    %2094 = vmatpush1.msra.mxu0 %v1869
    %2095 = vmatprep.subr.mxu0 %v1878
    %2096 = vmatpush1.msra.mxu0 %v1877
    %2097 = vmatprep.subr.mxu0 %v1886
    %2098 = vmatpush1.msra.mxu0 %v1885
    %2099 = vmatprep.subr.mxu0 %v1894
    %2100 = vmatpush1.msra.mxu0 %v1893
    %2101 = vmatprep.subr.mxu0 %v1902
    %2102 = vmatpush1.msra.mxu0 %v1901
    %2103 = vmatprep.subr.mxu0 %v1910
    %2104 = vmatpush1.msra.mxu0 %v1909
    %2105 = vmatprep.subr.mxu0 %v1918
    %2106 = vmatpush1.msra.mxu0 %v1917
    %2107 = vmatprep.subr.mxu0 0.0
    %2108 = vmatpush1.msra.mxu0 0.0
    %2109 = vmatprep.subr.mxu0 0.0
    %2110 = vmatpush1.msra.mxu0 0.0
    %2111 = vmatprep.subr.mxu0 0.0
    %2112 = vmatpush1.msra.mxu0 0.0
    %2113 = vmatprep.subr.mxu0 0.0
    %2114 = vmatpush1.msra.mxu0 0.0
    %2115 = vmatprep.subr.mxu0 0.0
    %2116 = vmatpush1.msra.mxu0 0.0
    %2117 = vmatprep.subr.mxu0 0.0
    %2118 = vmatpush1.msra.mxu0 0.0
    %2119 = vmatprep.subr.mxu0 0.0
    %2120 = vmatpush1.msra.mxu0 0.0
    %2121 = vmatprep.subr.mxu0 0.0
    %2122 = vmatpush1.msra.mxu0 0.0
    %2123 = vmatprep.subr.mxu0 0.0
    %2124 = vmatpush1.msra.mxu0 0.0
    %2125 = vmatprep.subr.mxu0 0.0
    %2126 = vmatpush1.msra.mxu0 0.0
    %2127 = vmatprep.subr.mxu0 0.0
    %2128 = vmatpush1.msra.mxu0 0.0
    %2129 = vmatprep.subr.mxu0 0.0
    %2130 = vmatpush1.msra.mxu0 0.0
    %2131 = vmatprep.subr.mxu0 0.0
    %2132 = vmatpush1.msra.mxu0 0.0
    %2133 = vmatprep.subr.mxu0 0.0
    %2134 = vmatpush1.msra.mxu0 0.0
    %2135 = vmatprep.subr.mxu0 0.0
    %2136 = vmatpush1.msra.mxu0 0.0
    %2137 = vmatprep.subr.mxu0 0.0
    %2138 = vmatpush1.msra.mxu0 0.0
    %2139 = vmatprep.mubr.f32.mxu0 0.0
    %2140 = vmatmul.mubr.f32.gmra.mrb[0].mxu0 %v1377
    %v2141 = vpop.f32.mrb[0].mxu0
    %v2142 = vadd.f32 0.0, %v2141
    %v2143 = vpop.f32.mrb[0].mxu0
    %v2144 = vadd.f32 0.0, %v2143
    %2145 = vmatprep.mubr.f32.mxu0 0.0
    %2146 = vmatmul.mubr.f32.gmra.mrb[0].mxu0 %v1378
    %v2147 = vpop.f32.mrb[0].mxu0
    %v2148 = vadd.f32 0.0, %v2147
    %v2149 = vpop.f32.mrb[0].mxu0
    %v2150 = vadd.f32 0.0, %v2149
    %2151 = vdwg.mxu0
    %2152 = vmatprep.subr.mxu0 %v1800
    %2153 = vmatpush1.msra.mxu0 %v1799
    %2154 = vmatprep.subr.mxu0 %v1808
    %2155 = vmatpush1.msra.mxu0 %v1807
    %2156 = vmatprep.subr.mxu0 %v1816
    %2157 = vmatpush1.msra.mxu0 %v1815
    %2158 = vmatprep.subr.mxu0 %v1824
    %2159 = vmatpush1.msra.mxu0 %v1823
    %2160 = vmatprep.subr.mxu0 %v1832
    %2161 = vmatpush1.msra.mxu0 %v1831
    %2162 = vmatprep.subr.mxu0 %v1840
    %2163 = vmatpush1.msra.mxu0 %v1839
    %2164 = vmatprep.subr.mxu0 %v1848
    %2165 = vmatpush1.msra.mxu0 %v1847
    %2166 = vmatprep.subr.mxu0 %v1856
    %2167 = vmatpush1.msra.mxu0 %v1855
    %2168 = vmatprep.subr.mxu0 %v1864
    %2169 = vmatpush1.msra.mxu0 %v1863
    %2170 = vmatprep.subr.mxu0 %v1872
    %2171 = vmatpush1.msra.mxu0 %v1871
    %2172 = vmatprep.subr.mxu0 %v1880
    %2173 = vmatpush1.msra.mxu0 %v1879
    %2174 = vmatprep.subr.mxu0 %v1888
    %2175 = vmatpush1.msra.mxu0 %v1887
    %2176 = vmatprep.subr.mxu0 %v1896
    %2177 = vmatpush1.msra.mxu0 %v1895
    %2178 = vmatprep.subr.mxu0 %v1904
    %2179 = vmatpush1.msra.mxu0 %v1903
    %2180 = vmatprep.subr.mxu0 %v1912
    %2181 = vmatpush1.msra.mxu0 %v1911
    %2182 = vmatprep.subr.mxu0 %v1920
    %2183 = vmatpush1.msra.mxu0 %v1919
    %2184 = vmatprep.subr.mxu0 0.0
    %2185 = vmatpush1.msra.mxu0 0.0
    %2186 = vmatprep.subr.mxu0 0.0
    %2187 = vmatpush1.msra.mxu0 0.0
    %2188 = vmatprep.subr.mxu0 0.0
    %2189 = vmatpush1.msra.mxu0 0.0
    %2190 = vmatprep.subr.mxu0 0.0
    %2191 = vmatpush1.msra.mxu0 0.0
    %2192 = vmatprep.subr.mxu0 0.0
    %2193 = vmatpush1.msra.mxu0 0.0
    %2194 = vmatprep.subr.mxu0 0.0
    %2195 = vmatpush1.msra.mxu0 0.0
    %2196 = vmatprep.subr.mxu0 0.0
    %2197 = vmatpush1.msra.mxu0 0.0
    %2198 = vmatprep.subr.mxu0 0.0
    %2199 = vmatpush1.msra.mxu0 0.0
    %2200 = vmatprep.subr.mxu0 0.0
    %2201 = vmatpush1.msra.mxu0 0.0
    %2202 = vmatprep.subr.mxu0 0.0
    %2203 = vmatpush1.msra.mxu0 0.0
    %2204 = vmatprep.subr.mxu0 0.0
    %2205 = vmatpush1.msra.mxu0 0.0
    %2206 = vmatprep.subr.mxu0 0.0
    %2207 = vmatpush1.msra.mxu0 0.0
    %2208 = vmatprep.subr.mxu0 0.0
    %2209 = vmatpush1.msra.mxu0 0.0
    %2210 = vmatprep.subr.mxu0 0.0
    %2211 = vmatpush1.msra.mxu0 0.0
    %2212 = vmatprep.subr.mxu0 0.0
    %2213 = vmatpush1.msra.mxu0 0.0
    %2214 = vmatprep.subr.mxu0 0.0
    %2215 = vmatpush1.msra.mxu0 0.0
    %2216 = vmatprep.mubr.f32.mxu0 0.0
    %2217 = vmatmul.mubr.f32.gmra.mrb[0].mxu0 %v1377
    %v2218 = vpop.f32.mrb[0].mxu0
    %v2219 = vadd.f32 0.0, %v2218
    %v2220 = vpop.f32.mrb[0].mxu0
    %v2221 = vadd.f32 0.0, %v2220
    %2222 = vmatprep.mubr.f32.mxu0 0.0
    %2223 = vmatmul.mubr.f32.gmra.mrb[0].mxu0 %v1378
    %v2224 = vpop.f32.mrb[0].mxu0
    %v2225 = vadd.f32 0.0, %v2224
    %v2226 = vpop.f32.mrb[0].mxu0
    %v2227 = vadd.f32 0.0, %v2226
    %2228 = vdwg.mxu0
    %v2229 = vmul.f32 %v1988, %v1777
    %v2230 = vmul.f32 %v1990, %v1778
    %v2231 = vmul.f32 %v2065, %v1779
    %v2232 = vmul.f32 %v2067, %v1780
    %v2233 = vmul.f32 %v2142, %v1781
    %v2234 = vmul.f32 %v2144, %v1782
    %v2235 = vmul.f32 %v2219, %v1783
    %v2236 = vmul.f32 %v2221, %v1784
    %v2237 = vmul.f32 %v1994, %v1785
    %v2238 = vmul.f32 %v1996, %v1786
    %v2239 = vmul.f32 %v2071, %v1787
    %v2240 = vmul.f32 %v2073, %v1788
    %v2241 = vmul.f32 %v2148, %v1789
    %v2242 = vmul.f32 %v2150, %v1790
    %v2243 = vmul.f32 %v2225, %v1791
    %v2244 = vmul.f32 %v2227, %v1792
    %v2245 = vld [vmem:[#allocation14] sm:$0xff]
    %v2246 = vld [vmem:[#allocation14 + $0x8] sm:$0xff]
    %v2247 = vld [vmem:[#allocation14 + $0x10] sm:$0xff]
    %v2248 = vld [vmem:[#allocation14 + $0x18] sm:$0xff]
    %v2249 = vld [vmem:[#allocation14 + $0x20] sm:$0xff]
    %v2250 = vld [vmem:[#allocation14 + $0x28] sm:$0xff]
    %v2251 = vld [vmem:[#allocation14 + $0x30] sm:$0xff]
    %v2252 = vld [vmem:[#allocation14 + $0x38] sm:$0xff]
    %v2253 = vld [vmem:[#allocation14 + $0x40] sm:$0xff]
    %v2254 = vld [vmem:[#allocation14 + $0x48] sm:$0xff]
    %v2255 = vld [vmem:[#allocation14 + $0x50] sm:$0xff]
    %v2256 = vld [vmem:[#allocation14 + $0x58] sm:$0xff]
    %v2257 = vld [vmem:[#allocation14 + $0x60] sm:$0xff]
    %v2258 = vld [vmem:[#allocation14 + $0x68] sm:$0xff]
    %v2259 = vld [vmem:[#allocation14 + $0x70] sm:$0xff]
    %v2260 = vld [vmem:[#allocation14 + $0x78] sm:$0xff]
    %v2261 = vld [vmem:[#allocation14 + $0x80] sm:$0xff]
    %v2262 = vld [vmem:[#allocation14 + $0x88] sm:$0xff]
    %v2263 = vld [vmem:[#allocation14 + $0x90] sm:$0xff]
    %v2264 = vld [vmem:[#allocation14 + $0x98] sm:$0xff]
    %v2265 = vld [vmem:[#allocation14 + $0xa0] sm:$0xff]
    %v2266 = vld [vmem:[#allocation14 + $0xa8] sm:$0xff]
    %v2267 = vld [vmem:[#allocation14 + $0xb0] sm:$0xff]
    %v2268 = vld [vmem:[#allocation14 + $0xb8] sm:$0xff]
    %v2269 = vld [vmem:[#allocation14 + $0xc0] sm:$0xff]
    %v2270 = vld [vmem:[#allocation14 + $0xc8] sm:$0xff]
    %v2271 = vld [vmem:[#allocation14 + $0xd0] sm:$0xff]
    %v2272 = vld [vmem:[#allocation14 + $0xd8] sm:$0xff]
    %v2273 = vld [vmem:[#allocation14 + $0xe0] sm:$0xff]
    %v2274 = vld [vmem:[#allocation14 + $0xe8] sm:$0xff]
    %v2275 = vld [vmem:[#allocation14 + $0xf0] sm:$0xff]
    %v2276 = vld [vmem:[#allocation14 + $0xf8] sm:$0xff]
    %v2277 = vld [vmem:[#allocation14 + $0x100] sm:$0xff]
    %v2278 = vld [vmem:[#allocation14 + $0x108] sm:$0xff]
    %v2279 = vld [vmem:[#allocation14 + $0x110] sm:$0xff]
    %v2280 = vld [vmem:[#allocation14 + $0x118] sm:$0xff]
    %v2281 = vld [vmem:[#allocation14 + $0x120] sm:$0xff]
    %v2282 = vld [vmem:[#allocation14 + $0x128] sm:$0xff]
    %v2283 = vld [vmem:[#allocation14 + $0x130] sm:$0xff]
    %v2284 = vld [vmem:[#allocation14 + $0x138] sm:$0xff]
    %v2285 = vld [vmem:[#allocation14 + $0x140] sm:$0xff]
    %v2286 = vld [vmem:[#allocation14 + $0x148] sm:$0xff]
    %v2287 = vld [vmem:[#allocation14 + $0x150] sm:$0xff]
    %v2288 = vld [vmem:[#allocation14 + $0x158] sm:$0xff]
    %v2289 = vld [vmem:[#allocation14 + $0x160] sm:$0xff]
    %v2290 = vld [vmem:[#allocation14 + $0x168] sm:$0xff]
    %v2291 = vld [vmem:[#allocation14 + $0x170] sm:$0xff]
    %v2292 = vld [vmem:[#allocation14 + $0x178] sm:$0xff]
    %v2293 = vld [vmem:[#allocation14 + $0x180] sm:$0xff]
    %v2294 = vld [vmem:[#allocation14 + $0x188] sm:$0xff]
    %v2295 = vld [vmem:[#allocation14 + $0x190] sm:$0xff]
    %v2296 = vld [vmem:[#allocation14 + $0x198] sm:$0xff]
    %v2297 = vld [vmem:[#allocation14 + $0x1a0] sm:$0xff]
    %v2298 = vld [vmem:[#allocation14 + $0x1a8] sm:$0xff]
    %v2299 = vld [vmem:[#allocation14 + $0x1b0] sm:$0xff]
    %v2300 = vld [vmem:[#allocation14 + $0x1b8] sm:$0xff]
    %v2301 = vld [vmem:[#allocation14 + $0x1c0] sm:$0xff]
    %v2302 = vld [vmem:[#allocation14 + $0x1c8] sm:$0xff]
    %v2303 = vld [vmem:[#allocation14 + $0x1d0] sm:$0xff]
    %v2304 = vld [vmem:[#allocation14 + $0x1d8] sm:$0xff]
    %v2305 = vld [vmem:[#allocation14 + $0x1e0] sm:$0xff]
    %v2306 = vld [vmem:[#allocation14 + $0x1e8] sm:$0xff]
    %v2307 = vld [vmem:[#allocation14 + $0x1f0] sm:$0xff]
    %v2308 = vld [vmem:[#allocation14 + $0x1f8] sm:$0xff]
    %v2309 = vld [vmem:[#allocation14 + $0x200] sm:$0xff]
    %v2310 = vld [vmem:[#allocation14 + $0x208] sm:$0xff]
    %v2311 = vld [vmem:[#allocation14 + $0x210] sm:$0xff]
    %v2312 = vld [vmem:[#allocation14 + $0x218] sm:$0xff]
    %v2313 = vld [vmem:[#allocation14 + $0x220] sm:$0xff]
    %v2314 = vld [vmem:[#allocation14 + $0x228] sm:$0xff]
    %v2315 = vld [vmem:[#allocation14 + $0x230] sm:$0xff]
    %v2316 = vld [vmem:[#allocation14 + $0x238] sm:$0xff]
    %v2317 = vld [vmem:[#allocation14 + $0x240] sm:$0xff]
    %v2318 = vld [vmem:[#allocation14 + $0x248] sm:$0xff]
    %v2319 = vld [vmem:[#allocation14 + $0x250] sm:$0xff]
    %v2320 = vld [vmem:[#allocation14 + $0x258] sm:$0xff]
    %v2321 = vld [vmem:[#allocation14 + $0x260] sm:$0xff]
    %v2322 = vld [vmem:[#allocation14 + $0x268] sm:$0xff]
    %v2323 = vld [vmem:[#allocation14 + $0x270] sm:$0xff]
    %v2324 = vld [vmem:[#allocation14 + $0x278] sm:$0xff]
    %v2325 = vld [vmem:[#allocation14 + $0x280] sm:$0xff]
    %v2326 = vld [vmem:[#allocation14 + $0x288] sm:$0xff]
    %v2327 = vld [vmem:[#allocation14 + $0x290] sm:$0xff]
    %v2328 = vld [vmem:[#allocation14 + $0x298] sm:$0xff]
    %v2329 = vld [vmem:[#allocation14 + $0x2a0] sm:$0xff]
    %v2330 = vld [vmem:[#allocation14 + $0x2a8] sm:$0xff]
    %v2331 = vld [vmem:[#allocation14 + $0x2b0] sm:$0xff]
    %v2332 = vld [vmem:[#allocation14 + $0x2b8] sm:$0xff]
    %v2333 = vld [vmem:[#allocation14 + $0x2c0] sm:$0xff]
    %v2334 = vld [vmem:[#allocation14 + $0x2c8] sm:$0xff]
    %v2335 = vld [vmem:[#allocation14 + $0x2d0] sm:$0xff]
    %v2336 = vld [vmem:[#allocation14 + $0x2d8] sm:$0xff]
    %v2337 = vld [vmem:[#allocation14 + $0x2e0] sm:$0xff]
    %v2338 = vld [vmem:[#allocation14 + $0x2e8] sm:$0xff]
    %v2339 = vld [vmem:[#allocation14 + $0x2f0] sm:$0xff]
    %v2340 = vld [vmem:[#allocation14 + $0x2f8] sm:$0xff]
    %v2341 = vld [vmem:[#allocation14 + $0x300] sm:$0xff]
    %v2342 = vld [vmem:[#allocation14 + $0x308] sm:$0xff]
    %v2343 = vld [vmem:[#allocation14 + $0x310] sm:$0xff]
    %v2344 = vld [vmem:[#allocation14 + $0x318] sm:$0xff]
    %v2345 = vld [vmem:[#allocation14 + $0x320] sm:$0xff]
    %v2346 = vld [vmem:[#allocation14 + $0x328] sm:$0xff]
    %v2347 = vld [vmem:[#allocation14 + $0x330] sm:$0xff]
    %v2348 = vld [vmem:[#allocation14 + $0x338] sm:$0xff]
    %v2349 = vld [vmem:[#allocation14 + $0x340] sm:$0xff]
    %v2350 = vld [vmem:[#allocation14 + $0x348] sm:$0xff]
    %v2351 = vld [vmem:[#allocation14 + $0x350] sm:$0xff]
    %v2352 = vld [vmem:[#allocation14 + $0x358] sm:$0xff]
    %v2353 = vld [vmem:[#allocation14 + $0x360] sm:$0xff]
    %v2354 = vld [vmem:[#allocation14 + $0x368] sm:$0xff]
    %v2355 = vld [vmem:[#allocation14 + $0x370] sm:$0xff]
    %v2356 = vld [vmem:[#allocation14 + $0x378] sm:$0xff]
    %v2357 = vld [vmem:[#allocation14 + $0x380] sm:$0xff]
    %v2358 = vld [vmem:[#allocation14 + $0x388] sm:$0xff]
    %v2359 = vld [vmem:[#allocation14 + $0x390] sm:$0xff]
    %v2360 = vld [vmem:[#allocation14 + $0x398] sm:$0xff]
    %v2361 = vld [vmem:[#allocation14 + $0x3a0] sm:$0xff]
    %v2362 = vld [vmem:[#allocation14 + $0x3a8] sm:$0xff]
    %v2363 = vld [vmem:[#allocation14 + $0x3b0] sm:$0xff]
    %v2364 = vld [vmem:[#allocation14 + $0x3b8] sm:$0xff]
    %v2365 = vld [vmem:[#allocation14 + $0x3c0] sm:$0xff]
    %v2366 = vld [vmem:[#allocation14 + $0x3c8] sm:$0xff]
    %v2367 = vld [vmem:[#allocation14 + $0x3d0] sm:$0xff]
    %v2368 = vld [vmem:[#allocation14 + $0x3d8] sm:$0xff]
    %v2369 = vld [vmem:[#allocation14 + $0x3e0] sm:$0xff]
    %v2370 = vld [vmem:[#allocation14 + $0x3e8] sm:$0xff]
    %v2371 = vld [vmem:[#allocation14 + $0x3f0] sm:$0xff]
    %v2372 = vld [vmem:[#allocation14 + $0x3f8] sm:$0xff]
    %2373 = vmatprep.subr.mxu0 0.0
    %2374 = vmatpush1.msra.mxu0 %v2245
    %2375 = vmatprep.subr.mxu0 0.0
    %2376 = vmatpush1.msra.mxu0 %v2246
    %2377 = vmatprep.subr.mxu0 0.0
    %2378 = vmatpush1.msra.mxu0 %v2247
    %2379 = vmatprep.subr.mxu0 0.0
    %2380 = vmatpush1.msra.mxu0 %v2248
    %2381 = vmatprep.subr.mxu0 0.0
    %2382 = vmatpush1.msra.mxu0 %v2249
    %2383 = vmatprep.subr.mxu0 0.0
    %2384 = vmatpush1.msra.mxu0 %v2250
    %2385 = vmatprep.subr.mxu0 0.0
    %2386 = vmatpush1.msra.mxu0 %v2251
    %2387 = vmatprep.subr.mxu0 0.0
    %2388 = vmatpush1.msra.mxu0 %v2252
    %2389 = vmatprep.subr.mxu0 0.0
    %2390 = vmatpush1.msra.mxu0 %v2253
    %2391 = vmatprep.subr.mxu0 0.0
    %2392 = vmatpush1.msra.mxu0 %v2254
    %2393 = vmatprep.subr.mxu0 0.0
    %2394 = vmatpush1.msra.mxu0 %v2255
    %2395 = vmatprep.subr.mxu0 0.0
    %2396 = vmatpush1.msra.mxu0 %v2256
    %2397 = vmatprep.subr.mxu0 0.0
    %2398 = vmatpush1.msra.mxu0 %v2257
    %2399 = vmatprep.subr.mxu0 0.0
    %2400 = vmatpush1.msra.mxu0 %v2258
    %2401 = vmatprep.subr.mxu0 0.0
    %2402 = vmatpush1.msra.mxu0 %v2259
    %2403 = vmatprep.subr.mxu0 0.0
    %2404 = vmatpush1.msra.mxu0 %v2260
    %2405 = vmatprep.subr.mxu0 0.0
    %2406 = vmatpush1.msra.mxu0 %v2261
    %2407 = vmatprep.subr.mxu0 0.0
    %2408 = vmatpush1.msra.mxu0 %v2262
    %2409 = vmatprep.subr.mxu0 0.0
    %2410 = vmatpush1.msra.mxu0 %v2263
    %2411 = vmatprep.subr.mxu0 0.0
    %2412 = vmatpush1.msra.mxu0 %v2264
    %2413 = vmatprep.subr.mxu0 0.0
    %2414 = vmatpush1.msra.mxu0 %v2265
    %2415 = vmatprep.subr.mxu0 0.0
    %2416 = vmatpush1.msra.mxu0 %v2266
    %2417 = vmatprep.subr.mxu0 0.0
    %2418 = vmatpush1.msra.mxu0 %v2267
    %2419 = vmatprep.subr.mxu0 0.0
    %2420 = vmatpush1.msra.mxu0 %v2268
    %2421 = vmatprep.subr.mxu0 0.0
    %2422 = vmatpush1.msra.mxu0 %v2269
    %2423 = vmatprep.subr.mxu0 0.0
    %2424 = vmatpush1.msra.mxu0 %v2270
    %2425 = vmatprep.subr.mxu0 0.0
    %2426 = vmatpush1.msra.mxu0 %v2271
    %2427 = vmatprep.subr.mxu0 0.0
    %2428 = vmatpush1.msra.mxu0 %v2272
    %2429 = vmatprep.subr.mxu0 0.0
    %2430 = vmatpush1.msra.mxu0 %v2273
    %2431 = vmatprep.subr.mxu0 0.0
    %2432 = vmatpush1.msra.mxu0 %v2274
    %2433 = vmatprep.subr.mxu0 0.0
    %2434 = vmatpush1.msra.mxu0 %v2275
    %2435 = vmatprep.subr.mxu0 0.0
    %2436 = vmatpush1.msra.mxu0 %v2276
    %2437 = vmatprep.mubr.f32.mxu0 %v2230
    %2438 = vmatmul.mubr.f32.gmra.mrb[0].mxu0 %v2229
    %v2439 = vpop.f32.mrb[0].mxu0
    %v2440 = vadd.f32 %v517, %v2439
    %v2441 = vpop.f32.mrb[0].mxu0
    %2442 = vmatprep.mubr.f32.mxu0 %v2238
    %2443 = vmatmul.mubr.f32.gmra.mrb[0].mxu0 %v2237
    %v2444 = vpop.f32.mrb[0].mxu0
    %v2445 = vadd.f32 %v518, %v2444
    %v2446 = vpop.f32.mrb[0].mxu0
    %2447 = vdwg.mxu0
    %2448 = vmatprep.subr.mxu0 0.0
    %2449 = vmatpush1.msra.mxu0 %v2277
    %2450 = vmatprep.subr.mxu0 0.0
    %2451 = vmatpush1.msra.mxu0 %v2278
    %2452 = vmatprep.subr.mxu0 0.0
    %2453 = vmatpush1.msra.mxu0 %v2279
    %2454 = vmatprep.subr.mxu0 0.0
    %2455 = vmatpush1.msra.mxu0 %v2280
    %2456 = vmatprep.subr.mxu0 0.0
    %2457 = vmatpush1.msra.mxu0 %v2281
    %2458 = vmatprep.subr.mxu0 0.0
    %2459 = vmatpush1.msra.mxu0 %v2282
    %2460 = vmatprep.subr.mxu0 0.0
    %2461 = vmatpush1.msra.mxu0 %v2283
    %2462 = vmatprep.subr.mxu0 0.0
    %2463 = vmatpush1.msra.mxu0 %v2284
    %2464 = vmatprep.subr.mxu0 0.0
    %2465 = vmatpush1.msra.mxu0 %v2285
    %2466 = vmatprep.subr.mxu0 0.0
    %2467 = vmatpush1.msra.mxu0 %v2286
    %2468 = vmatprep.subr.mxu0 0.0
    %2469 = vmatpush1.msra.mxu0 %v2287
    %2470 = vmatprep.subr.mxu0 0.0
    %2471 = vmatpush1.msra.mxu0 %v2288
    %2472 = vmatprep.subr.mxu0 0.0
    %2473 = vmatpush1.msra.mxu0 %v2289
    %2474 = vmatprep.subr.mxu0 0.0
    %2475 = vmatpush1.msra.mxu0 %v2290
    %2476 = vmatprep.subr.mxu0 0.0
    %2477 = vmatpush1.msra.mxu0 %v2291
    %2478 = vmatprep.subr.mxu0 0.0
    %2479 = vmatpush1.msra.mxu0 %v2292
    %2480 = vmatprep.subr.mxu0 0.0
    %2481 = vmatpush1.msra.mxu0 %v2293
    %2482 = vmatprep.subr.mxu0 0.0
    %2483 = vmatpush1.msra.mxu0 %v2294
    %2484 = vmatprep.subr.mxu0 0.0
    %2485 = vmatpush1.msra.mxu0 %v2295
    %2486 = vmatprep.subr.mxu0 0.0
    %2487 = vmatpush1.msra.mxu0 %v2296
    %2488 = vmatprep.subr.mxu0 0.0
    %2489 = vmatpush1.msra.mxu0 %v2297
    %2490 = vmatprep.subr.mxu0 0.0
    %2491 = vmatpush1.msra.mxu0 %v2298
    %2492 = vmatprep.subr.mxu0 0.0
    %2493 = vmatpush1.msra.mxu0 %v2299
    %2494 = vmatprep.subr.mxu0 0.0
    %2495 = vmatpush1.msra.mxu0 %v2300
    %2496 = vmatprep.subr.mxu0 0.0
    %2497 = vmatpush1.msra.mxu0 %v2301
    %2498 = vmatprep.subr.mxu0 0.0
    %2499 = vmatpush1.msra.mxu0 %v2302
    %2500 = vmatprep.subr.mxu0 0.0
    %2501 = vmatpush1.msra.mxu0 %v2303
    %2502 = vmatprep.subr.mxu0 0.0
    %2503 = vmatpush1.msra.mxu0 %v2304
    %2504 = vmatprep.subr.mxu0 0.0
    %2505 = vmatpush1.msra.mxu0 %v2305
    %2506 = vmatprep.subr.mxu0 0.0
    %2507 = vmatpush1.msra.mxu0 %v2306
    %2508 = vmatprep.subr.mxu0 0.0
    %2509 = vmatpush1.msra.mxu0 %v2307
    %2510 = vmatprep.subr.mxu0 0.0
    %2511 = vmatpush1.msra.mxu0 %v2308
    %2512 = vmatprep.mubr.f32.mxu0 %v2232
    %2513 = vmatmul.mubr.f32.gmra.mrb[0].mxu0 %v2231
    %v2514 = vpop.f32.mrb[0].mxu0
    %v2515 = vadd.f32 %v2440, %v2514
    %v2516 = vpop.f32.mrb[0].mxu0
    %2517 = vmatprep.mubr.f32.mxu0 %v2240
    %2518 = vmatmul.mubr.f32.gmra.mrb[0].mxu0 %v2239
    %v2519 = vpop.f32.mrb[0].mxu0
    %v2520 = vadd.f32 %v2445, %v2519
    %v2521 = vpop.f32.mrb[0].mxu0
    %2522 = vdwg.mxu0
    %2523 = vmatprep.subr.mxu0 0.0
    %2524 = vmatpush1.msra.mxu0 %v2309
    %2525 = vmatprep.subr.mxu0 0.0
    %2526 = vmatpush1.msra.mxu0 %v2310
    %2527 = vmatprep.subr.mxu0 0.0
    %2528 = vmatpush1.msra.mxu0 %v2311
    %2529 = vmatprep.subr.mxu0 0.0
    %2530 = vmatpush1.msra.mxu0 %v2312
    %2531 = vmatprep.subr.mxu0 0.0
    %2532 = vmatpush1.msra.mxu0 %v2313
    %2533 = vmatprep.subr.mxu0 0.0
    %2534 = vmatpush1.msra.mxu0 %v2314
    %2535 = vmatprep.subr.mxu0 0.0
    %2536 = vmatpush1.msra.mxu0 %v2315
    %2537 = vmatprep.subr.mxu0 0.0
    %2538 = vmatpush1.msra.mxu0 %v2316
    %2539 = vmatprep.subr.mxu0 0.0
    %2540 = vmatpush1.msra.mxu0 %v2317
    %2541 = vmatprep.subr.mxu0 0.0
    %2542 = vmatpush1.msra.mxu0 %v2318
    %2543 = vmatprep.subr.mxu0 0.0
    %2544 = vmatpush1.msra.mxu0 %v2319
    %2545 = vmatprep.subr.mxu0 0.0
    %2546 = vmatpush1.msra.mxu0 %v2320
    %2547 = vmatprep.subr.mxu0 0.0
    %2548 = vmatpush1.msra.mxu0 %v2321
    %2549 = vmatprep.subr.mxu0 0.0
    %2550 = vmatpush1.msra.mxu0 %v2322
    %2551 = vmatprep.subr.mxu0 0.0
    %2552 = vmatpush1.msra.mxu0 %v2323
    %2553 = vmatprep.subr.mxu0 0.0
    %2554 = vmatpush1.msra.mxu0 %v2324
    %2555 = vmatprep.subr.mxu0 0.0
    %2556 = vmatpush1.msra.mxu0 %v2325
    %2557 = vmatprep.subr.mxu0 0.0
    %2558 = vmatpush1.msra.mxu0 %v2326
    %2559 = vmatprep.subr.mxu0 0.0
    %2560 = vmatpush1.msra.mxu0 %v2327
    %2561 = vmatprep.subr.mxu0 0.0
    %2562 = vmatpush1.msra.mxu0 %v2328
    %2563 = vmatprep.subr.mxu0 0.0
    %2564 = vmatpush1.msra.mxu0 %v2329
    %2565 = vmatprep.subr.mxu0 0.0
    %2566 = vmatpush1.msra.mxu0 %v2330
    %2567 = vmatprep.subr.mxu0 0.0
    %2568 = vmatpush1.msra.mxu0 %v2331
    %2569 = vmatprep.subr.mxu0 0.0
    %2570 = vmatpush1.msra.mxu0 %v2332
    %2571 = vmatprep.subr.mxu0 0.0
    %2572 = vmatpush1.msra.mxu0 %v2333
    %2573 = vmatprep.subr.mxu0 0.0
    %2574 = vmatpush1.msra.mxu0 %v2334
    %2575 = vmatprep.subr.mxu0 0.0
    %2576 = vmatpush1.msra.mxu0 %v2335
    %2577 = vmatprep.subr.mxu0 0.0
    %2578 = vmatpush1.msra.mxu0 %v2336
    %2579 = vmatprep.subr.mxu0 0.0
    %2580 = vmatpush1.msra.mxu0 %v2337
    %2581 = vmatprep.subr.mxu0 0.0
    %2582 = vmatpush1.msra.mxu0 %v2338
    %2583 = vmatprep.subr.mxu0 0.0
    %2584 = vmatpush1.msra.mxu0 %v2339
    %2585 = vmatprep.subr.mxu0 0.0
    %2586 = vmatpush1.msra.mxu0 %v2340
    %2587 = vmatprep.mubr.f32.mxu0 %v2234
    %2588 = vmatmul.mubr.f32.gmra.mrb[0].mxu0 %v2233
    %v2589 = vpop.f32.mrb[0].mxu0
    %v2590 = vadd.f32 %v2515, %v2589
    %v2591 = vpop.f32.mrb[0].mxu0
    %2592 = vmatprep.mubr.f32.mxu0 %v2242
    %2593 = vmatmul.mubr.f32.gmra.mrb[0].mxu0 %v2241
    %v2594 = vpop.f32.mrb[0].mxu0
    %v2595 = vadd.f32 %v2520, %v2594
    %v2596 = vpop.f32.mrb[0].mxu0
    %2597 = vdwg.mxu0
    %2598 = vmatprep.subr.mxu0 0.0
    %2599 = vmatpush1.msra.mxu0 %v2341
    %2600 = vmatprep.subr.mxu0 0.0
    %2601 = vmatpush1.msra.mxu0 %v2342
    %2602 = vmatprep.subr.mxu0 0.0
    %2603 = vmatpush1.msra.mxu0 %v2343
    %2604 = vmatprep.subr.mxu0 0.0
    %2605 = vmatpush1.msra.mxu0 %v2344
    %2606 = vmatprep.subr.mxu0 0.0
    %2607 = vmatpush1.msra.mxu0 %v2345
    %2608 = vmatprep.subr.mxu0 0.0
    %2609 = vmatpush1.msra.mxu0 %v2346
    %2610 = vmatprep.subr.mxu0 0.0
    %2611 = vmatpush1.msra.mxu0 %v2347
    %2612 = vmatprep.subr.mxu0 0.0
    %2613 = vmatpush1.msra.mxu0 %v2348
    %2614 = vmatprep.subr.mxu0 0.0
    %2615 = vmatpush1.msra.mxu0 %v2349
    %2616 = vmatprep.subr.mxu0 0.0
    %2617 = vmatpush1.msra.mxu0 %v2350
    %2618 = vmatprep.subr.mxu0 0.0
    %2619 = vmatpush1.msra.mxu0 %v2351
    %2620 = vmatprep.subr.mxu0 0.0
    %2621 = vmatpush1.msra.mxu0 %v2352
    %2622 = vmatprep.subr.mxu0 0.0
    %2623 = vmatpush1.msra.mxu0 %v2353
    %2624 = vmatprep.subr.mxu0 0.0
    %2625 = vmatpush1.msra.mxu0 %v2354
    %2626 = vmatprep.subr.mxu0 0.0
    %2627 = vmatpush1.msra.mxu0 %v2355
    %2628 = vmatprep.subr.mxu0 0.0
    %2629 = vmatpush1.msra.mxu0 %v2356
    %2630 = vmatprep.subr.mxu0 0.0
    %2631 = vmatpush1.msra.mxu0 %v2357
    %2632 = vmatprep.subr.mxu0 0.0
    %2633 = vmatpush1.msra.mxu0 %v2358
    %2634 = vmatprep.subr.mxu0 0.0
    %2635 = vmatpush1.msra.mxu0 %v2359
    %2636 = vmatprep.subr.mxu0 0.0
    %2637 = vmatpush1.msra.mxu0 %v2360
    %2638 = vmatprep.subr.mxu0 0.0
    %2639 = vmatpush1.msra.mxu0 %v2361
    %2640 = vmatprep.subr.mxu0 0.0
    %2641 = vmatpush1.msra.mxu0 %v2362
    %2642 = vmatprep.subr.mxu0 0.0
    %2643 = vmatpush1.msra.mxu0 %v2363
    %2644 = vmatprep.subr.mxu0 0.0
    %2645 = vmatpush1.msra.mxu0 %v2364
    %2646 = vmatprep.subr.mxu0 0.0
    %2647 = vmatpush1.msra.mxu0 %v2365
    %2648 = vmatprep.subr.mxu0 0.0
    %2649 = vmatpush1.msra.mxu0 %v2366
    %2650 = vmatprep.subr.mxu0 0.0
    %2651 = vmatpush1.msra.mxu0 %v2367
    %2652 = vmatprep.subr.mxu0 0.0
    %2653 = vmatpush1.msra.mxu0 %v2368
    %2654 = vmatprep.subr.mxu0 0.0
    %2655 = vmatpush1.msra.mxu0 %v2369
    %2656 = vmatprep.subr.mxu0 0.0
    %2657 = vmatpush1.msra.mxu0 %v2370
    %2658 = vmatprep.subr.mxu0 0.0
    %2659 = vmatpush1.msra.mxu0 %v2371
    %2660 = vmatprep.subr.mxu0 0.0
    %2661 = vmatpush1.msra.mxu0 %v2372
    %2662 = vmatprep.mubr.f32.mxu0 %v2236
    %2663 = vmatmul.mubr.f32.gmra.mrb[0].mxu0 %v2235
    %v2664 = vpop.f32.mrb[0].mxu0
    %v2665 = vadd.f32 %v2590, %v2664
    %v2666 = vpop.f32.mrb[0].mxu0
    %2667 = vmatprep.mubr.f32.mxu0 %v2244
    %2668 = vmatmul.mubr.f32.gmra.mrb[0].mxu0 %v2243
    %v2669 = vpop.f32.mrb[0].mxu0
    %v2670 = vadd.f32 %v2595, %v2669
    %v2671 = vpop.f32.mrb[0].mxu0
    %2672 = vdwg.mxu0
    %2673 = vst [vmem:[#allocation16] sm:$0xff] %v2665
    %2674 = vst [vmem:[#allocation16 + $0x8] sm:$0xff] %v2670
    // Predicated region
    $region78: #{tpu_custom_call.1} parent=1 // pred_check
      _
    $region79: #{tpu_custom_call.1} parent=1 // pred_check_branch
      %2676 = sbr.rel (0) target = $region81
    $region80: #{tpu_custom_call.1} parent=1 // pred_region
      %s2678 = ssub.s32 256, 256
      %2679 = vsyncadd [#allocation4], %s2678
      %s2680 = sshll.u32 [#allocation16], 4
      %s2681 = int_to_ptr.vmem [resolvable:$true] %s2680
      %2686 = dma.vmem_to_hbm [thread:$0]  %s2681, 256, %s11, [#allocation4], 128, 128, 8
    $region81: #{tpu_custom_call.1} parent=1 // pred_fallthru
      _
    // Predicated region
    $region82: #{tpu_custom_call.1} parent=1 // pred_check
      _
    $region83: #{tpu_custom_call.1} parent=1 // pred_check_branch
      %2688 = sbr.rel (0) target = $region85
    $region84: #{tpu_custom_call.1} parent=1 // pred_region
      %2689 = dma.done [#allocation4], 256
    $region85: #{tpu_custom_call.1} parent=1 // pred_fallthru
      _
    %2690 = vsyncpa [#allocation3], 1
    %2691 = vsyncpa [#allocation6], 1
    %2692 = vsyncpa [#allocation9], 1
    %2693 = vsyncpa [#allocation12], 1
    %2694 = vsyncpa [#allocation15], 1
    %2695 = vsyncpa [#allocation4], 1

</llo_original>
